<compile_context>
chip_gen: v5e
topology: v5e:2x2
jax: 0.10.0
libtpu: 0.0.40
codegen_flags: <defaults>
</compile_context>

<pallas_src>
import functools

import numpy as np
import jax
import jax.numpy as jnp
from jax.experimental import pallas as pl
from jax.experimental.pallas import tpu as pltpu

# Demo sizes (structure-preserving; the original uses input_size=131072, h1=500, h2=30).
INPUT_SIZE = 512       # real: 131072
HIDDEN1 = 128          # real: 500
HIDDEN2 = 32           # real: 30
NUM_CLASSES = 8
BATCH = 128            # M >= 128 fills the MXU M dimension

H2P = 128              # per-gate lane padding for the HIDDEN2 LSTM (vreg-aligned slices)
OUT_PAD = 128          # lane-dense output slab; sliced back to NUM_CLASSES in the wrapper

# K-tile for the first matmul. Per-generation guidance at production sizes:
#   v7x (64 MiB VMEM): tk <= 1024 ;  v5e/v6e (128 MiB VMEM): tk = 2048-4096
#   (set vmem_limit_bytes accordingly). Demo: 256 -> 2 grid steps, exercises the pipeline.
TK = 256


# ----------------------------------------------------------------------------
# Kernel
# ----------------------------------------------------------------------------
def _igo_activation(gates, h):
    """LSTM cell output with zero initial state; gate layout [i, g, o] (f dropped)."""
    i = jax.nn.sigmoid(gates[:, 0 * h:1 * h])
    g = jnp.tanh(gates[:, 1 * h:2 * h])
    o = jax.nn.sigmoid(gates[:, 2 * h:3 * h])
    # c = i*g + f*c0, c0 == 0  ->  c = i*g ; h = o * tanh(c)
    return o * jnp.tanh(i * g)


def _cell(x, w_ref, b_ref, h):
    gates = jnp.dot(x.astype(jnp.bfloat16), w_ref[...],
                    preferred_element_type=jnp.float32) + b_ref[...]
    return _igo_activation(gates, h)


def net_kernel(x_ref, w1_ref, b1_ref, w2_ref, b2_ref, w3_ref, b3_ref,
               wl_ref, bl_ref, out_ref, acc_ref, *, h1, h2p):
    k = pl.program_id(0)

    @pl.when(k == 0)
    def _():
        acc_ref[...] = jnp.zeros_like(acc_ref)

    # K-tiled first LSTM matmul: (B, tk) x (tk, 3*H1), f32 accumulation in VMEM scratch.
    acc_ref[...] += jnp.dot(x_ref[...].astype(jnp.bfloat16), w1_ref[...],
                            preferred_element_type=jnp.float32)

    @pl.when(k == pl.num_programs(0) - 1)
    def _():
        a1 = _igo_activation(acc_ref[...] + b1_ref[...], h1)   # LSTM1, layer 0
        a2 = _cell(a1, w2_ref, b2_ref, h1)                     # LSTM1, layer 1
        a3 = _cell(a2, w3_ref, b3_ref, h2p)                    # LSTM2 (gate-padded)
        out_ref[...] = (jnp.dot(a3.astype(jnp.bfloat16), wl_ref[...],
                                preferred_element_type=jnp.float32)
                        + bl_ref[...])                          # Linear head (padded lanes)


# ----------------------------------------------------------------------------
# Wrapper
# ----------------------------------------------------------------------------
def net_forward(x, prepared, *, tk=TK, vmem_limit_bytes=None):
    (w1, b1, w2, b2, w3, b3, wl, bl) = prepared
    B, K = x.shape
    assert K % tk == 0, "input_size must be divisible by the K tile"
    assert B % 8 == 0, "batch must be a multiple of 8 sublanes"
    nk = K // tk

    kernel = functools.partial(net_kernel, h1=HIDDEN1, h2p=H2P)

    sz = lambda a: int(a.size) * a.dtype.itemsize
    bytes_accessed = sz(x) + sum(sz(a) for a in prepared) + B * OUT_PAD * 4
    flops = 2 * B * (K * 3 * HIDDEN1 + HIDDEN1 * 3 * HIDDEN1
                     + HIDDEN1 * 3 * H2P + H2P * OUT_PAD)
    transcendentals = B * 4 * (HIDDEN1 + HIDDEN1 + H2P)   # 2 sigmoid + 2 tanh per unit

    # TODO(synk): for large batch on v7x, add a leading "parallel" grid axis over batch
    # so both TensorCores do work; at B=128 a single block is sufficient.
    out = pl.pallas_call(
        kernel,
        out_shape=jax.ShapeDtypeStruct((B, OUT_PAD), jnp.float32),
        grid_spec=pltpu.PrefetchScalarGridSpec(
            num_scalar_prefetch=0,
            grid=(nk,),
            in_specs=[
                pl.BlockSpec((B, tk), lambda k: (0, k)),                  # x     (K-tiled)
                pl.BlockSpec((tk, 3 * HIDDEN1), lambda k: (k, 0)),        # w1    (K-tiled)
                pl.BlockSpec((1, 3 * HIDDEN1), lambda k: (0, 0)),         # b1
                pl.BlockSpec((HIDDEN1, 3 * HIDDEN1), lambda k: (0, 0)),   # w2
                pl.BlockSpec((1, 3 * HIDDEN1), lambda k: (0, 0)),         # b2
                pl.BlockSpec((HIDDEN1, 3 * H2P), lambda k: (0, 0)),       # w3 (gate-padded)
                pl.BlockSpec((1, 3 * H2P), lambda k: (0, 0)),             # b3
                pl.BlockSpec((H2P, OUT_PAD), lambda k: (0, 0)),           # wl (padded)
                pl.BlockSpec((1, OUT_PAD), lambda k: (0, 0)),             # bl (padded)
            ],
            out_specs=pl.BlockSpec((B, OUT_PAD), lambda k: (0, 0)),
            scratch_shapes=[pltpu.VMEM((B, 3 * HIDDEN1), jnp.float32)],
        ),
        compiler_params=pltpu.CompilerParams(
            dimension_semantics=("arbitrary",),        # K is a reduction axis
            vmem_limit_bytes=vmem_limit_bytes,
        ),
        cost_estimate=pl.CostEstimate(flops=flops,
                                      transcendentals=transcendentals,
                                      bytes_accessed=bytes_accessed),
    )(x, w1, b1, w2, b2, w3, b3, wl, bl)
    return out[:, :NUM_CLASSES]


# ----------------------------------------------------------------------------
# Parameter construction / host-side preprocessing
# ----------------------------------------------------------------------------
def init_params(key):
    """Synthetic PyTorch-style params: weights (in, 4H), gate order [i,f,g,o], b = b_ih+b_hh."""
    ks = jax.random.split(key, 11)

    def u(k, shape, fan):
        bound = 1.0 / np.sqrt(float(fan))
        return jax.random.uniform(k, shape, jnp.float32, -bound, bound)

    w1 = u(ks[0], (INPUT_SIZE, 4 * HIDDEN1), HIDDEN1)
    b1 = u(ks[1], (1, 4 * HIDDEN1), HIDDEN1) + u(ks[2], (1, 4 * HIDDEN1), HIDDEN1)
    w2 = u(ks[3], (HIDDEN1, 4 * HIDDEN1), HIDDEN1)
    b2 = u(ks[4], (1, 4 * HIDDEN1), HIDDEN1) + u(ks[5], (1, 4 * HIDDEN1), HIDDEN1)
    w3 = u(ks[6], (HIDDEN1, 4 * HIDDEN2), HIDDEN2)
    b3 = u(ks[7], (1, 4 * HIDDEN2), HIDDEN2) + u(ks[8], (1, 4 * HIDDEN2), HIDDEN2)
    wl = u(ks[9], (HIDDEN2, NUM_CLASSES), HIDDEN2)
    bl = u(ks[10], (1, NUM_CLASSES), HIDDEN2)
    return (w1, b1, w2, b2, w3, b3, wl, bl)


def _drop_f_gate(w, b, h):
    """[i, f, g, o] -> [i, g, o]; the f-gate output is provably unused since c0 == 0."""
    w3h = jnp.concatenate([w[:, 0:h], w[:, 2 * h:3 * h], w[:, 3 * h:4 * h]], axis=1)
    b3h = jnp.concatenate([b[:, 0:h], b[:, 2 * h:3 * h], b[:, 3 * h:4 * h]], axis=1)
    return w3h, b3h


def _pad_gates(w, b, h, hp):
    """(Din, 3h) -> (Din, 3hp): zero-pad each gate block so slices are 128-lane aligned."""
    din = w.shape[0]
    wp = jnp.zeros((din, 3 * hp), w.dtype)
    bp = jnp.zeros((1, 3 * hp), b.dtype)
    for g in range(3):
        wp = wp.at[:, g * hp:g * hp + h].set(w[:, g * h:(g + 1) * h])
        bp = bp.at[:, g * hp:g * hp + h].set(b[:, g * h:(g + 1) * h])
    return wp, bp


def prepare_params(params):
    """Drop f-gate, pad HIDDEN2 gates and the linear head to 128 lanes, cast weights to bf16."""
    (w1, b1, w2, b2, w3, b3, wl, bl) = params
    w1, b1 = _drop_f_gate(w1, b1, HIDDEN1)
    w2, b2 = _drop_f_gate(w2, b2, HIDDEN1)
    w3, b3 = _drop_f_gate(w3, b3, HIDDEN2)
    w3, b3 = _pad_gates(w3, b3, HIDDEN2, H2P)

    wl_p = jnp.zeros((H2P, OUT_PAD), jnp.float32).at[:HIDDEN2, :NUM_CLASSES].set(wl)
    bl_p = jnp.zeros((1, OUT_PAD), jnp.float32).at[:, :NUM_CLASSES].set(bl)

    bf16 = lambda a: a.astype(jnp.bfloat16)
    return (bf16(w1), b1, bf16(w2), b2, bf16(w3), b3, bf16(wl_p), bl_p)


# ----------------------------------------------------------------------------
# References
# ----------------------------------------------------------------------------
def net_forward_ref(x, prepared):
    """Pure-JAX reference replicating the kernel math (bf16 weights/activations, f32 acc)."""
    (w1, b1, w2, b2, w3, b3, wl, bl) = prepared
    dot = lambda a, w: jnp.dot(a.astype(jnp.bfloat16), w,
                               preferred_element_type=jnp.float32)
    a1 = _igo_activation(dot(x, w1) + b1, HIDDEN1)
    a2 = _igo_activation(dot(a1, w2) + b2, HIDDEN1)
    a3 = _igo_activation(dot(a2, w3) + b3, H2P)
    return (dot(a3, wl) + bl)[:, :NUM_CLASSES]


def net_forward_f32_ref(x, params):
    """Full-precision reference on the original (un-reduced, un-padded, f32) parameters."""
    (w1, b1, w2, b2, w3, b3, wl, bl) = params

    def cell(a, w, b, h):
        gates = jnp.dot(a, w) + b
        i = jax.nn.sigmoid(gates[:, 0:h])
        g = jnp.tanh(gates[:, 2 * h:3 * h])
        o = jax.nn.sigmoid(gates[:, 3 * h:4 * h])
        return o * jnp.tanh(i * g)

    a1 = cell(x, w1, b1, HIDDEN1)
    a2 = cell(a1, w2, b2, HIDDEN1)
    a3 = cell(a2, w3, b3, HIDDEN2)
    return jnp.dot(a3, wl) + bl


if __name__ == "__main__":
    key = jax.random.PRNGKey(0)
    kx, kp = jax.random.split(key)
    x = jax.random.normal(kx, (BATCH, INPUT_SIZE), jnp.float32)
    params = init_params(kp)
    prepared = prepare_params(params)

    out = net_forward(x, prepared)
    out = jax.block_until_ready(out)
    assert out.shape == (BATCH, NUM_CLASSES)

    # Tight check vs a reference that mirrors the kernel's bf16 math exactly.
    ref = net_forward_ref(x, prepared)
    assert jnp.allclose(out, ref, atol=1e-2, rtol=1e-2), \
        float(jnp.max(jnp.abs(out - ref)))

    # Loose check vs the full-precision f32 forward on the original parameters
    # (validates that dropping the f-gate / padding / bf16 cast preserve semantics).
    ref32 = net_forward_f32_ref(x, params)
    assert jnp.allclose(out, ref32, atol=5e-2, rtol=5e-2), \
        float(jnp.max(jnp.abs(out - ref32)))

    print("KERNEL_OK")
</pallas_src>

<mosaic_0001>
module attributes {stable_mosaic.version = 11 : i64} {
  func.func @net_kernel(%arg0: i32, %arg1: memref<128x256xf32, #tpu.memory_space<vmem>>, %arg2: memref<256x384xbf16, #tpu.memory_space<vmem>>, %arg3: memref<1x384xf32, #tpu.memory_space<vmem>>, %arg4: memref<128x384xbf16, #tpu.memory_space<vmem>>, %arg5: memref<1x384xf32, #tpu.memory_space<vmem>>, %arg6: memref<128x384xbf16, #tpu.memory_space<vmem>>, %arg7: memref<1x384xf32, #tpu.memory_space<vmem>>, %arg8: memref<128x128xbf16, #tpu.memory_space<vmem>>, %arg9: memref<1x128xf32, #tpu.memory_space<vmem>>, %arg10: memref<128x128xf32, #tpu.memory_space<vmem>>, %arg11: memref<128x384xf32, #tpu.memory_space<vmem>>) attributes {dimension_semantics = [#tpu.dimension_semantics<arbitrary>], iteration_bounds = array<i64: 2>, scalar_prefetch = 0 : i64, scratch_operands = 1 : i64, tpu.core_type = #tpu.core_type<tc>, window_params = [{transform_indices = @transform_0, window_bounds = array<i64: 128, 256>}, {transform_indices = @transform_1, window_bounds = array<i64: 256, 384>}, {pipeline_mode = #tpu.pipeline_mode<synchronous>, transform_indices = @transform_2, window_bounds = array<i64: 1, 384>}, {pipeline_mode = #tpu.pipeline_mode<synchronous>, transform_indices = @transform_3, window_bounds = array<i64: 128, 384>}, {pipeline_mode = #tpu.pipeline_mode<synchronous>, transform_indices = @transform_4, window_bounds = array<i64: 1, 384>}, {pipeline_mode = #tpu.pipeline_mode<synchronous>, transform_indices = @transform_5, window_bounds = array<i64: 128, 384>}, {pipeline_mode = #tpu.pipeline_mode<synchronous>, transform_indices = @transform_6, window_bounds = array<i64: 1, 384>}, {pipeline_mode = #tpu.pipeline_mode<synchronous>, transform_indices = @transform_7, window_bounds = array<i64: 128, 128>}, {pipeline_mode = #tpu.pipeline_mode<synchronous>, transform_indices = @transform_8, window_bounds = array<i64: 1, 128>}, {pipeline_mode = #tpu.pipeline_mode<synchronous>, transform_indices = @transform_9, window_bounds = array<i64: 128, 128>}]} {
    %c0_i32 = arith.constant 0 : i32
    %0 = arith.cmpi eq, %arg0, %c0_i32 : i32
    %1 = arith.extui %0 : i1 to i32
    %c0_i32_0 = arith.constant 0 : i32
    %2 = arith.cmpi ne, %1, %c0_i32_0 : i32
    scf.if %2 {
      %cst_9 = arith.constant 0.000000e+00 : f32
      %13 = vector.broadcast %cst_9 : f32 to vector<128x384xf32>
      %c0_10 = arith.constant 0 : index
      %c0_11 = arith.constant 0 : index
      %14 = vector.load %arg11[%c0_10, %c0_11] : memref<128x384xf32, #tpu.memory_space<vmem>>, vector<128x384xf32>
      tpu.vector_store %arg11[%c0_10, %c0_11], %13 {strides = array<i32>} : memref<128x384xf32, #tpu.memory_space<vmem>>, vector<128x384xf32>,
    } else {
    }
    %c0 = arith.constant 0 : index
    %c0_1 = arith.constant 0 : index
    %3 = vector.load %arg11[%c0, %c0_1] : memref<128x384xf32, #tpu.memory_space<vmem>>, vector<128x384xf32>
    %c0_2 = arith.constant 0 : index
    %c0_3 = arith.constant 0 : index
    %4 = vector.load %arg1[%c0_2, %c0_3] : memref<128x256xf32, #tpu.memory_space<vmem>>, vector<128x256xf32>
    %5 = arith.truncf %4 : vector<128x256xf32> to vector<128x256xbf16>
    %c0_4 = arith.constant 0 : index
    %c0_5 = arith.constant 0 : index
    %6 = vector.load %arg2[%c0_4, %c0_5] : memref<256x384xbf16, #tpu.memory_space<vmem>>, vector<256x384xbf16>
    %cst = arith.constant dense<0.000000e+00> : vector<128x384xf32>
    %7 = tpu.matmul %5, %6, %cst {dimension_numbers = #tpu.dot_dimension_numbers<[1], [0], [0], [1], [0, 0, 1, 1], [], []>} : vector<128x256xbf16>, vector<256x384xbf16>, vector<128x384xf32> -> vector<128x384xf32>
    %8 = arith.addf %3, %7 : vector<128x384xf32>
    %c0_6 = arith.constant 0 : index
    %c0_7 = arith.constant 0 : index
    %9 = vector.load %arg11[%c0_6, %c0_7] : memref<128x384xf32, #tpu.memory_space<vmem>>, vector<128x384xf32>
    tpu.vector_store %arg11[%c0_6, %c0_7], %8 {strides = array<i32>} : memref<128x384xf32, #tpu.memory_space<vmem>>, vector<128x384xf32>,
    %c1_i32 = arith.constant 1 : i32
    %10 = arith.cmpi eq, %arg0, %c1_i32 : i32
    %11 = arith.extui %10 : i1 to i32
    %c0_i32_8 = arith.constant 0 : i32
    %12 = arith.cmpi ne, %11, %c0_i32_8 : i32
    scf.if %12 {
      %c0_9 = arith.constant 0 : index
      %c0_10 = arith.constant 0 : index
      %13 = vector.load %arg11[%c0_9, %c0_10] : memref<128x384xf32, #tpu.memory_space<vmem>>, vector<128x384xf32>
      %c0_11 = arith.constant 0 : index
      %c0_12 = arith.constant 0 : index
      %14 = vector.load %arg3[%c0_11, %c0_12] : memref<1x384xf32, #tpu.memory_space<vmem>>, vector<1x384xf32>
      %15 = vector.broadcast %14 : vector<1x384xf32> to vector<128x384xf32>
      %16 = arith.addf %13, %15 : vector<128x384xf32>
      %17 = vector.extract_strided_slice %16 {offsets = [0, 0], sizes = [128, 128], strides = [1, 1]} : vector<128x384xf32> to vector<128x128xf32>
      %18 = arith.negf %17 : vector<128x128xf32>
      %19 = math.exp %18 : vector<128x128xf32>
      %cst_13 = arith.constant 1.000000e+00 : f32
      %20 = vector.broadcast %cst_13 : f32 to vector<128x128xf32>
      %21 = arith.addf %20, %19 : vector<128x128xf32>
      %22 = arith.divf %20, %21 : vector<128x128xf32>
      %23 = vector.extract_strided_slice %16 {offsets = [0, 128], sizes = [128, 128], strides = [1, 1]} : vector<128x384xf32> to vector<128x128xf32>
      %24 = math.tanh %23 : vector<128x128xf32>
      %25 = vector.extract_strided_slice %16 {offsets = [0, 256], sizes = [128, 128], strides = [1, 1]} : vector<128x384xf32> to vector<128x128xf32>
      %26 = arith.negf %25 : vector<128x128xf32>
      %27 = math.exp %26 : vector<128x128xf32>
      %cst_14 = arith.constant 1.000000e+00 : f32
      %28 = vector.broadcast %cst_14 : f32 to vector<128x128xf32>
      %29 = arith.addf %28, %27 : vector<128x128xf32>
      %30 = arith.divf %28, %29 : vector<128x128xf32>
      %31 = arith.mulf %22, %24 : vector<128x128xf32>
      %32 = math.tanh %31 : vector<128x128xf32>
      %33 = arith.mulf %30, %32 : vector<128x128xf32>
      %34 = arith.truncf %33 : vector<128x128xf32> to vector<128x128xbf16>
      %c0_15 = arith.constant 0 : index
      %c0_16 = arith.constant 0 : index
      %35 = vector.load %arg4[%c0_15, %c0_16] : memref<128x384xbf16, #tpu.memory_space<vmem>>, vector<128x384xbf16>
      %cst_17 = arith.constant dense<0.000000e+00> : vector<128x384xf32>
      %36 = tpu.matmul %34, %35, %cst_17 {dimension_numbers = #tpu.dot_dimension_numbers<[1], [0], [0], [1], [0, 0, 1, 1], [], []>} : vector<128x128xbf16>, vector<128x384xbf16>, vector<128x384xf32> -> vector<128x384xf32>
      %c0_18 = arith.constant 0 : index
      %c0_19 = arith.constant 0 : index
      %37 = vector.load %arg5[%c0_18, %c0_19] : memref<1x384xf32, #tpu.memory_space<vmem>>, vector<1x384xf32>
      %38 = vector.broadcast %37 : vector<1x384xf32> to vector<128x384xf32>
      %39 = arith.addf %36, %38 : vector<128x384xf32>
      %40 = vector.extract_strided_slice %39 {offsets = [0, 0], sizes = [128, 128], strides = [1, 1]} : vector<128x384xf32> to vector<128x128xf32>
      %41 = arith.negf %40 : vector<128x128xf32>
      %42 = math.exp %41 : vector<128x128xf32>
      %cst_20 = arith.constant 1.000000e+00 : f32
      %43 = vector.broadcast %cst_20 : f32 to vector<128x128xf32>
      %44 = arith.addf %43, %42 : vector<128x128xf32>
      %45 = arith.divf %43, %44 : vector<128x128xf32>
      %46 = vector.extract_strided_slice %39 {offsets = [0, 128], sizes = [128, 128], strides = [1, 1]} : vector<128x384xf32> to vector<128x128xf32>
      %47 = math.tanh %46 : vector<128x128xf32>
      %48 = vector.extract_strided_slice %39 {offsets = [0, 256], sizes = [128, 128], strides = [1, 1]} : vector<128x384xf32> to vector<128x128xf32>
      %49 = arith.negf %48 : vector<128x128xf32>
      %50 = math.exp %49 : vector<128x128xf32>
      %cst_21 = arith.constant 1.000000e+00 : f32
      %51 = vector.broadcast %cst_21 : f32 to vector<128x128xf32>
      %52 = arith.addf %51, %50 : vector<128x128xf32>
      %53 = arith.divf %51, %52 : vector<128x128xf32>
      %54 = arith.mulf %45, %47 : vector<128x128xf32>
      %55 = math.tanh %54 : vector<128x128xf32>
      %56 = arith.mulf %53, %55 : vector<128x128xf32>
      %57 = arith.truncf %56 : vector<128x128xf32> to vector<128x128xbf16>
      %c0_22 = arith.constant 0 : index
      %c0_23 = arith.constant 0 : index
      %58 = vector.load %arg6[%c0_22, %c0_23] : memref<128x384xbf16, #tpu.memory_space<vmem>>, vector<128x384xbf16>
      %cst_24 = arith.constant dense<0.000000e+00> : vector<128x384xf32>
      %59 = tpu.matmul %57, %58, %cst_24 {dimension_numbers = #tpu.dot_dimension_numbers<[1], [0], [0], [1], [0, 0, 1, 1], [], []>} : vector<128x128xbf16>, vector<128x384xbf16>, vector<128x384xf32> -> vector<128x384xf32>
      %c0_25 = arith.constant 0 : index
      %c0_26 = arith.constant 0 : index
      %60 = vector.load %arg7[%c0_25, %c0_26] : memref<1x384xf32, #tpu.memory_space<vmem>>, vector<1x384xf32>
      %61 = vector.broadcast %60 : vector<1x384xf32> to vector<128x384xf32>
      %62 = arith.addf %59, %61 : vector<128x384xf32>
      %63 = vector.extract_strided_slice %62 {offsets = [0, 0], sizes = [128, 128], strides = [1, 1]} : vector<128x384xf32> to vector<128x128xf32>
      %64 = arith.negf %63 : vector<128x128xf32>
      %65 = math.exp %64 : vector<128x128xf32>
      %cst_27 = arith.constant 1.000000e+00 : f32
      %66 = vector.broadcast %cst_27 : f32 to vector<128x128xf32>
      %67 = arith.addf %66, %65 : vector<128x128xf32>
      %68 = arith.divf %66, %67 : vector<128x128xf32>
      %69 = vector.extract_strided_slice %62 {offsets = [0, 128], sizes = [128, 128], strides = [1, 1]} : vector<128x384xf32> to vector<128x128xf32>
      %70 = math.tanh %69 : vector<128x128xf32>
      %71 = vector.extract_strided_slice %62 {offsets = [0, 256], sizes = [128, 128], strides = [1, 1]} : vector<128x384xf32> to vector<128x128xf32>
      %72 = arith.negf %71 : vector<128x128xf32>
      %73 = math.exp %72 : vector<128x128xf32>
      %cst_28 = arith.constant 1.000000e+00 : f32
      %74 = vector.broadcast %cst_28 : f32 to vector<128x128xf32>
      %75 = arith.addf %74, %73 : vector<128x128xf32>
      %76 = arith.divf %74, %75 : vector<128x128xf32>
      %77 = arith.mulf %68, %70 : vector<128x128xf32>
      %78 = math.tanh %77 : vector<128x128xf32>
      %79 = arith.mulf %76, %78 : vector<128x128xf32>
      %80 = arith.truncf %79 : vector<128x128xf32> to vector<128x128xbf16>
      %c0_29 = arith.constant 0 : index
      %c0_30 = arith.constant 0 : index
      %81 = vector.load %arg8[%c0_29, %c0_30] : memref<128x128xbf16, #tpu.memory_space<vmem>>, vector<128x128xbf16>
      %cst_31 = arith.constant dense<0.000000e+00> : vector<128x128xf32>
      %82 = tpu.matmul %80, %81, %cst_31 {dimension_numbers = #tpu.dot_dimension_numbers<[1], [0], [0], [1], [0, 0, 1, 1], [], []>} : vector<128x128xbf16>, vector<128x128xbf16>, vector<128x128xf32> -> vector<128x128xf32>
      %c0_32 = arith.constant 0 : index
      %c0_33 = arith.constant 0 : index
      %83 = vector.load %arg9[%c0_32, %c0_33] : memref<1x128xf32, #tpu.memory_space<vmem>>, vector<1x128xf32>
      %84 = vector.broadcast %83 : vector<1x128xf32> to vector<128x128xf32>
      %85 = arith.addf %82, %84 : vector<128x128xf32>
      %c0_34 = arith.constant 0 : index
      %c0_35 = arith.constant 0 : index
      %86 = vector.load %arg10[%c0_34, %c0_35] : memref<128x128xf32, #tpu.memory_space<vmem>>, vector<128x128xf32>
      tpu.vector_store %arg10[%c0_34, %c0_35], %85 {strides = array<i32>} : memref<128x128xf32, #tpu.memory_space<vmem>>, vector<128x128xf32>,
    } else {
    }
    return
  }
  func.func @transform_0(%arg0: i32) -> (i32, i32) {
    %c0_i32 = arith.constant 0 : i32
    %c0_i32_0 = arith.constant 0 : i32
    return %c0_i32, %arg0 : i32, i32
  }
  func.func @transform_1(%arg0: i32) -> (i32, i32) {
    %c0_i32 = arith.constant 0 : i32
    %c0_i32_0 = arith.constant 0 : i32
    return %arg0, %c0_i32 : i32, i32
  }
  func.func @transform_2(%arg0: i32) -> (i32, i32) {
    %c0_i32 = arith.constant 0 : i32
    %c0_i32_0 = arith.constant 0 : i32
    %c0_i32_1 = arith.constant 0 : i32
    return %c0_i32, %c0_i32_0 : i32, i32
  }
  func.func @transform_3(%arg0: i32) -> (i32, i32) {
    %c0_i32 = arith.constant 0 : i32
    %c0_i32_0 = arith.constant 0 : i32
    %c0_i32_1 = arith.constant 0 : i32
    return %c0_i32, %c0_i32_0 : i32, i32
  }
  func.func @transform_4(%arg0: i32) -> (i32, i32) {
    %c0_i32 = arith.constant 0 : i32
    %c0_i32_0 = arith.constant 0 : i32
    %c0_i32_1 = arith.constant 0 : i32
    return %c0_i32, %c0_i32_0 : i32, i32
  }
  func.func @transform_5(%arg0: i32) -> (i32, i32) {
    %c0_i32 = arith.constant 0 : i32
    %c0_i32_0 = arith.constant 0 : i32
    %c0_i32_1 = arith.constant 0 : i32
    return %c0_i32, %c0_i32_0 : i32, i32
  }
  func.func @transform_6(%arg0: i32) -> (i32, i32) {
    %c0_i32 = arith.constant 0 : i32
    %c0_i32_0 = arith.constant 0 : i32
    %c0_i32_1 = arith.constant 0 : i32
    return %c0_i32, %c0_i32_0 : i32, i32
  }
  func.func @transform_7(%arg0: i32) -> (i32, i32) {
    %c0_i32 = arith.constant 0 : i32
    %c0_i32_0 = arith.constant 0 : i32
    %c0_i32_1 = arith.constant 0 : i32
    return %c0_i32, %c0_i32_0 : i32, i32
  }
  func.func @transform_8(%arg0: i32) -> (i32, i32) {
    %c0_i32 = arith.constant 0 : i32
    %c0_i32_0 = arith.constant 0 : i32
    %c0_i32_1 = arith.constant 0 : i32
    return %c0_i32, %c0_i32_0 : i32, i32
  }
  func.func @transform_9(%arg0: i32) -> (i32, i32) {
    %c0_i32 = arith.constant 0 : i32
    %c0_i32_0 = arith.constant 0 : i32
    %c0_i32_1 = arith.constant 0 : i32
    return %c0_i32, %c0_i32_0 : i32, i32
  }
}

</mosaic_0001>

<llo_original>
// kernel: tpu_custom_call.1
$region0: #{tpu_custom_call.1}
  #allocation0 [shape = 'u32[]', space=smem, size = 0x4, offset = 0x4, fixed_abs, tag = 'smem constant byte address 0x4 - core index']
  #allocation1 [shape = 'u32[72,128]{1,0:T(1,128)}', space=vmem, size = 0x9000, scoped, tag = 'internal scratch']
  #allocation2 [shape = 'f32[128,384]{1,0:T(8,128)}', space=vmem, size = 0x30000, scoped, tag = 'scratch operand']
  %s0 = inlined_call_operand.hbm [shape: f32[128,512], index: 0, kind: input, shape index: {}]
  %s1 = inlined_call_operand.hbm [shape: bf16[512,384], index: 1, kind: input, shape index: {}]
  %s2 = inlined_call_operand.hbm [shape: f32[1,384], index: 2, kind: input, shape index: {}]
  %s3 = inlined_call_operand.hbm [shape: bf16[128,384], index: 3, kind: input, shape index: {}]
  %s4 = inlined_call_operand.vmem [shape: f32[1,384], index: 4, kind: input, shape index: {}]
  %s5 = inlined_call_operand.hbm [shape: bf16[128,384], index: 5, kind: input, shape index: {}]
  %s6 = inlined_call_operand.hbm [shape: f32[1,384], index: 6, kind: input, shape index: {}]
  %s7 = inlined_call_operand.hbm [shape: bf16[128,128], index: 7, kind: input, shape index: {}]
  %s8 = inlined_call_operand.vmem [shape: f32[1,128], index: 8, kind: input, shape index: {}]
  %s9 = inlined_call_operand.hbm [shape: f32[128,128], index: 9, kind: output, shape index: {}]
  %s10 = sld [smem:[#allocation0]]
  $region105: #{tpu_custom_call.1} parent=0
    _
  %s12 = ssub.s32 1, %s10
  %s13 = scalar_select 0, %s12, %s10
  $region1: #{tpu_custom_call.1} parent=0
    #allocation3 [shape = 'u8[262144]{0}', space=vmem, size = 0x40000, scoped, tag = 'input window, operand 0']
    #allocation4 [shape = 's32[2]{0}', space=sflag, size = 0x8, scoped, tag = 'scoped memory for tpu_custom_call.1']
    #allocation5 [shape = 's32[2]{0}', space=sflag, size = 0x8, scoped, tag = 'scoped memory for tpu_custom_call.1']
    #allocation6 [shape = 'u8[393216]{0}', space=vmem, size = 0x60000, scoped, tag = 'input window, operand 1']
    #allocation7 [shape = 's32[2]{0}', space=sflag, size = 0x8, scoped, tag = 'scoped memory for tpu_custom_call.1']
    #allocation8 [shape = 'u8[1536]{0}', space=vmem, size = 0x800, scoped, tag = 'input window, operand 2, single buffered']
    #allocation9 [shape = 'u8[98304]{0}', space=vmem, size = 0x18000, scoped, tag = 'input window, operand 3, single buffered']
    #allocation10 [shape = 's32[1]{0}', space=sflag, size = 0x4, scoped, tag = 'scoped memory for tpu_custom_call.1']
    #allocation11 [shape = 'u8[98304]{0}', space=vmem, size = 0x18000, scoped, tag = 'input window, operand 5, single buffered']
    #allocation12 [shape = 'u8[1536]{0}', space=vmem, size = 0x800, scoped, tag = 'input window, operand 6, single buffered']
    #allocation13 [shape = 's32[1]{0}', space=sflag, size = 0x4, scoped, tag = 'scoped memory for tpu_custom_call.1']
    #allocation14 [shape = 'u8[32768]{0}', space=vmem, size = 0x8000, scoped, tag = 'input window, operand 7, single buffered']
    #allocation15 [shape = 'u8[65536]{0}', space=vmem, size = 0x10000, scoped, tag = 'output window, operand 0, single buffered']
    %14 = vsyncpa [#allocation4], 0
    %s15 = scalar_lea.sflag [#allocation4], 1
    %16 = vsyncpa %s15, 0
    %17 = vsyncpa [#allocation7], 0
    %s18 = scalar_lea.sflag [#allocation7], 1
    %19 = vsyncpa %s18, 0
    %20 = vsyncpa [#allocation10], 0
    %21 = vsyncpa [#allocation13], 0
    %22 = vsyncpa [#allocation5], 0
    loop: start=0, step=1, limit=4
    $region2: #{tpu_custom_call.1} parent=1 // loop_pre_header
      _
    $region3: #{tpu_custom_call.1} parent=1 // loop_header
      %s24 = sphi 0, %s28
      %p25 = scmp.ge.s32.totalorder %s24, 4
      %s34 = sphi 0, %s36
      %s37 = sphi 0, %s34
      %s38 = sphi 0, %s37
      %s54 = sphi 0, %s38
      %s60 = sphi 0, %s62
      %s63 = sphi 0, %s60
      %s64 = sphi 0, %s63
      %s80 = sphi 0, %s64
      %s84 = sphi 0, %s84
      %s86 = sphi 0, %s84
      %s87 = sphi 0, %s86
      %s101 = sphi 0, %s87
      %s105 = sphi 0, %s105
      %s107 = sphi 0, %s105
      %s108 = sphi 0, %s107
      %s122 = sphi 0, %s108
      %s126 = sphi 0, %s126
      %s128 = sphi 0, %s126
      %s129 = sphi 0, %s128
      %s143 = sphi 0, %s129
      %s147 = sphi 0, %s147
      %s149 = sphi 0, %s147
      %s150 = sphi 0, %s149
      %s164 = sphi 0, %s150
      %s168 = sphi 0, %s168
      %s170 = sphi 0, %s168
      %s171 = sphi 0, %s170
      %s185 = sphi 0, %s171
      %s189 = sphi 0, %s189
      %s191 = sphi 0, %s189
      %s192 = sphi 0, %s191
      %s206 = sphi 0, %s192
      %s210 = sphi 0, %s210
      %s212 = sphi 0, %s210
      %s213 = sphi 0, %s212
      %s227 = sphi 0, %s213
      %s231 = sphi 0, %s231
      %s233 = sphi 0, %s231
      %s234 = sphi 0, %s233
      %s248 = sphi 0, %s234
    $region4: #{tpu_custom_call.1} parent=1 // loop_header_branch
      %27 = sbr.rel (%p25) target = $region8
    $region5: #{tpu_custom_call.1} parent=1 // loop_body
      %s29 = ssub.s32 %s24, 1
      %s30 = ssub.s32 %s24, 2
      %s31 = sadd.s32 %s24, 1
      %s32 = ssub.s32 %s24, %s31
      %p33 = scmp.eq.s32.totalorder %s32, 0
      %s35 = sadd.s32 %s34, 1
      %s36 = scalar_select %p33, %s34, %s35
      %p39 = pneg %p33
      %p40 = scmp.eq.s32.totalorder %s24, 1
      %p41 = por %p39, %p40
      %p42 = scmp.ne.s32.totalorder %s34, %s37
      %p43 = scmp.eq.s32.totalorder %s24, 0
      %p44 = por %p42, %p43
      %p45 = scmp.ne.s32.totalorder %s34, %s37
      %p46 = scmp.eq.s32.totalorder %s29, 1
      %p47 = por %p45, %p46
      %p48 = scmp.ne.s32.totalorder %s37, %s38
      %p49 = scmp.eq.s32.totalorder %s29, 0
      %p50 = por %p48, %p49
      %p51 = scmp.ne.s32.totalorder %s37, %s38
      %p52 = scmp.eq.s32.totalorder %s30, 1
      %p53 = por %p51, %p52
      %p55 = scmp.ne.s32.totalorder %s38, %s54
      %p56 = scmp.eq.s32.totalorder %s30, 0
      %p57 = por %p55, %p56
      %s58 = ssub.s32 %s24, %s31
      %p59 = scmp.eq.s32.totalorder %s58, 0
      %s61 = sadd.s32 %s60, 1
      %s62 = scalar_select %p59, %s60, %s61
      %p65 = pneg %p59
      %p66 = scmp.eq.s32.totalorder %s24, 1
      %p67 = por %p65, %p66
      %p68 = scmp.ne.s32.totalorder %s60, %s63
      %p69 = scmp.eq.s32.totalorder %s24, 0
      %p70 = por %p68, %p69
      %p71 = scmp.ne.s32.totalorder %s60, %s63
      %p72 = scmp.eq.s32.totalorder %s29, 1
      %p73 = por %p71, %p72
      %p74 = scmp.ne.s32.totalorder %s63, %s64
      %p75 = scmp.eq.s32.totalorder %s29, 0
      %p76 = por %p74, %p75
      %p77 = scmp.ne.s32.totalorder %s63, %s64
      %p78 = scmp.eq.s32.totalorder %s30, 1
      %p79 = por %p77, %p78
      %p81 = scmp.ne.s32.totalorder %s64, %s80
      %p82 = scmp.eq.s32.totalorder %s30, 0
      %p83 = por %p81, %p82
      %s85 = sadd.s32 %s84, 1
      %p88 = scmp.eq.s32.totalorder %s24, 1
      %p89 = scmp.ne.s32.totalorder %s84, %s86
      %p90 = scmp.eq.s32.totalorder %s24, 0
      %p91 = por %p89, %p90
      %p92 = scmp.ne.s32.totalorder %s84, %s86
      %p93 = scmp.eq.s32.totalorder %s29, 1
      %p94 = por %p92, %p93
      %p95 = scmp.ne.s32.totalorder %s86, %s87
      %p96 = scmp.eq.s32.totalorder %s29, 0
      %p97 = por %p95, %p96
      %p98 = scmp.ne.s32.totalorder %s86, %s87
      %p99 = scmp.eq.s32.totalorder %s30, 1
      %p100 = por %p98, %p99
      %p102 = scmp.ne.s32.totalorder %s87, %s101
      %p103 = scmp.eq.s32.totalorder %s30, 0
      %p104 = por %p102, %p103
      %s106 = sadd.s32 %s105, 1
      %p109 = scmp.eq.s32.totalorder %s24, 1
      %p110 = scmp.ne.s32.totalorder %s105, %s107
      %p111 = scmp.eq.s32.totalorder %s24, 0
      %p112 = por %p110, %p111
      %p113 = scmp.ne.s32.totalorder %s105, %s107
      %p114 = scmp.eq.s32.totalorder %s29, 1
      %p115 = por %p113, %p114
      %p116 = scmp.ne.s32.totalorder %s107, %s108
      %p117 = scmp.eq.s32.totalorder %s29, 0
      %p118 = por %p116, %p117
      %p119 = scmp.ne.s32.totalorder %s107, %s108
      %p120 = scmp.eq.s32.totalorder %s30, 1
      %p121 = por %p119, %p120
      %p123 = scmp.ne.s32.totalorder %s108, %s122
      %p124 = scmp.eq.s32.totalorder %s30, 0
      %p125 = por %p123, %p124
      %s127 = sadd.s32 %s126, 1
      %p130 = scmp.eq.s32.totalorder %s24, 1
      %p131 = scmp.ne.s32.totalorder %s126, %s128
      %p132 = scmp.eq.s32.totalorder %s24, 0
      %p133 = por %p131, %p132
      %p134 = scmp.ne.s32.totalorder %s126, %s128
      %p135 = scmp.eq.s32.totalorder %s29, 1
      %p136 = por %p134, %p135
      %p137 = scmp.ne.s32.totalorder %s128, %s129
      %p138 = scmp.eq.s32.totalorder %s29, 0
      %p139 = por %p137, %p138
      %p140 = scmp.ne.s32.totalorder %s128, %s129
      %p141 = scmp.eq.s32.totalorder %s30, 1
      %p142 = por %p140, %p141
      %p144 = scmp.ne.s32.totalorder %s129, %s143
      %p145 = scmp.eq.s32.totalorder %s30, 0
      %p146 = por %p144, %p145
      %s148 = sadd.s32 %s147, 1
      %p151 = scmp.eq.s32.totalorder %s24, 1
      %p152 = scmp.ne.s32.totalorder %s147, %s149
      %p153 = scmp.eq.s32.totalorder %s24, 0
      %p154 = por %p152, %p153
      %p155 = scmp.ne.s32.totalorder %s147, %s149
      %p156 = scmp.eq.s32.totalorder %s29, 1
      %p157 = por %p155, %p156
      %p158 = scmp.ne.s32.totalorder %s149, %s150
      %p159 = scmp.eq.s32.totalorder %s29, 0
      %p160 = por %p158, %p159
      %p161 = scmp.ne.s32.totalorder %s149, %s150
      %p162 = scmp.eq.s32.totalorder %s30, 1
      %p163 = por %p161, %p162
      %p165 = scmp.ne.s32.totalorder %s150, %s164
      %p166 = scmp.eq.s32.totalorder %s30, 0
      %p167 = por %p165, %p166
      %s169 = sadd.s32 %s168, 1
      %p172 = scmp.eq.s32.totalorder %s24, 1
      %p173 = scmp.ne.s32.totalorder %s168, %s170
      %p174 = scmp.eq.s32.totalorder %s24, 0
      %p175 = por %p173, %p174
      %p176 = scmp.ne.s32.totalorder %s168, %s170
      %p177 = scmp.eq.s32.totalorder %s29, 1
      %p178 = por %p176, %p177
      %p179 = scmp.ne.s32.totalorder %s170, %s171
      %p180 = scmp.eq.s32.totalorder %s29, 0
      %p181 = por %p179, %p180
      %p182 = scmp.ne.s32.totalorder %s170, %s171
      %p183 = scmp.eq.s32.totalorder %s30, 1
      %p184 = por %p182, %p183
      %p186 = scmp.ne.s32.totalorder %s171, %s185
      %p187 = scmp.eq.s32.totalorder %s30, 0
      %p188 = por %p186, %p187
      %s190 = sadd.s32 %s189, 1
      %p193 = scmp.eq.s32.totalorder %s24, 1
      %p194 = scmp.ne.s32.totalorder %s189, %s191
      %p195 = scmp.eq.s32.totalorder %s24, 0
      %p196 = por %p194, %p195
      %p197 = scmp.ne.s32.totalorder %s189, %s191
      %p198 = scmp.eq.s32.totalorder %s29, 1
      %p199 = por %p197, %p198
      %p200 = scmp.ne.s32.totalorder %s191, %s192
      %p201 = scmp.eq.s32.totalorder %s29, 0
      %p202 = por %p200, %p201
      %p203 = scmp.ne.s32.totalorder %s191, %s192
      %p204 = scmp.eq.s32.totalorder %s30, 1
      %p205 = por %p203, %p204
      %p207 = scmp.ne.s32.totalorder %s192, %s206
      %p208 = scmp.eq.s32.totalorder %s30, 0
      %p209 = por %p207, %p208
      %s211 = sadd.s32 %s210, 1
      %p214 = scmp.eq.s32.totalorder %s24, 1
      %p215 = scmp.ne.s32.totalorder %s210, %s212
      %p216 = scmp.eq.s32.totalorder %s24, 0
      %p217 = por %p215, %p216
      %p218 = scmp.ne.s32.totalorder %s210, %s212
      %p219 = scmp.eq.s32.totalorder %s29, 1
      %p220 = por %p218, %p219
      %p221 = scmp.ne.s32.totalorder %s212, %s213
      %p222 = scmp.eq.s32.totalorder %s29, 0
      %p223 = por %p221, %p222
      %p224 = scmp.ne.s32.totalorder %s212, %s213
      %p225 = scmp.eq.s32.totalorder %s30, 1
      %p226 = por %p224, %p225
      %p228 = scmp.ne.s32.totalorder %s213, %s227
      %p229 = scmp.eq.s32.totalorder %s30, 0
      %p230 = por %p228, %p229
      %s232 = sadd.s32 %s231, 1
      %p235 = scmp.eq.s32.totalorder %s24, 1
      %p236 = scmp.ne.s32.totalorder %s231, %s233
      %p237 = scmp.eq.s32.totalorder %s24, 0
      %p238 = por %p236, %p237
      %p239 = scmp.ne.s32.totalorder %s231, %s233
      %p240 = scmp.eq.s32.totalorder %s29, 1
      %p241 = por %p239, %p240
      %p242 = scmp.ne.s32.totalorder %s233, %s234
      %p243 = scmp.eq.s32.totalorder %s29, 0
      %p244 = por %p242, %p243
      %p245 = scmp.ne.s32.totalorder %s233, %s234
      %p246 = scmp.eq.s32.totalorder %s30, 1
      %p247 = por %p245, %p246
      %p249 = scmp.ne.s32.totalorder %s234, %s248
      %p250 = scmp.eq.s32.totalorder %s30, 0
      %p251 = por %p249, %p250
      %p252 = scmp.le.s32.totalorder 1, %s24
      %p253 = scmp.lt.s32.totalorder %s24, 3
      %p254 = pnand %p252, %p253
      %p255 = pneg %p254
      // Predicated region
      $region9: #{tpu_custom_call.1} parent=5 // pred_check
        _
      $region10: #{tpu_custom_call.1} parent=5 // pred_check_branch
        %257 = sbr.rel (%p254) target = $region12
      $region11: #{tpu_custom_call.1} parent=5 // pred_region
        %s258 = ssub.s32 %s24, 1
        // Predicated region
        $region13: #{tpu_custom_call.1} parent=11 // pred_check
          %p259 = pneg %p97
        $region14: #{tpu_custom_call.1} parent=11 // pred_check_branch
          %261 = sbr.rel (%p259) target = $region16
        $region15: #{tpu_custom_call.1} parent=11 // pred_region
          %263 = vsyncadd [#allocation7], 0
          %s265 = sshll.u32 %s2, 4
          %s266 = int_to_ptr.hbm [resolvable:$true] %s265
          %s267 = sshll.u32 [#allocation8], 4
          %s268 = int_to_ptr.vmem [resolvable:$true] %s267
          %270 = dma.hbm_to_vmem [thread:$0]  %s266, 48, %s268, [#allocation7]
        $region16: #{tpu_custom_call.1} parent=11 // pred_fallthru
          _
        // Predicated region
        $region17: #{tpu_custom_call.1} parent=11 // pred_check
          %p271 = pneg %p118
        $region18: #{tpu_custom_call.1} parent=11 // pred_check_branch
          %273 = sbr.rel (%p271) target = $region20
        $region19: #{tpu_custom_call.1} parent=11 // pred_region
          %275 = vsyncadd [#allocation10], 0
          %s276 = sshll.u32 %s3, 4
          %s277 = int_to_ptr.hbm [resolvable:$true] %s276
          %s278 = sshll.u32 [#allocation9], 4
          %s279 = int_to_ptr.vmem [resolvable:$true] %s278
          %284 = dma.hbm_to_vmem [thread:$0]  %s277, 3072, %s279, [#allocation10], 192, 192, 12
        $region20: #{tpu_custom_call.1} parent=11 // pred_fallthru
          _
        // Predicated region
        $region21: #{tpu_custom_call.1} parent=11 // pred_check
          %p285 = pneg %p139
        $region22: #{tpu_custom_call.1} parent=11 // pred_check_branch
          %287 = sbr.rel (%p285) target = $region24
        $region23: #{tpu_custom_call.1} parent=11 // pred_region
          _
        $region24: #{tpu_custom_call.1} parent=11 // pred_fallthru
          _
        // Predicated region
        $region25: #{tpu_custom_call.1} parent=11 // pred_check
          %p288 = pneg %p160
        $region26: #{tpu_custom_call.1} parent=11 // pred_check_branch
          %290 = sbr.rel (%p288) target = $region28
        $region27: #{tpu_custom_call.1} parent=11 // pred_region
          %292 = vsyncadd [#allocation10], 0
          %s293 = sshll.u32 %s5, 4
          %s294 = int_to_ptr.hbm [resolvable:$true] %s293
          %s295 = sshll.u32 [#allocation11], 4
          %s296 = int_to_ptr.vmem [resolvable:$true] %s295
          %301 = dma.hbm_to_vmem [thread:$0]  %s294, 3072, %s296, [#allocation10], 192, 192, 12
        $region28: #{tpu_custom_call.1} parent=11 // pred_fallthru
          _
        // Predicated region
        $region29: #{tpu_custom_call.1} parent=11 // pred_check
          %p302 = pneg %p181
        $region30: #{tpu_custom_call.1} parent=11 // pred_check_branch
          %304 = sbr.rel (%p302) target = $region32
        $region31: #{tpu_custom_call.1} parent=11 // pred_region
          %306 = vsyncadd [#allocation13], 0
          %s308 = sshll.u32 %s6, 4
          %s309 = int_to_ptr.hbm [resolvable:$true] %s308
          %s310 = sshll.u32 [#allocation12], 4
          %s311 = int_to_ptr.vmem [resolvable:$true] %s310
          %313 = dma.hbm_to_vmem [thread:$0]  %s309, 48, %s311, [#allocation13]
        $region32: #{tpu_custom_call.1} parent=11 // pred_fallthru
          _
        // Predicated region
        $region33: #{tpu_custom_call.1} parent=11 // pred_check
          %p314 = pneg %p202
        $region34: #{tpu_custom_call.1} parent=11 // pred_check_branch
          %316 = sbr.rel (%p314) target = $region36
        $region35: #{tpu_custom_call.1} parent=11 // pred_region
          %318 = vsyncadd [#allocation13], 0
          %s319 = sshll.u32 %s7, 4
          %s320 = int_to_ptr.hbm [resolvable:$true] %s319
          %s321 = sshll.u32 [#allocation14], 4
          %s322 = int_to_ptr.vmem [resolvable:$true] %s321
          %327 = dma.hbm_to_vmem [thread:$0]  %s320, 1024, %s322, [#allocation13], 64, 64, 4
        $region36: #{tpu_custom_call.1} parent=11 // pred_fallthru
          _
        // Predicated region
        $region37: #{tpu_custom_call.1} parent=11 // pred_check
          %p328 = pneg %p223
        $region38: #{tpu_custom_call.1} parent=11 // pred_check_branch
          %330 = sbr.rel (%p328) target = $region40
        $region39: #{tpu_custom_call.1} parent=11 // pred_region
          _
        $region40: #{tpu_custom_call.1} parent=11 // pred_fallthru
          _
      $region12: #{tpu_custom_call.1} parent=5 // pred_fallthru
        _
      %p331 = scmp.lt.s32.totalorder %s24, 2
      // Predicated region
      $region41: #{tpu_custom_call.1} parent=5 // pred_check
        %p332 = pneg %p331
      $region42: #{tpu_custom_call.1} parent=5 // pred_check_branch
        %334 = sbr.rel (%p332) target = $region44
      $region43: #{tpu_custom_call.1} parent=5 // pred_region
        // Predicated region
        $region45: #{tpu_custom_call.1} parent=43 // pred_check
          %p335 = pneg %p44
        $region46: #{tpu_custom_call.1} parent=43 // pred_check_branch
          %337 = sbr.rel (%p335) target = $region48
        $region47: #{tpu_custom_call.1} parent=43 // pred_region
          %s338 = sand.u32 %s34, 1
          %s339 = scalar_lea.sflag [#allocation4], %s338
          %s340 = sand.u32 %s34, 1
          %s341 = smul.addr %s340, 256
          %s342 = scalar_lea.vmem [#allocation3], %s341
          %s343 = smul.u32 2, %s24
          %345 = vsyncadd %s339, 0
          %s346 = smul.addr %s343, 8
          %s347 = scalar_lea.hbm %s0, %s346
          %s348 = sshll.u32 %s347, 4
          %s349 = int_to_ptr.hbm [resolvable:$true] %s348
          %s350 = sshll.u32 %s342, 4
          %s351 = int_to_ptr.vmem [resolvable:$true] %s350
          %356 = dma.hbm_to_vmem [thread:$0]  %s349, 4096, %s351, %s339, 512, 256, 16
        $region48: #{tpu_custom_call.1} parent=43 // pred_fallthru
          _
        // Predicated region
        $region49: #{tpu_custom_call.1} parent=43 // pred_check
          %p357 = pneg %p70
        $region50: #{tpu_custom_call.1} parent=43 // pred_check_branch
          %359 = sbr.rel (%p357) target = $region52
        $region51: #{tpu_custom_call.1} parent=43 // pred_region
          %s360 = sand.u32 %s24, 1
          %s361 = scalar_lea.sflag [#allocation7], %s360
          %s362 = sand.u32 %s60, 1
          %s363 = smul.addr %s362, 384
          %s364 = scalar_lea.vmem [#allocation6], %s363
          %s365 = smul.u32 32, %s24
          %367 = vsyncadd %s361, 0
          %s368 = smul.addr %s365, 3
          %s369 = smul.addr %s368, 4
          %s370 = scalar_lea.hbm %s1, %s369
          %s371 = sshll.u32 %s370, 4
          %s372 = int_to_ptr.hbm [resolvable:$true] %s371
          %s373 = sshll.u32 %s364, 4
          %s374 = int_to_ptr.vmem [resolvable:$true] %s373
          %379 = dma.hbm_to_vmem [thread:$0]  %s372, 6144, %s374, %s361, 192, 192, 12
        $region52: #{tpu_custom_call.1} parent=43 // pred_fallthru
          _
      $region44: #{tpu_custom_call.1} parent=5 // pred_fallthru
        _
      %p380 = scmp.le.s32.totalorder 1, %s24
      %p381 = scmp.lt.s32.totalorder %s24, 3
      %p382 = pnand %p380, %p381
      %p383 = pneg %p382
      // Predicated region
      $region53: #{tpu_custom_call.1} parent=5 // pred_check
        _
      $region54: #{tpu_custom_call.1} parent=5 // pred_check_branch
        %385 = sbr.rel (%p382) target = $region56
      $region55: #{tpu_custom_call.1} parent=5 // pred_region
        %s386 = ssub.s32 %s24, 1
        %s387 = sand.u32 %s37, 1
        %s388 = scalar_lea.sflag [#allocation4], %s387
        %s389 = sand.u32 %s37, 1
        %s390 = smul.addr %s389, 256
        %s391 = scalar_lea.vmem [#allocation3], %s390
        // Predicated region
        $region57: #{tpu_custom_call.1} parent=55 // pred_check
          %p392 = pneg %p50
        $region58: #{tpu_custom_call.1} parent=55 // pred_check_branch
          %394 = sbr.rel (%p392) target = $region60
        $region59: #{tpu_custom_call.1} parent=55 // pred_region
          %396 = dma.done %s388, 4096
        $region60: #{tpu_custom_call.1} parent=55 // pred_fallthru
          _
        %s397 = sand.u32 %s29, 1
        %s398 = scalar_lea.sflag [#allocation7], %s397
        %s399 = sand.u32 %s63, 1
        %s400 = smul.addr %s399, 384
        %s401 = scalar_lea.vmem [#allocation6], %s400
        // Predicated region
        $region61: #{tpu_custom_call.1} parent=55 // pred_check
          %p402 = pneg %p76
        $region62: #{tpu_custom_call.1} parent=55 // pred_check_branch
          %404 = sbr.rel (%p402) target = $region64
        $region63: #{tpu_custom_call.1} parent=55 // pred_region
          %406 = dma.done %s398, 6144
        $region64: #{tpu_custom_call.1} parent=55 // pred_fallthru
          _
        // Predicated region
        $region65: #{tpu_custom_call.1} parent=55 // pred_check
          %p407 = pneg %p97
        $region66: #{tpu_custom_call.1} parent=55 // pred_check_branch
          %409 = sbr.rel (%p407) target = $region68
        $region67: #{tpu_custom_call.1} parent=55 // pred_region
          %411 = dma.done [#allocation7], 48
        $region68: #{tpu_custom_call.1} parent=55 // pred_fallthru
          _
        // Predicated region
        $region69: #{tpu_custom_call.1} parent=55 // pred_check
          %p412 = pneg %p118
        $region70: #{tpu_custom_call.1} parent=55 // pred_check_branch
          %414 = sbr.rel (%p412) target = $region72
        $region71: #{tpu_custom_call.1} parent=55 // pred_region
          %416 = dma.done [#allocation10], 3072
        $region72: #{tpu_custom_call.1} parent=55 // pred_fallthru
          _
        // Predicated region
        $region73: #{tpu_custom_call.1} parent=55 // pred_check
          %p417 = pneg %p160
        $region74: #{tpu_custom_call.1} parent=55 // pred_check_branch
          %419 = sbr.rel (%p417) target = $region76
        $region75: #{tpu_custom_call.1} parent=55 // pred_region
          %421 = dma.done [#allocation10], 3072
        $region76: #{tpu_custom_call.1} parent=55 // pred_fallthru
          _
        // Predicated region
        $region77: #{tpu_custom_call.1} parent=55 // pred_check
          %p422 = pneg %p181
        $region78: #{tpu_custom_call.1} parent=55 // pred_check_branch
          %424 = sbr.rel (%p422) target = $region80
        $region79: #{tpu_custom_call.1} parent=55 // pred_region
          %426 = dma.done [#allocation13], 48
        $region80: #{tpu_custom_call.1} parent=55 // pred_fallthru
          _
        // Predicated region
        $region81: #{tpu_custom_call.1} parent=55 // pred_check
          %p427 = pneg %p202
        $region82: #{tpu_custom_call.1} parent=55 // pred_check_branch
          %429 = sbr.rel (%p427) target = $region84
        $region83: #{tpu_custom_call.1} parent=55 // pred_region
          %431 = dma.done [#allocation13], 1024
        $region84: #{tpu_custom_call.1} parent=55 // pred_fallthru
          _
        %s432 = sand.u32 %s37, 1
        %s433 = scalar_lea.sflag [#allocation4], %s432
        %s434 = sand.u32 %s37, 1
        %s435 = smul.addr %s434, 256
        %s436 = scalar_lea.vmem [#allocation3], %s435
        %p437 = pneg %p50
        %p438 = pneg %p47
        %s439 = sand.u32 %s29, 1
        %s440 = scalar_lea.sflag [#allocation7], %s439
        %s441 = sand.u32 %s63, 1
        %s442 = smul.addr %s441, 384
        %s443 = scalar_lea.vmem [#allocation6], %s442
        %p444 = pneg %p76
        %p445 = pneg %p73
        %p446 = pneg %p97
        %p447 = pneg %p94
        %p448 = pneg %p118
        %p449 = pneg %p115
        %p450 = pneg %p139
        %p451 = pneg %p136
        %p452 = pneg %p160
        %p453 = pneg %p157
        %p454 = pneg %p181
        %p455 = pneg %p178
        %p456 = pneg %p202
        %p457 = pneg %p199
        %p458 = pneg %p223
        %p459 = pneg %p220
        %p460 = pneg %p244
        %p461 = pneg %p241
        %s462 = smul.u32 2, %s29
        %s463 = smul.u32 32, %s29
        %p464 = scmp.eq.s32.totalorder %s29, 0
        // Predicated region
        $region85: #{tpu_custom_call.1} parent=55 // pred_check
          %p465 = pneg %p464
        $region86: #{tpu_custom_call.1} parent=55 // pred_check_branch
          %467 = sbr.rel (%p465) target = $region88
        $region87: #{tpu_custom_call.1} parent=55 // pred_region
          %468 = vst [vmem:[#allocation2] sm:$0xff] 0.0
          %469 = vst [vmem:[#allocation2 + $0x8] sm:$0xff] 0.0
          %470 = vst [vmem:[#allocation2 + $0x10] sm:$0xff] 0.0
          %471 = vst [vmem:[#allocation2 + $0x18] sm:$0xff] 0.0
          %472 = vst [vmem:[#allocation2 + $0x20] sm:$0xff] 0.0
          %473 = vst [vmem:[#allocation2 + $0x28] sm:$0xff] 0.0
          %474 = vst [vmem:[#allocation2 + $0x30] sm:$0xff] 0.0
          %475 = vst [vmem:[#allocation2 + $0x38] sm:$0xff] 0.0
          %476 = vst [vmem:[#allocation2 + $0x40] sm:$0xff] 0.0
          %477 = vst [vmem:[#allocation2 + $0x48] sm:$0xff] 0.0
          %478 = vst [vmem:[#allocation2 + $0x50] sm:$0xff] 0.0
          %479 = vst [vmem:[#allocation2 + $0x58] sm:$0xff] 0.0
          %480 = vst [vmem:[#allocation2 + $0x60] sm:$0xff] 0.0
          %481 = vst [vmem:[#allocation2 + $0x68] sm:$0xff] 0.0
          %482 = vst [vmem:[#allocation2 + $0x70] sm:$0xff] 0.0
          %483 = vst [vmem:[#allocation2 + $0x78] sm:$0xff] 0.0
          %484 = vst [vmem:[#allocation2 + $0x80] sm:$0xff] 0.0
          %485 = vst [vmem:[#allocation2 + $0x88] sm:$0xff] 0.0
          %486 = vst [vmem:[#allocation2 + $0x90] sm:$0xff] 0.0
          %487 = vst [vmem:[#allocation2 + $0x98] sm:$0xff] 0.0
          %488 = vst [vmem:[#allocation2 + $0xa0] sm:$0xff] 0.0
          %489 = vst [vmem:[#allocation2 + $0xa8] sm:$0xff] 0.0
          %490 = vst [vmem:[#allocation2 + $0xb0] sm:$0xff] 0.0
          %491 = vst [vmem:[#allocation2 + $0xb8] sm:$0xff] 0.0
          %492 = vst [vmem:[#allocation2 + $0xc0] sm:$0xff] 0.0
          %493 = vst [vmem:[#allocation2 + $0xc8] sm:$0xff] 0.0
          %494 = vst [vmem:[#allocation2 + $0xd0] sm:$0xff] 0.0
          %495 = vst [vmem:[#allocation2 + $0xd8] sm:$0xff] 0.0
          %496 = vst [vmem:[#allocation2 + $0xe0] sm:$0xff] 0.0
          %497 = vst [vmem:[#allocation2 + $0xe8] sm:$0xff] 0.0
          %498 = vst [vmem:[#allocation2 + $0xf0] sm:$0xff] 0.0
          %499 = vst [vmem:[#allocation2 + $0xf8] sm:$0xff] 0.0
          %500 = vst [vmem:[#allocation2 + $0x100] sm:$0xff] 0.0
          %501 = vst [vmem:[#allocation2 + $0x108] sm:$0xff] 0.0
          %502 = vst [vmem:[#allocation2 + $0x110] sm:$0xff] 0.0
          %503 = vst [vmem:[#allocation2 + $0x118] sm:$0xff] 0.0
          %504 = vst [vmem:[#allocation2 + $0x120] sm:$0xff] 0.0
          %505 = vst [vmem:[#allocation2 + $0x128] sm:$0xff] 0.0
          %506 = vst [vmem:[#allocation2 + $0x130] sm:$0xff] 0.0
          %507 = vst [vmem:[#allocation2 + $0x138] sm:$0xff] 0.0
          %508 = vst [vmem:[#allocation2 + $0x140] sm:$0xff] 0.0
          %509 = vst [vmem:[#allocation2 + $0x148] sm:$0xff] 0.0
          %510 = vst [vmem:[#allocation2 + $0x150] sm:$0xff] 0.0
          %511 = vst [vmem:[#allocation2 + $0x158] sm:$0xff] 0.0
          %512 = vst [vmem:[#allocation2 + $0x160] sm:$0xff] 0.0
          %513 = vst [vmem:[#allocation2 + $0x168] sm:$0xff] 0.0
          %514 = vst [vmem:[#allocation2 + $0x170] sm:$0xff] 0.0
          %515 = vst [vmem:[#allocation2 + $0x178] sm:$0xff] 0.0
        $region88: #{tpu_custom_call.1} parent=55 // pred_fallthru
          _
        %v516 = vld [vmem:[#allocation2] sm:$0xff]
        %v517 = vld [vmem:[#allocation2 + $0x8] sm:$0xff]
        %v518 = vld [vmem:[#allocation2 + $0x10] sm:$0xff]
        %v519 = vld [vmem:[#allocation2 + $0x18] sm:$0xff]
        %v520 = vld [vmem:[#allocation2 + $0x20] sm:$0xff]
        %v521 = vld [vmem:[#allocation2 + $0x28] sm:$0xff]
        %v522 = vld [vmem:[#allocation2 + $0x30] sm:$0xff]
        %v523 = vld [vmem:[#allocation2 + $0x38] sm:$0xff]
        %v524 = vld [vmem:[#allocation2 + $0x40] sm:$0xff]
        %v525 = vld [vmem:[#allocation2 + $0x48] sm:$0xff]
        %v526 = vld [vmem:[#allocation2 + $0x50] sm:$0xff]
        %v527 = vld [vmem:[#allocation2 + $0x58] sm:$0xff]
        %v528 = vld [vmem:[#allocation2 + $0x60] sm:$0xff]
        %v529 = vld [vmem:[#allocation2 + $0x68] sm:$0xff]
        %v530 = vld [vmem:[#allocation2 + $0x70] sm:$0xff]
        %v531 = vld [vmem:[#allocation2 + $0x78] sm:$0xff]
        %v532 = vld [vmem:[#allocation2 + $0x80] sm:$0xff]
        %v533 = vld [vmem:[#allocation2 + $0x88] sm:$0xff]
        %v534 = vld [vmem:[#allocation2 + $0x90] sm:$0xff]
        %v535 = vld [vmem:[#allocation2 + $0x98] sm:$0xff]
        %v536 = vld [vmem:[#allocation2 + $0xa0] sm:$0xff]
        %v537 = vld [vmem:[#allocation2 + $0xa8] sm:$0xff]
        %v538 = vld [vmem:[#allocation2 + $0xb0] sm:$0xff]
        %v539 = vld [vmem:[#allocation2 + $0xb8] sm:$0xff]
        %v540 = vld [vmem:[#allocation2 + $0xc0] sm:$0xff]
        %v541 = vld [vmem:[#allocation2 + $0xc8] sm:$0xff]
        %v542 = vld [vmem:[#allocation2 + $0xd0] sm:$0xff]
        %v543 = vld [vmem:[#allocation2 + $0xd8] sm:$0xff]
        %v544 = vld [vmem:[#allocation2 + $0xe0] sm:$0xff]
        %v545 = vld [vmem:[#allocation2 + $0xe8] sm:$0xff]
        %v546 = vld [vmem:[#allocation2 + $0xf0] sm:$0xff]
        %v547 = vld [vmem:[#allocation2 + $0xf8] sm:$0xff]
        %v548 = vld [vmem:[#allocation2 + $0x100] sm:$0xff]
        %v549 = vld [vmem:[#allocation2 + $0x108] sm:$0xff]
        %v550 = vld [vmem:[#allocation2 + $0x110] sm:$0xff]
        %v551 = vld [vmem:[#allocation2 + $0x118] sm:$0xff]
        %v552 = vld [vmem:[#allocation2 + $0x120] sm:$0xff]
        %v553 = vld [vmem:[#allocation2 + $0x128] sm:$0xff]
        %v554 = vld [vmem:[#allocation2 + $0x130] sm:$0xff]
        %v555 = vld [vmem:[#allocation2 + $0x138] sm:$0xff]
        %v556 = vld [vmem:[#allocation2 + $0x140] sm:$0xff]
        %v557 = vld [vmem:[#allocation2 + $0x148] sm:$0xff]
        %v558 = vld [vmem:[#allocation2 + $0x150] sm:$0xff]
        %v559 = vld [vmem:[#allocation2 + $0x158] sm:$0xff]
        %v560 = vld [vmem:[#allocation2 + $0x160] sm:$0xff]
        %v561 = vld [vmem:[#allocation2 + $0x168] sm:$0xff]
        %v562 = vld [vmem:[#allocation2 + $0x170] sm:$0xff]
        %v563 = vld [vmem:[#allocation2 + $0x178] sm:$0xff]
        %v564 = vld [vmem:[%s391] sm:$0xff]
        %v565 = vld [vmem:[%s391 + $0x8] sm:$0xff]
        %v566 = vld [vmem:[%s391 + $0x10] sm:$0xff]
        %v567 = vld [vmem:[%s391 + $0x18] sm:$0xff]
        %v568 = vld [vmem:[%s391 + $0x20] sm:$0xff]
        %v569 = vld [vmem:[%s391 + $0x28] sm:$0xff]
        %v570 = vld [vmem:[%s391 + $0x30] sm:$0xff]
        %v571 = vld [vmem:[%s391 + $0x38] sm:$0xff]
        %v572 = vld [vmem:[%s391 + $0x40] sm:$0xff]
        %v573 = vld [vmem:[%s391 + $0x48] sm:$0xff]
        %v574 = vld [vmem:[%s391 + $0x50] sm:$0xff]
        %v575 = vld [vmem:[%s391 + $0x58] sm:$0xff]
        %v576 = vld [vmem:[%s391 + $0x60] sm:$0xff]
        %v577 = vld [vmem:[%s391 + $0x68] sm:$0xff]
        %v578 = vld [vmem:[%s391 + $0x70] sm:$0xff]
        %v579 = vld [vmem:[%s391 + $0x78] sm:$0xff]
        %v580 = vld [vmem:[%s391 + $0x80] sm:$0xff]
        %v581 = vld [vmem:[%s391 + $0x88] sm:$0xff]
        %v582 = vld [vmem:[%s391 + $0x90] sm:$0xff]
        %v583 = vld [vmem:[%s391 + $0x98] sm:$0xff]
        %v584 = vld [vmem:[%s391 + $0xa0] sm:$0xff]
        %v585 = vld [vmem:[%s391 + $0xa8] sm:$0xff]
        %v586 = vld [vmem:[%s391 + $0xb0] sm:$0xff]
        %v587 = vld [vmem:[%s391 + $0xb8] sm:$0xff]
        %v588 = vld [vmem:[%s391 + $0xc0] sm:$0xff]
        %v589 = vld [vmem:[%s391 + $0xc8] sm:$0xff]
        %v590 = vld [vmem:[%s391 + $0xd0] sm:$0xff]
        %v591 = vld [vmem:[%s391 + $0xd8] sm:$0xff]
        %v592 = vld [vmem:[%s391 + $0xe0] sm:$0xff]
        %v593 = vld [vmem:[%s391 + $0xe8] sm:$0xff]
        %v594 = vld [vmem:[%s391 + $0xf0] sm:$0xff]
        %v595 = vld [vmem:[%s391 + $0xf8] sm:$0xff]
        %v596 = vpack.c.bf16 %v566, %v564
        %v597 = vpack.c.bf16 %v567, %v565
        %v598 = vpack.c.bf16 %v570, %v568
        %v599 = vpack.c.bf16 %v571, %v569
        %v600 = vpack.c.bf16 %v574, %v572
        %v601 = vpack.c.bf16 %v575, %v573
        %v602 = vpack.c.bf16 %v578, %v576
        %v603 = vpack.c.bf16 %v579, %v577
        %v604 = vpack.c.bf16 %v582, %v580
        %v605 = vpack.c.bf16 %v583, %v581
        %v606 = vpack.c.bf16 %v586, %v584
        %v607 = vpack.c.bf16 %v587, %v585
        %v608 = vpack.c.bf16 %v590, %v588
        %v609 = vpack.c.bf16 %v591, %v589
        %v610 = vpack.c.bf16 %v594, %v592
        %v611 = vpack.c.bf16 %v595, %v593
        %v612 = vld [vmem:[%s401] sm:$0xff]
        %v613 = vld [vmem:[%s401 + $0x8] sm:$0xf]
        %v614 = vld [vmem:[%s401 + $0xc] sm:$0xff]
        %v615 = vld [vmem:[%s401 + $0x14] sm:$0xf]
        %v616 = vld [vmem:[%s401 + $0x18] sm:$0xff]
        %v617 = vld [vmem:[%s401 + $0x20] sm:$0xf]
        %v618 = vld [vmem:[%s401 + $0x24] sm:$0xff]
        %v619 = vld [vmem:[%s401 + $0x2c] sm:$0xf]
        %v620 = vld [vmem:[%s401 + $0x30] sm:$0xff]
        %v621 = vld [vmem:[%s401 + $0x38] sm:$0xf]
        %v622 = vld [vmem:[%s401 + $0x3c] sm:$0xff]
        %v623 = vld [vmem:[%s401 + $0x44] sm:$0xf]
        %v624 = vld [vmem:[%s401 + $0x48] sm:$0xff]
        %v625 = vld [vmem:[%s401 + $0x50] sm:$0xf]
        %v626 = vld [vmem:[%s401 + $0x54] sm:$0xff]
        %v627 = vld [vmem:[%s401 + $0x5c] sm:$0xf]
        %v628 = vld [vmem:[%s401 + $0x60] sm:$0xff]
        %v629 = vld [vmem:[%s401 + $0x68] sm:$0xf]
        %v630 = vld [vmem:[%s401 + $0x6c] sm:$0xff]
        %v631 = vld [vmem:[%s401 + $0x74] sm:$0xf]
        %v632 = vld [vmem:[%s401 + $0x78] sm:$0xff]
        %v633 = vld [vmem:[%s401 + $0x80] sm:$0xf]
        %v634 = vld [vmem:[%s401 + $0x84] sm:$0xff]
        %v635 = vld [vmem:[%s401 + $0x8c] sm:$0xf]
        %v636 = vld [vmem:[%s401 + $0x90] sm:$0xff]
        %v637 = vld [vmem:[%s401 + $0x98] sm:$0xf]
        %v638 = vld [vmem:[%s401 + $0x9c] sm:$0xff]
        %v639 = vld [vmem:[%s401 + $0xa4] sm:$0xf]
        %v640 = vld [vmem:[%s401 + $0xa8] sm:$0xff]
        %v641 = vld [vmem:[%s401 + $0xb0] sm:$0xf]
        %v642 = vld [vmem:[%s401 + $0xb4] sm:$0xff]
        %v643 = vld [vmem:[%s401 + $0xbc] sm:$0xf]
        %v644 = vld [vmem:[%s401 + $0xc0] sm:$0xff]
        %v645 = vld [vmem:[%s401 + $0xc8] sm:$0xf]
        %v646 = vld [vmem:[%s401 + $0xcc] sm:$0xff]
        %v647 = vld [vmem:[%s401 + $0xd4] sm:$0xf]
        %v648 = vld [vmem:[%s401 + $0xd8] sm:$0xff]
        %v649 = vld [vmem:[%s401 + $0xe0] sm:$0xf]
        %v650 = vld [vmem:[%s401 + $0xe4] sm:$0xff]
        %v651 = vld [vmem:[%s401 + $0xec] sm:$0xf]
        %v652 = vld [vmem:[%s401 + $0xf0] sm:$0xff]
        %v653 = vld [vmem:[%s401 + $0xf8] sm:$0xf]
        %v654 = vld [vmem:[%s401 + $0xfc] sm:$0xff]
        %v655 = vld [vmem:[%s401 + $0x104] sm:$0xf]
        %v656 = vld [vmem:[%s401 + $0x108] sm:$0xff]
        %v657 = vld [vmem:[%s401 + $0x110] sm:$0xf]
        %v658 = vld [vmem:[%s401 + $0x114] sm:$0xff]
        %v659 = vld [vmem:[%s401 + $0x11c] sm:$0xf]
        %v660 = vld [vmem:[%s401 + $0x120] sm:$0xff]
        %v661 = vld [vmem:[%s401 + $0x128] sm:$0xf]
        %v662 = vld [vmem:[%s401 + $0x12c] sm:$0xff]
        %v663 = vld [vmem:[%s401 + $0x134] sm:$0xf]
        %v664 = vld [vmem:[%s401 + $0x138] sm:$0xff]
        %v665 = vld [vmem:[%s401 + $0x140] sm:$0xf]
        %v666 = vld [vmem:[%s401 + $0x144] sm:$0xff]
        %v667 = vld [vmem:[%s401 + $0x14c] sm:$0xf]
        %v668 = vld [vmem:[%s401 + $0x150] sm:$0xff]
        %v669 = vld [vmem:[%s401 + $0x158] sm:$0xf]
        %v670 = vld [vmem:[%s401 + $0x15c] sm:$0xff]
        %v671 = vld [vmem:[%s401 + $0x164] sm:$0xf]
        %v672 = vld [vmem:[%s401 + $0x168] sm:$0xff]
        %v673 = vld [vmem:[%s401 + $0x170] sm:$0xf]
        %v674 = vld [vmem:[%s401 + $0x174] sm:$0xff]
        %v675 = vld [vmem:[%s401 + $0x17c] sm:$0xf]
        %v740 = vunpack.c.l.b16 %v612
        %v741 = vunpack.c.h.b16 %v612
        %v742 = vunpack.c.l.b16 %v613
        %v743 = vunpack.c.l.b16 %v614
        %v744 = vunpack.c.h.b16 %v614
        %v745 = vunpack.c.l.b16 %v615
        %v746 = vunpack.c.l.b16 %v616
        %v747 = vunpack.c.h.b16 %v616
        %v748 = vunpack.c.l.b16 %v617
        %v749 = vunpack.c.l.b16 %v618
        %v750 = vunpack.c.h.b16 %v618
        %v751 = vunpack.c.l.b16 %v619
        %v752 = vunpack.c.l.b16 %v620
        %v753 = vunpack.c.h.b16 %v620
        %v754 = vunpack.c.l.b16 %v621
        %v755 = vunpack.c.l.b16 %v622
        %v756 = vunpack.c.h.b16 %v622
        %v757 = vunpack.c.l.b16 %v623
        %v758 = vunpack.c.l.b16 %v624
        %v759 = vunpack.c.h.b16 %v624
        %v760 = vunpack.c.l.b16 %v625
        %v761 = vunpack.c.l.b16 %v626
        %v762 = vunpack.c.h.b16 %v626
        %v763 = vunpack.c.l.b16 %v627
        %v764 = vunpack.c.l.b16 %v628
        %v765 = vunpack.c.h.b16 %v628
        %v766 = vunpack.c.l.b16 %v629
        %v767 = vunpack.c.l.b16 %v630
        %v768 = vunpack.c.h.b16 %v630
        %v769 = vunpack.c.l.b16 %v631
        %v770 = vunpack.c.l.b16 %v632
        %v771 = vunpack.c.h.b16 %v632
        %v772 = vunpack.c.l.b16 %v633
        %v773 = vunpack.c.l.b16 %v634
        %v774 = vunpack.c.h.b16 %v634
        %v775 = vunpack.c.l.b16 %v635
        %v776 = vunpack.c.l.b16 %v636
        %v777 = vunpack.c.h.b16 %v636
        %v778 = vunpack.c.l.b16 %v637
        %v779 = vunpack.c.l.b16 %v638
        %v780 = vunpack.c.h.b16 %v638
        %v781 = vunpack.c.l.b16 %v639
        %v782 = vunpack.c.l.b16 %v640
        %v783 = vunpack.c.h.b16 %v640
        %v784 = vunpack.c.l.b16 %v641
        %v785 = vunpack.c.l.b16 %v642
        %v786 = vunpack.c.h.b16 %v642
        %v787 = vunpack.c.l.b16 %v643
        %v788 = vunpack.c.l.b16 %v644
        %v789 = vunpack.c.h.b16 %v644
        %v790 = vunpack.c.l.b16 %v645
        %v791 = vunpack.c.l.b16 %v646
        %v792 = vunpack.c.h.b16 %v646
        %v793 = vunpack.c.l.b16 %v647
        %v794 = vunpack.c.l.b16 %v648
        %v795 = vunpack.c.h.b16 %v648
        %v796 = vunpack.c.l.b16 %v649
        %v797 = vunpack.c.l.b16 %v650
        %v798 = vunpack.c.h.b16 %v650
        %v799 = vunpack.c.l.b16 %v651
        %v800 = vunpack.c.l.b16 %v652
        %v801 = vunpack.c.h.b16 %v652
        %v802 = vunpack.c.l.b16 %v653
        %v803 = vunpack.c.l.b16 %v654
        %v804 = vunpack.c.h.b16 %v654
        %v805 = vunpack.c.l.b16 %v655
        %v806 = vunpack.c.l.b16 %v656
        %v807 = vunpack.c.h.b16 %v656
        %v808 = vunpack.c.l.b16 %v657
        %v809 = vunpack.c.l.b16 %v658
        %v810 = vunpack.c.h.b16 %v658
        %v811 = vunpack.c.l.b16 %v659
        %v812 = vunpack.c.l.b16 %v660
        %v813 = vunpack.c.h.b16 %v660
        %v814 = vunpack.c.l.b16 %v661
        %v815 = vunpack.c.l.b16 %v662
        %v816 = vunpack.c.h.b16 %v662
        %v817 = vunpack.c.l.b16 %v663
        %v818 = vunpack.c.l.b16 %v664
        %v819 = vunpack.c.h.b16 %v664
        %v820 = vunpack.c.l.b16 %v665
        %v821 = vunpack.c.l.b16 %v666
        %v822 = vunpack.c.h.b16 %v666
        %v823 = vunpack.c.l.b16 %v667
        %v824 = vunpack.c.l.b16 %v668
        %v825 = vunpack.c.h.b16 %v668
        %v826 = vunpack.c.l.b16 %v669
        %v827 = vunpack.c.l.b16 %v670
        %v828 = vunpack.c.h.b16 %v670
        %v829 = vunpack.c.l.b16 %v671
        %v830 = vunpack.c.l.b16 %v672
        %v831 = vunpack.c.h.b16 %v672
        %v832 = vunpack.c.l.b16 %v673
        %v833 = vunpack.c.l.b16 %v674
        %v834 = vunpack.c.h.b16 %v674
        %v835 = vunpack.c.l.b16 %v675
        %v836 = vpack.c.b16 %v743, %v740
        %v837 = vpack.c.b16 %v744, %v741
        %v838 = vpack.c.b16 %v745, %v742
        %v839 = vpack.c.b16 %v749, %v746
        %v840 = vpack.c.b16 %v750, %v747
        %v841 = vpack.c.b16 %v751, %v748
        %v842 = vpack.c.b16 %v755, %v752
        %v843 = vpack.c.b16 %v756, %v753
        %v844 = vpack.c.b16 %v757, %v754
        %v845 = vpack.c.b16 %v761, %v758
        %v846 = vpack.c.b16 %v762, %v759
        %v847 = vpack.c.b16 %v763, %v760
        %v848 = vpack.c.b16 %v767, %v764
        %v849 = vpack.c.b16 %v768, %v765
        %v850 = vpack.c.b16 %v769, %v766
        %v851 = vpack.c.b16 %v773, %v770
        %v852 = vpack.c.b16 %v774, %v771
        %v853 = vpack.c.b16 %v775, %v772
        %v854 = vpack.c.b16 %v779, %v776
        %v855 = vpack.c.b16 %v780, %v777
        %v856 = vpack.c.b16 %v781, %v778
        %v857 = vpack.c.b16 %v785, %v782
        %v858 = vpack.c.b16 %v786, %v783
        %v859 = vpack.c.b16 %v787, %v784
        %v860 = vpack.c.b16 %v791, %v788
        %v861 = vpack.c.b16 %v792, %v789
        %v862 = vpack.c.b16 %v793, %v790
        %v863 = vpack.c.b16 %v797, %v794
        %v864 = vpack.c.b16 %v798, %v795
        %v865 = vpack.c.b16 %v799, %v796
        %v866 = vpack.c.b16 %v803, %v800
        %v867 = vpack.c.b16 %v804, %v801
        %v868 = vpack.c.b16 %v805, %v802
        %v869 = vpack.c.b16 %v809, %v806
        %v870 = vpack.c.b16 %v810, %v807
        %v871 = vpack.c.b16 %v811, %v808
        %v872 = vpack.c.b16 %v815, %v812
        %v873 = vpack.c.b16 %v816, %v813
        %v874 = vpack.c.b16 %v817, %v814
        %v875 = vpack.c.b16 %v821, %v818
        %v876 = vpack.c.b16 %v822, %v819
        %v877 = vpack.c.b16 %v823, %v820
        %v878 = vpack.c.b16 %v827, %v824
        %v879 = vpack.c.b16 %v828, %v825
        %v880 = vpack.c.b16 %v829, %v826
        %v881 = vpack.c.b16 %v833, %v830
        %v882 = vpack.c.b16 %v834, %v831
        %v883 = vpack.c.b16 %v835, %v832
        %932 = vmatpush.bf16.msra.mxu0 %v857
        %933 = vmatpush.bf16.msra.mxu0 %v854
        %934 = vmatpush.bf16.msra.mxu0 %v851
        %935 = vmatpush.bf16.msra.mxu0 %v848
        %936 = vmatpush.bf16.msra.mxu0 %v845
        %937 = vmatpush.bf16.msra.mxu0 %v842
        %938 = vmatpush.bf16.msra.mxu0 %v839
        %939 = vmatpush.bf16.msra.mxu0 %v836
        %940 = vmatmul.bf16.gmra.mxu0 %v596
        %v941 = vpop.f32.mrf.mxu0
        %v942 = vadd.f32 0.0, %v941
        %v943 = vpop.f32.mrf.mxu0
        %v944 = vadd.f32 0.0, %v943
        %945 = vmatmul.bf16.gmra.mxu0 %v598
        %v946 = vpop.f32.mrf.mxu0
        %v947 = vadd.f32 0.0, %v946
        %v948 = vpop.f32.mrf.mxu0
        %v949 = vadd.f32 0.0, %v948
        %950 = vmatmul.bf16.gmra.mxu0 %v600
        %v951 = vpop.f32.mrf.mxu0
        %v952 = vadd.f32 0.0, %v951
        %v953 = vpop.f32.mrf.mxu0
        %v954 = vadd.f32 0.0, %v953
        %955 = vmatmul.bf16.gmra.mxu0 %v602
        %v956 = vpop.f32.mrf.mxu0
        %v957 = vadd.f32 0.0, %v956
        %v958 = vpop.f32.mrf.mxu0
        %v959 = vadd.f32 0.0, %v958
        %960 = vmatmul.bf16.gmra.mxu0 %v604
        %v961 = vpop.f32.mrf.mxu0
        %v962 = vadd.f32 0.0, %v961
        %v963 = vpop.f32.mrf.mxu0
        %v964 = vadd.f32 0.0, %v963
        %965 = vmatmul.bf16.gmra.mxu0 %v606
        %v966 = vpop.f32.mrf.mxu0
        %v967 = vadd.f32 0.0, %v966
        %v968 = vpop.f32.mrf.mxu0
        %v969 = vadd.f32 0.0, %v968
        %970 = vmatmul.bf16.gmra.mxu0 %v608
        %v971 = vpop.f32.mrf.mxu0
        %v972 = vadd.f32 0.0, %v971
        %v973 = vpop.f32.mrf.mxu0
        %v974 = vadd.f32 0.0, %v973
        %975 = vmatmul.bf16.gmra.mxu0 %v610
        %v976 = vpop.f32.mrf.mxu0
        %v977 = vadd.f32 0.0, %v976
        %v978 = vpop.f32.mrf.mxu0
        %v979 = vadd.f32 0.0, %v978
        %980 = vdwg.mxu0
        %981 = vmatpush.bf16.msra.mxu0 %v881
        %982 = vmatpush.bf16.msra.mxu0 %v878
        %983 = vmatpush.bf16.msra.mxu0 %v875
        %984 = vmatpush.bf16.msra.mxu0 %v872
        %985 = vmatpush.bf16.msra.mxu0 %v869
        %986 = vmatpush.bf16.msra.mxu0 %v866
        %987 = vmatpush.bf16.msra.mxu0 %v863
        %988 = vmatpush.bf16.msra.mxu0 %v860
        %989 = vmatmul.bf16.gmra.mxu0 %v597
        %v990 = vpop.f32.mrf.mxu0
        %v991 = vadd.f32 %v942, %v990
        %v992 = vpop.f32.mrf.mxu0
        %v993 = vadd.f32 %v944, %v992
        %994 = vmatmul.bf16.gmra.mxu0 %v599
        %v995 = vpop.f32.mrf.mxu0
        %v996 = vadd.f32 %v947, %v995
        %v997 = vpop.f32.mrf.mxu0
        %v998 = vadd.f32 %v949, %v997
        %999 = vmatmul.bf16.gmra.mxu0 %v601
        %v1000 = vpop.f32.mrf.mxu0
        %v1001 = vadd.f32 %v952, %v1000
        %v1002 = vpop.f32.mrf.mxu0
        %v1003 = vadd.f32 %v954, %v1002
        %1004 = vmatmul.bf16.gmra.mxu0 %v603
        %v1005 = vpop.f32.mrf.mxu0
        %v1006 = vadd.f32 %v957, %v1005
        %v1007 = vpop.f32.mrf.mxu0
        %v1008 = vadd.f32 %v959, %v1007
        %1009 = vmatmul.bf16.gmra.mxu0 %v605
        %v1010 = vpop.f32.mrf.mxu0
        %v1011 = vadd.f32 %v962, %v1010
        %v1012 = vpop.f32.mrf.mxu0
        %v1013 = vadd.f32 %v964, %v1012
        %1014 = vmatmul.bf16.gmra.mxu0 %v607
        %v1015 = vpop.f32.mrf.mxu0
        %v1016 = vadd.f32 %v967, %v1015
        %v1017 = vpop.f32.mrf.mxu0
        %v1018 = vadd.f32 %v969, %v1017
        %1019 = vmatmul.bf16.gmra.mxu0 %v609
        %v1020 = vpop.f32.mrf.mxu0
        %v1021 = vadd.f32 %v972, %v1020
        %v1022 = vpop.f32.mrf.mxu0
        %v1023 = vadd.f32 %v974, %v1022
        %1024 = vmatmul.bf16.gmra.mxu0 %v611
        %v1025 = vpop.f32.mrf.mxu0
        %v1026 = vadd.f32 %v977, %v1025
        %v1027 = vpop.f32.mrf.mxu0
        %v1028 = vadd.f32 %v979, %v1027
        %1029 = vdwg.mxu0
        %1030 = vmatpush.bf16.msra.mxu0 %v858
        %1031 = vmatpush.bf16.msra.mxu0 %v855
        %1032 = vmatpush.bf16.msra.mxu0 %v852
        %1033 = vmatpush.bf16.msra.mxu0 %v849
        %1034 = vmatpush.bf16.msra.mxu0 %v846
        %1035 = vmatpush.bf16.msra.mxu0 %v843
        %1036 = vmatpush.bf16.msra.mxu0 %v840
        %1037 = vmatpush.bf16.msra.mxu0 %v837
        %1038 = vmatmul.bf16.gmra.mxu0 %v596
        %v1039 = vpop.f32.mrf.mxu0
        %v1040 = vadd.f32 0.0, %v1039
        %v1041 = vpop.f32.mrf.mxu0
        %v1042 = vadd.f32 0.0, %v1041
        %1043 = vmatmul.bf16.gmra.mxu0 %v598
        %v1044 = vpop.f32.mrf.mxu0
        %v1045 = vadd.f32 0.0, %v1044
        %v1046 = vpop.f32.mrf.mxu0
        %v1047 = vadd.f32 0.0, %v1046
        %1048 = vmatmul.bf16.gmra.mxu0 %v600
        %v1049 = vpop.f32.mrf.mxu0
        %v1050 = vadd.f32 0.0, %v1049
        %v1051 = vpop.f32.mrf.mxu0
        %v1052 = vadd.f32 0.0, %v1051
        %1053 = vmatmul.bf16.gmra.mxu0 %v602
        %v1054 = vpop.f32.mrf.mxu0
        %v1055 = vadd.f32 0.0, %v1054
        %v1056 = vpop.f32.mrf.mxu0
        %v1057 = vadd.f32 0.0, %v1056
        %1058 = vmatmul.bf16.gmra.mxu0 %v604
        %v1059 = vpop.f32.mrf.mxu0
        %v1060 = vadd.f32 0.0, %v1059
        %v1061 = vpop.f32.mrf.mxu0
        %v1062 = vadd.f32 0.0, %v1061
        %1063 = vmatmul.bf16.gmra.mxu0 %v606
        %v1064 = vpop.f32.mrf.mxu0
        %v1065 = vadd.f32 0.0, %v1064
        %v1066 = vpop.f32.mrf.mxu0
        %v1067 = vadd.f32 0.0, %v1066
        %1068 = vmatmul.bf16.gmra.mxu0 %v608
        %v1069 = vpop.f32.mrf.mxu0
        %v1070 = vadd.f32 0.0, %v1069
        %v1071 = vpop.f32.mrf.mxu0
        %v1072 = vadd.f32 0.0, %v1071
        %1073 = vmatmul.bf16.gmra.mxu0 %v610
        %v1074 = vpop.f32.mrf.mxu0
        %v1075 = vadd.f32 0.0, %v1074
        %v1076 = vpop.f32.mrf.mxu0
        %v1077 = vadd.f32 0.0, %v1076
        %1078 = vdwg.mxu0
        %1079 = vmatpush.bf16.msra.mxu0 %v882
        %1080 = vmatpush.bf16.msra.mxu0 %v879
        %1081 = vmatpush.bf16.msra.mxu0 %v876
        %1082 = vmatpush.bf16.msra.mxu0 %v873
        %1083 = vmatpush.bf16.msra.mxu0 %v870
        %1084 = vmatpush.bf16.msra.mxu0 %v867
        %1085 = vmatpush.bf16.msra.mxu0 %v864
        %1086 = vmatpush.bf16.msra.mxu0 %v861
        %1087 = vmatmul.bf16.gmra.mxu0 %v597
        %v1088 = vpop.f32.mrf.mxu0
        %v1089 = vadd.f32 %v1040, %v1088
        %v1090 = vpop.f32.mrf.mxu0
        %v1091 = vadd.f32 %v1042, %v1090
        %1092 = vmatmul.bf16.gmra.mxu0 %v599
        %v1093 = vpop.f32.mrf.mxu0
        %v1094 = vadd.f32 %v1045, %v1093
        %v1095 = vpop.f32.mrf.mxu0
        %v1096 = vadd.f32 %v1047, %v1095
        %1097 = vmatmul.bf16.gmra.mxu0 %v601
        %v1098 = vpop.f32.mrf.mxu0
        %v1099 = vadd.f32 %v1050, %v1098
        %v1100 = vpop.f32.mrf.mxu0
        %v1101 = vadd.f32 %v1052, %v1100
        %1102 = vmatmul.bf16.gmra.mxu0 %v603
        %v1103 = vpop.f32.mrf.mxu0
        %v1104 = vadd.f32 %v1055, %v1103
        %v1105 = vpop.f32.mrf.mxu0
        %v1106 = vadd.f32 %v1057, %v1105
        %1107 = vmatmul.bf16.gmra.mxu0 %v605
        %v1108 = vpop.f32.mrf.mxu0
        %v1109 = vadd.f32 %v1060, %v1108
        %v1110 = vpop.f32.mrf.mxu0
        %v1111 = vadd.f32 %v1062, %v1110
        %1112 = vmatmul.bf16.gmra.mxu0 %v607
        %v1113 = vpop.f32.mrf.mxu0
        %v1114 = vadd.f32 %v1065, %v1113
        %v1115 = vpop.f32.mrf.mxu0
        %v1116 = vadd.f32 %v1067, %v1115
        %1117 = vmatmul.bf16.gmra.mxu0 %v609
        %v1118 = vpop.f32.mrf.mxu0
        %v1119 = vadd.f32 %v1070, %v1118
        %v1120 = vpop.f32.mrf.mxu0
        %v1121 = vadd.f32 %v1072, %v1120
        %1122 = vmatmul.bf16.gmra.mxu0 %v611
        %v1123 = vpop.f32.mrf.mxu0
        %v1124 = vadd.f32 %v1075, %v1123
        %v1125 = vpop.f32.mrf.mxu0
        %v1126 = vadd.f32 %v1077, %v1125
        %1127 = vdwg.mxu0
        %1128 = vmatpush.bf16.msra.mxu0 %v859
        %1129 = vmatpush.bf16.msra.mxu0 %v856
        %1130 = vmatpush.bf16.msra.mxu0 %v853
        %1131 = vmatpush.bf16.msra.mxu0 %v850
        %1132 = vmatpush.bf16.msra.mxu0 %v847
        %1133 = vmatpush.bf16.msra.mxu0 %v844
        %1134 = vmatpush.bf16.msra.mxu0 %v841
        %1135 = vmatpush.bf16.msra.mxu0 %v838
        %1136 = vmatmul.bf16.gmra.mxu0 %v596
        %v1137 = vpop.f32.mrf.mxu0
        %v1138 = vadd.f32 0.0, %v1137
        %v1139 = vpop.f32.mrf.mxu0
        %v1140 = vadd.f32 0.0, %v1139
        %1141 = vmatmul.bf16.gmra.mxu0 %v598
        %v1142 = vpop.f32.mrf.mxu0
        %v1143 = vadd.f32 0.0, %v1142
        %v1144 = vpop.f32.mrf.mxu0
        %v1145 = vadd.f32 0.0, %v1144
        %1146 = vmatmul.bf16.gmra.mxu0 %v600
        %v1147 = vpop.f32.mrf.mxu0
        %v1148 = vadd.f32 0.0, %v1147
        %v1149 = vpop.f32.mrf.mxu0
        %v1150 = vadd.f32 0.0, %v1149
        %1151 = vmatmul.bf16.gmra.mxu0 %v602
        %v1152 = vpop.f32.mrf.mxu0
        %v1153 = vadd.f32 0.0, %v1152
        %v1154 = vpop.f32.mrf.mxu0
        %v1155 = vadd.f32 0.0, %v1154
        %1156 = vmatmul.bf16.gmra.mxu0 %v604
        %v1157 = vpop.f32.mrf.mxu0
        %v1158 = vadd.f32 0.0, %v1157
        %v1159 = vpop.f32.mrf.mxu0
        %v1160 = vadd.f32 0.0, %v1159
        %1161 = vmatmul.bf16.gmra.mxu0 %v606
        %v1162 = vpop.f32.mrf.mxu0
        %v1163 = vadd.f32 0.0, %v1162
        %v1164 = vpop.f32.mrf.mxu0
        %v1165 = vadd.f32 0.0, %v1164
        %1166 = vmatmul.bf16.gmra.mxu0 %v608
        %v1167 = vpop.f32.mrf.mxu0
        %v1168 = vadd.f32 0.0, %v1167
        %v1169 = vpop.f32.mrf.mxu0
        %v1170 = vadd.f32 0.0, %v1169
        %1171 = vmatmul.bf16.gmra.mxu0 %v610
        %v1172 = vpop.f32.mrf.mxu0
        %v1173 = vadd.f32 0.0, %v1172
        %v1174 = vpop.f32.mrf.mxu0
        %v1175 = vadd.f32 0.0, %v1174
        %1176 = vdwg.mxu0
        %1177 = vmatpush.bf16.msra.mxu0 %v883
        %1178 = vmatpush.bf16.msra.mxu0 %v880
        %1179 = vmatpush.bf16.msra.mxu0 %v877
        %1180 = vmatpush.bf16.msra.mxu0 %v874
        %1181 = vmatpush.bf16.msra.mxu0 %v871
        %1182 = vmatpush.bf16.msra.mxu0 %v868
        %1183 = vmatpush.bf16.msra.mxu0 %v865
        %1184 = vmatpush.bf16.msra.mxu0 %v862
        %1185 = vmatmul.bf16.gmra.mxu0 %v597
        %v1186 = vpop.f32.mrf.mxu0
        %v1187 = vadd.f32 %v1138, %v1186
        %v1188 = vpop.f32.mrf.mxu0
        %v1189 = vadd.f32 %v1140, %v1188
        %1190 = vmatmul.bf16.gmra.mxu0 %v599
        %v1191 = vpop.f32.mrf.mxu0
        %v1192 = vadd.f32 %v1143, %v1191
        %v1193 = vpop.f32.mrf.mxu0
        %v1194 = vadd.f32 %v1145, %v1193
        %1195 = vmatmul.bf16.gmra.mxu0 %v601
        %v1196 = vpop.f32.mrf.mxu0
        %v1197 = vadd.f32 %v1148, %v1196
        %v1198 = vpop.f32.mrf.mxu0
        %v1199 = vadd.f32 %v1150, %v1198
        %1200 = vmatmul.bf16.gmra.mxu0 %v603
        %v1201 = vpop.f32.mrf.mxu0
        %v1202 = vadd.f32 %v1153, %v1201
        %v1203 = vpop.f32.mrf.mxu0
        %v1204 = vadd.f32 %v1155, %v1203
        %1205 = vmatmul.bf16.gmra.mxu0 %v605
        %v1206 = vpop.f32.mrf.mxu0
        %v1207 = vadd.f32 %v1158, %v1206
        %v1208 = vpop.f32.mrf.mxu0
        %v1209 = vadd.f32 %v1160, %v1208
        %1210 = vmatmul.bf16.gmra.mxu0 %v607
        %v1211 = vpop.f32.mrf.mxu0
        %v1212 = vadd.f32 %v1163, %v1211
        %v1213 = vpop.f32.mrf.mxu0
        %v1214 = vadd.f32 %v1165, %v1213
        %1215 = vmatmul.bf16.gmra.mxu0 %v609
        %v1216 = vpop.f32.mrf.mxu0
        %v1217 = vadd.f32 %v1168, %v1216
        %v1218 = vpop.f32.mrf.mxu0
        %v1219 = vadd.f32 %v1170, %v1218
        %1220 = vmatmul.bf16.gmra.mxu0 %v611
        %v1221 = vpop.f32.mrf.mxu0
        %v1222 = vadd.f32 %v1173, %v1221
        %v1223 = vpop.f32.mrf.mxu0
        %v1224 = vadd.f32 %v1175, %v1223
        %1225 = vdwg.mxu0
        %v1226 = vadd.f32 %v516, %v991
        %v1227 = vadd.f32 %v517, %v1089
        %v1228 = vadd.f32 %v518, %v1187
        %v1229 = vadd.f32 %v519, %v993
        %v1230 = vadd.f32 %v520, %v1091
        %v1231 = vadd.f32 %v521, %v1189
        %v1232 = vadd.f32 %v522, %v996
        %v1233 = vadd.f32 %v523, %v1094
        %v1234 = vadd.f32 %v524, %v1192
        %v1235 = vadd.f32 %v525, %v998
        %v1236 = vadd.f32 %v526, %v1096
        %v1237 = vadd.f32 %v527, %v1194
        %v1238 = vadd.f32 %v528, %v1001
        %v1239 = vadd.f32 %v529, %v1099
        %v1240 = vadd.f32 %v530, %v1197
        %v1241 = vadd.f32 %v531, %v1003
        %v1242 = vadd.f32 %v532, %v1101
        %v1243 = vadd.f32 %v533, %v1199
        %v1244 = vadd.f32 %v534, %v1006
        %v1245 = vadd.f32 %v535, %v1104
        %v1246 = vadd.f32 %v536, %v1202
        %v1247 = vadd.f32 %v537, %v1008
        %v1248 = vadd.f32 %v538, %v1106
        %v1249 = vadd.f32 %v539, %v1204
        %v1250 = vadd.f32 %v540, %v1011
        %v1251 = vadd.f32 %v541, %v1109
        %v1252 = vadd.f32 %v542, %v1207
        %v1253 = vadd.f32 %v543, %v1013
        %v1254 = vadd.f32 %v544, %v1111
        %v1255 = vadd.f32 %v545, %v1209
        %v1256 = vadd.f32 %v546, %v1016
        %v1257 = vadd.f32 %v547, %v1114
        %v1258 = vadd.f32 %v548, %v1212
        %v1259 = vadd.f32 %v549, %v1018
        %v1260 = vadd.f32 %v550, %v1116
        %v1261 = vadd.f32 %v551, %v1214
        %v1262 = vadd.f32 %v552, %v1021
        %v1263 = vadd.f32 %v553, %v1119
        %v1264 = vadd.f32 %v554, %v1217
        %v1265 = vadd.f32 %v555, %v1023
        %v1266 = vadd.f32 %v556, %v1121
        %v1267 = vadd.f32 %v557, %v1219
        %v1268 = vadd.f32 %v558, %v1026
        %v1269 = vadd.f32 %v559, %v1124
        %v1270 = vadd.f32 %v560, %v1222
        %v1271 = vadd.f32 %v561, %v1028
        %v1272 = vadd.f32 %v562, %v1126
        %v1273 = vadd.f32 %v563, %v1224
        %1274 = vst [vmem:[#allocation2] sm:$0xff] %v1226
        %1275 = vst [vmem:[#allocation2 + $0x8] sm:$0xff] %v1227
        %1276 = vst [vmem:[#allocation2 + $0x10] sm:$0xff] %v1228
        %1277 = vst [vmem:[#allocation2 + $0x18] sm:$0xff] %v1229
        %1278 = vst [vmem:[#allocation2 + $0x20] sm:$0xff] %v1230
        %1279 = vst [vmem:[#allocation2 + $0x28] sm:$0xff] %v1231
        %1280 = vst [vmem:[#allocation2 + $0x30] sm:$0xff] %v1232
        %1281 = vst [vmem:[#allocation2 + $0x38] sm:$0xff] %v1233
        %1282 = vst [vmem:[#allocation2 + $0x40] sm:$0xff] %v1234
        %1283 = vst [vmem:[#allocation2 + $0x48] sm:$0xff] %v1235
        %1284 = vst [vmem:[#allocation2 + $0x50] sm:$0xff] %v1236
        %1285 = vst [vmem:[#allocation2 + $0x58] sm:$0xff] %v1237
        %1286 = vst [vmem:[#allocation2 + $0x60] sm:$0xff] %v1238
        %1287 = vst [vmem:[#allocation2 + $0x68] sm:$0xff] %v1239
        %1288 = vst [vmem:[#allocation2 + $0x70] sm:$0xff] %v1240
        %1289 = vst [vmem:[#allocation2 + $0x78] sm:$0xff] %v1241
        %1290 = vst [vmem:[#allocation2 + $0x80] sm:$0xff] %v1242
        %1291 = vst [vmem:[#allocation2 + $0x88] sm:$0xff] %v1243
        %1292 = vst [vmem:[#allocation2 + $0x90] sm:$0xff] %v1244
        %1293 = vst [vmem:[#allocation2 + $0x98] sm:$0xff] %v1245
        %1294 = vst [vmem:[#allocation2 + $0xa0] sm:$0xff] %v1246
        %1295 = vst [vmem:[#allocation2 + $0xa8] sm:$0xff] %v1247
        %1296 = vst [vmem:[#allocation2 + $0xb0] sm:$0xff] %v1248
        %1297 = vst [vmem:[#allocation2 + $0xb8] sm:$0xff] %v1249
        %1298 = vst [vmem:[#allocation2 + $0xc0] sm:$0xff] %v1250
        %1299 = vst [vmem:[#allocation2 + $0xc8] sm:$0xff] %v1251
        %1300 = vst [vmem:[#allocation2 + $0xd0] sm:$0xff] %v1252
        %1301 = vst [vmem:[#allocation2 + $0xd8] sm:$0xff] %v1253
        %1302 = vst [vmem:[#allocation2 + $0xe0] sm:$0xff] %v1254
        %1303 = vst [vmem:[#allocation2 + $0xe8] sm:$0xff] %v1255
        %1304 = vst [vmem:[#allocation2 + $0xf0] sm:$0xff] %v1256
        %1305 = vst [vmem:[#allocation2 + $0xf8] sm:$0xff] %v1257
        %1306 = vst [vmem:[#allocation2 + $0x100] sm:$0xff] %v1258
        %1307 = vst [vmem:[#allocation2 + $0x108] sm:$0xff] %v1259
        %1308 = vst [vmem:[#allocation2 + $0x110] sm:$0xff] %v1260
        %1309 = vst [vmem:[#allocation2 + $0x118] sm:$0xff] %v1261
        %1310 = vst [vmem:[#allocation2 + $0x120] sm:$0xff] %v1262
        %1311 = vst [vmem:[#allocation2 + $0x128] sm:$0xff] %v1263
        %1312 = vst [vmem:[#allocation2 + $0x130] sm:$0xff] %v1264
        %1313 = vst [vmem:[#allocation2 + $0x138] sm:$0xff] %v1265
        %1314 = vst [vmem:[#allocation2 + $0x140] sm:$0xff] %v1266
        %1315 = vst [vmem:[#allocation2 + $0x148] sm:$0xff] %v1267
        %1316 = vst [vmem:[#allocation2 + $0x150] sm:$0xff] %v1268
        %1317 = vst [vmem:[#allocation2 + $0x158] sm:$0xff] %v1269
        %1318 = vst [vmem:[#allocation2 + $0x160] sm:$0xff] %v1270
        %1319 = vst [vmem:[#allocation2 + $0x168] sm:$0xff] %v1271
        %1320 = vst [vmem:[#allocation2 + $0x170] sm:$0xff] %v1272
        %1321 = vst [vmem:[#allocation2 + $0x178] sm:$0xff] %v1273
        %p1322 = scmp.eq.s32.totalorder %s29, 1
        // Predicated region
        $region89: #{tpu_custom_call.1} parent=55 // pred_check
          %p1323 = pneg %p1322
        $region90: #{tpu_custom_call.1} parent=55 // pred_check_branch
          %1325 = sbr.rel (%p1323) target = $region92
        $region91: #{tpu_custom_call.1} parent=55 // pred_region
          %v1326 = vld [vmem:[#allocation2] sm:$0xff]
          %v1327 = vld [vmem:[#allocation2 + $0x8] sm:$0xff]
          %v1328 = vld [vmem:[#allocation2 + $0x10] sm:$0xff]
          %v1329 = vld [vmem:[#allocation2 + $0x18] sm:$0xff]
          %v1330 = vld [vmem:[#allocation2 + $0x20] sm:$0xff]
          %v1331 = vld [vmem:[#allocation2 + $0x28] sm:$0xff]
          %v1332 = vld [vmem:[#allocation2 + $0x30] sm:$0xff]
          %v1333 = vld [vmem:[#allocation2 + $0x38] sm:$0xff]
          %v1334 = vld [vmem:[#allocation2 + $0x40] sm:$0xff]
          %v1335 = vld [vmem:[#allocation2 + $0x48] sm:$0xff]
          %v1336 = vld [vmem:[#allocation2 + $0x50] sm:$0xff]
          %v1337 = vld [vmem:[#allocation2 + $0x58] sm:$0xff]
          %v1338 = vld [vmem:[#allocation2 + $0x60] sm:$0xff]
          %v1339 = vld [vmem:[#allocation2 + $0x68] sm:$0xff]
          %v1340 = vld [vmem:[#allocation2 + $0x70] sm:$0xff]
          %v1341 = vld [vmem:[#allocation2 + $0x78] sm:$0xff]
          %v1342 = vld [vmem:[#allocation2 + $0x80] sm:$0xff]
          %v1343 = vld [vmem:[#allocation2 + $0x88] sm:$0xff]
          %v1344 = vld [vmem:[#allocation2 + $0x90] sm:$0xff]
          %v1345 = vld [vmem:[#allocation2 + $0x98] sm:$0xff]
          %v1346 = vld [vmem:[#allocation2 + $0xa0] sm:$0xff]
          %v1347 = vld [vmem:[#allocation2 + $0xa8] sm:$0xff]
          %v1348 = vld [vmem:[#allocation2 + $0xb0] sm:$0xff]
          %v1349 = vld [vmem:[#allocation2 + $0xb8] sm:$0xff]
          %v1350 = vld [vmem:[#allocation2 + $0xc0] sm:$0xff]
          %v1351 = vld [vmem:[#allocation2 + $0xc8] sm:$0xff]
          %v1352 = vld [vmem:[#allocation2 + $0xd0] sm:$0xff]
          %v1353 = vld [vmem:[#allocation2 + $0xd8] sm:$0xff]
          %v1354 = vld [vmem:[#allocation2 + $0xe0] sm:$0xff]
          %v1355 = vld [vmem:[#allocation2 + $0xe8] sm:$0xff]
          %v1356 = vld [vmem:[#allocation2 + $0xf0] sm:$0xff]
          %v1357 = vld [vmem:[#allocation2 + $0xf8] sm:$0xff]
          %v1358 = vld [vmem:[#allocation2 + $0x100] sm:$0xff]
          %v1359 = vld [vmem:[#allocation2 + $0x108] sm:$0xff]
          %v1360 = vld [vmem:[#allocation2 + $0x110] sm:$0xff]
          %v1361 = vld [vmem:[#allocation2 + $0x118] sm:$0xff]
          %v1362 = vld [vmem:[#allocation2 + $0x120] sm:$0xff]
          %v1363 = vld [vmem:[#allocation2 + $0x128] sm:$0xff]
          %v1364 = vld [vmem:[#allocation2 + $0x130] sm:$0xff]
          %v1365 = vld [vmem:[#allocation2 + $0x138] sm:$0xff]
          %v1366 = vld [vmem:[#allocation2 + $0x140] sm:$0xff]
          %v1367 = vld [vmem:[#allocation2 + $0x148] sm:$0xff]
          %v1368 = vld [vmem:[#allocation2 + $0x150] sm:$0xff]
          %v1369 = vld [vmem:[#allocation2 + $0x158] sm:$0xff]
          %v1370 = vld [vmem:[#allocation2 + $0x160] sm:$0xff]
          %v1371 = vld [vmem:[#allocation2 + $0x168] sm:$0xff]
          %v1372 = vld [vmem:[#allocation2 + $0x170] sm:$0xff]
          %v1373 = vld [vmem:[#allocation2 + $0x178] sm:$0xff]
          %v1374 = vld [vmem:[#allocation8] sm:$0x7]
          %v1376 = vperm.slane %v1374, 0
          %v1377 = vperm.slane %v1374, 1
          %v1378 = vperm.slane %v1374, 2
          %v1382 = vadd.f32 %v1326, %v1376
          %v1383 = vadd.f32 %v1327, %v1377
          %v1384 = vadd.f32 %v1328, %v1378
          %v1385 = vadd.f32 %v1329, %v1376
          %v1386 = vadd.f32 %v1330, %v1377
          %v1387 = vadd.f32 %v1331, %v1378
          %v1388 = vadd.f32 %v1332, %v1376
          %v1389 = vadd.f32 %v1333, %v1377
          %v1390 = vadd.f32 %v1334, %v1378
          %v1391 = vadd.f32 %v1335, %v1376
          %v1392 = vadd.f32 %v1336, %v1377
          %v1393 = vadd.f32 %v1337, %v1378
          %v1394 = vadd.f32 %v1338, %v1376
          %v1395 = vadd.f32 %v1339, %v1377
          %v1396 = vadd.f32 %v1340, %v1378
          %v1397 = vadd.f32 %v1341, %v1376
          %v1398 = vadd.f32 %v1342, %v1377
          %v1399 = vadd.f32 %v1343, %v1378
          %v1400 = vadd.f32 %v1344, %v1376
          %v1401 = vadd.f32 %v1345, %v1377
          %v1402 = vadd.f32 %v1346, %v1378
          %v1403 = vadd.f32 %v1347, %v1376
          %v1404 = vadd.f32 %v1348, %v1377
          %v1405 = vadd.f32 %v1349, %v1378
          %v1406 = vadd.f32 %v1350, %v1376
          %v1407 = vadd.f32 %v1351, %v1377
          %v1408 = vadd.f32 %v1352, %v1378
          %v1409 = vadd.f32 %v1353, %v1376
          %v1410 = vadd.f32 %v1354, %v1377
          %v1411 = vadd.f32 %v1355, %v1378
          %v1412 = vadd.f32 %v1356, %v1376
          %v1413 = vadd.f32 %v1357, %v1377
          %v1414 = vadd.f32 %v1358, %v1378
          %v1415 = vadd.f32 %v1359, %v1376
          %v1416 = vadd.f32 %v1360, %v1377
          %v1417 = vadd.f32 %v1361, %v1378
          %v1418 = vadd.f32 %v1362, %v1376
          %v1419 = vadd.f32 %v1363, %v1377
          %v1420 = vadd.f32 %v1364, %v1378
          %v1421 = vadd.f32 %v1365, %v1376
          %v1422 = vadd.f32 %v1366, %v1377
          %v1423 = vadd.f32 %v1367, %v1378
          %v1424 = vadd.f32 %v1368, %v1376
          %v1425 = vadd.f32 %v1369, %v1377
          %v1426 = vadd.f32 %v1370, %v1378
          %v1427 = vadd.f32 %v1371, %v1376
          %v1428 = vadd.f32 %v1372, %v1377
          %v1429 = vadd.f32 %v1373, %v1378
          %v1430 = vxor.u32 %v1382, 2147483648
          %v1431 = vxor.u32 %v1385, 2147483648
          %v1432 = vxor.u32 %v1388, 2147483648
          %v1433 = vxor.u32 %v1391, 2147483648
          %v1434 = vxor.u32 %v1394, 2147483648
          %v1435 = vxor.u32 %v1397, 2147483648
          %v1436 = vxor.u32 %v1400, 2147483648
          %v1437 = vxor.u32 %v1403, 2147483648
          %v1438 = vxor.u32 %v1406, 2147483648
          %v1439 = vxor.u32 %v1409, 2147483648
          %v1440 = vxor.u32 %v1412, 2147483648
          %v1441 = vxor.u32 %v1415, 2147483648
          %v1442 = vxor.u32 %v1418, 2147483648
          %v1443 = vxor.u32 %v1421, 2147483648
          %v1444 = vxor.u32 %v1424, 2147483648
          %v1445 = vxor.u32 %v1427, 2147483648
          %v1446 = vmul.f32 %v1430, 1.442695
          %v1447 = vpow.pop %v1446
          %v1448 = vmul.f32 %v1431, 1.442695
          %v1449 = vpow.pop %v1448
          %v1450 = vmul.f32 %v1432, 1.442695
          %v1451 = vpow.pop %v1450
          %v1452 = vmul.f32 %v1433, 1.442695
          %v1453 = vpow.pop %v1452
          %v1454 = vmul.f32 %v1434, 1.442695
          %v1455 = vpow.pop %v1454
          %v1456 = vmul.f32 %v1435, 1.442695
          %v1457 = vpow.pop %v1456
          %v1458 = vmul.f32 %v1436, 1.442695
          %v1459 = vpow.pop %v1458
          %v1460 = vmul.f32 %v1437, 1.442695
          %v1461 = vpow.pop %v1460
          %v1462 = vmul.f32 %v1438, 1.442695
          %v1463 = vpow.pop %v1462
          %v1464 = vmul.f32 %v1439, 1.442695
          %v1465 = vpow.pop %v1464
          %v1466 = vmul.f32 %v1440, 1.442695
          %v1467 = vpow.pop %v1466
          %v1468 = vmul.f32 %v1441, 1.442695
          %v1469 = vpow.pop %v1468
          %v1470 = vmul.f32 %v1442, 1.442695
          %v1471 = vpow.pop %v1470
          %v1472 = vmul.f32 %v1443, 1.442695
          %v1473 = vpow.pop %v1472
          %v1474 = vmul.f32 %v1444, 1.442695
          %v1475 = vpow.pop %v1474
          %v1476 = vmul.f32 %v1445, 1.442695
          %v1477 = vpow.pop %v1476
          %v1478 = vadd.f32 %v1447, 1.0
          %v1479 = vadd.f32 %v1449, 1.0
          %v1480 = vadd.f32 %v1451, 1.0
          %v1481 = vadd.f32 %v1453, 1.0
          %v1482 = vadd.f32 %v1455, 1.0
          %v1483 = vadd.f32 %v1457, 1.0
          %v1484 = vadd.f32 %v1459, 1.0
          %v1485 = vadd.f32 %v1461, 1.0
          %v1486 = vadd.f32 %v1463, 1.0
          %v1487 = vadd.f32 %v1465, 1.0
          %v1488 = vadd.f32 %v1467, 1.0
          %v1489 = vadd.f32 %v1469, 1.0
          %v1490 = vadd.f32 %v1471, 1.0
          %v1491 = vadd.f32 %v1473, 1.0
          %v1492 = vadd.f32 %v1475, 1.0
          %v1493 = vadd.f32 %v1477, 1.0
          %v1494 = vrcp.pop %v1478
          %v1495 = vmul.f32 %v1478, %v1494
          %v1496 = vsub.f32 1.0, %v1495
          %v1497 = vmul.f32 %v1494, %v1496
          %v1498 = vadd.f32 %v1494, %v1497
          %vm1499 = vweird.f32 %v1478
          %vm1500 = vweird.f32 %v1494
          %vm1501 = vmor %vm1499, %vm1500
          %v1502 = vsel %vm1501, %v1494, %v1498
          %v1503 = vand.u32 2147483647, %v1478
          %vm1504 = vcmp.eq.f32.partialorder %v1503, 8.507059e+37
          %v1505 = vand.u32 %v1478, 2147483648
          %v1506 = vor.u32 1.1754944e-38, %v1505
          %v1507 = vsel %vm1504, %v1506, %v1502
          %v1508 = vmul.f32 1.0, %v1507
          %v1509 = vrcp.pop %v1479
          %v1510 = vmul.f32 %v1479, %v1509
          %v1511 = vsub.f32 1.0, %v1510
          %v1512 = vmul.f32 %v1509, %v1511
          %v1513 = vadd.f32 %v1509, %v1512
          %vm1514 = vweird.f32 %v1479
          %vm1515 = vweird.f32 %v1509
          %vm1516 = vmor %vm1514, %vm1515
          %v1517 = vsel %vm1516, %v1509, %v1513
          %v1518 = vand.u32 2147483647, %v1479
          %vm1519 = vcmp.eq.f32.partialorder %v1518, 8.507059e+37
          %v1520 = vand.u32 %v1479, 2147483648
          %v1521 = vor.u32 1.1754944e-38, %v1520
          %v1522 = vsel %vm1519, %v1521, %v1517
          %v1523 = vmul.f32 1.0, %v1522
          %v1524 = vrcp.pop %v1480
          %v1525 = vmul.f32 %v1480, %v1524
          %v1526 = vsub.f32 1.0, %v1525
          %v1527 = vmul.f32 %v1524, %v1526
          %v1528 = vadd.f32 %v1524, %v1527
          %vm1529 = vweird.f32 %v1480
          %vm1530 = vweird.f32 %v1524
          %vm1531 = vmor %vm1529, %vm1530
          %v1532 = vsel %vm1531, %v1524, %v1528
          %v1533 = vand.u32 2147483647, %v1480
          %vm1534 = vcmp.eq.f32.partialorder %v1533, 8.507059e+37
          %v1535 = vand.u32 %v1480, 2147483648
          %v1536 = vor.u32 1.1754944e-38, %v1535
          %v1537 = vsel %vm1534, %v1536, %v1532
          %v1538 = vmul.f32 1.0, %v1537
          %v1539 = vrcp.pop %v1481
          %v1540 = vmul.f32 %v1481, %v1539
          %v1541 = vsub.f32 1.0, %v1540
          %v1542 = vmul.f32 %v1539, %v1541
          %v1543 = vadd.f32 %v1539, %v1542
          %vm1544 = vweird.f32 %v1481
          %vm1545 = vweird.f32 %v1539
          %vm1546 = vmor %vm1544, %vm1545
          %v1547 = vsel %vm1546, %v1539, %v1543
          %v1548 = vand.u32 2147483647, %v1481
          %vm1549 = vcmp.eq.f32.partialorder %v1548, 8.507059e+37
          %v1550 = vand.u32 %v1481, 2147483648
          %v1551 = vor.u32 1.1754944e-38, %v1550
          %v1552 = vsel %vm1549, %v1551, %v1547
          %v1553 = vmul.f32 1.0, %v1552
          %v1554 = vrcp.pop %v1482
          %v1555 = vmul.f32 %v1482, %v1554
          %v1556 = vsub.f32 1.0, %v1555
          %v1557 = vmul.f32 %v1554, %v1556
          %v1558 = vadd.f32 %v1554, %v1557
          %vm1559 = vweird.f32 %v1482
          %vm1560 = vweird.f32 %v1554
          %vm1561 = vmor %vm1559, %vm1560
          %v1562 = vsel %vm1561, %v1554, %v1558
          %v1563 = vand.u32 2147483647, %v1482
          %vm1564 = vcmp.eq.f32.partialorder %v1563, 8.507059e+37
          %v1565 = vand.u32 %v1482, 2147483648
          %v1566 = vor.u32 1.1754944e-38, %v1565
          %v1567 = vsel %vm1564, %v1566, %v1562
          %v1568 = vmul.f32 1.0, %v1567
          %v1569 = vrcp.pop %v1483
          %v1570 = vmul.f32 %v1483, %v1569
          %v1571 = vsub.f32 1.0, %v1570
          %v1572 = vmul.f32 %v1569, %v1571
          %v1573 = vadd.f32 %v1569, %v1572
          %vm1574 = vweird.f32 %v1483
          %vm1575 = vweird.f32 %v1569
          %vm1576 = vmor %vm1574, %vm1575
          %v1577 = vsel %vm1576, %v1569, %v1573
          %v1578 = vand.u32 2147483647, %v1483
          %vm1579 = vcmp.eq.f32.partialorder %v1578, 8.507059e+37
          %v1580 = vand.u32 %v1483, 2147483648
          %v1581 = vor.u32 1.1754944e-38, %v1580
          %v1582 = vsel %vm1579, %v1581, %v1577
          %v1583 = vmul.f32 1.0, %v1582
          %v1584 = vrcp.pop %v1484
          %v1585 = vmul.f32 %v1484, %v1584
          %v1586 = vsub.f32 1.0, %v1585
          %v1587 = vmul.f32 %v1584, %v1586
          %v1588 = vadd.f32 %v1584, %v1587
          %vm1589 = vweird.f32 %v1484
          %vm1590 = vweird.f32 %v1584
          %vm1591 = vmor %vm1589, %vm1590
          %v1592 = vsel %vm1591, %v1584, %v1588
          %v1593 = vand.u32 2147483647, %v1484
          %vm1594 = vcmp.eq.f32.partialorder %v1593, 8.507059e+37
          %v1595 = vand.u32 %v1484, 2147483648
          %v1596 = vor.u32 1.1754944e-38, %v1595
          %v1597 = vsel %vm1594, %v1596, %v1592
          %v1598 = vmul.f32 1.0, %v1597
          %v1599 = vrcp.pop %v1485
          %v1600 = vmul.f32 %v1485, %v1599
          %v1601 = vsub.f32 1.0, %v1600
          %v1602 = vmul.f32 %v1599, %v1601
          %v1603 = vadd.f32 %v1599, %v1602
          %vm1604 = vweird.f32 %v1485
          %vm1605 = vweird.f32 %v1599
          %vm1606 = vmor %vm1604, %vm1605
          %v1607 = vsel %vm1606, %v1599, %v1603
          %v1608 = vand.u32 2147483647, %v1485
          %vm1609 = vcmp.eq.f32.partialorder %v1608, 8.507059e+37
          %v1610 = vand.u32 %v1485, 2147483648
          %v1611 = vor.u32 1.1754944e-38, %v1610
          %v1612 = vsel %vm1609, %v1611, %v1607
          %v1613 = vmul.f32 1.0, %v1612
          %v1614 = vrcp.pop %v1486
          %v1615 = vmul.f32 %v1486, %v1614
          %v1616 = vsub.f32 1.0, %v1615
          %v1617 = vmul.f32 %v1614, %v1616
          %v1618 = vadd.f32 %v1614, %v1617
          %vm1619 = vweird.f32 %v1486
          %vm1620 = vweird.f32 %v1614
          %vm1621 = vmor %vm1619, %vm1620
          %v1622 = vsel %vm1621, %v1614, %v1618
          %v1623 = vand.u32 2147483647, %v1486
          %vm1624 = vcmp.eq.f32.partialorder %v1623, 8.507059e+37
          %v1625 = vand.u32 %v1486, 2147483648
          %v1626 = vor.u32 1.1754944e-38, %v1625
          %v1627 = vsel %vm1624, %v1626, %v1622
          %v1628 = vmul.f32 1.0, %v1627
          %v1629 = vrcp.pop %v1487
          %v1630 = vmul.f32 %v1487, %v1629
          %v1631 = vsub.f32 1.0, %v1630
          %v1632 = vmul.f32 %v1629, %v1631
          %v1633 = vadd.f32 %v1629, %v1632
          %vm1634 = vweird.f32 %v1487
          %vm1635 = vweird.f32 %v1629
          %vm1636 = vmor %vm1634, %vm1635
          %v1637 = vsel %vm1636, %v1629, %v1633
          %v1638 = vand.u32 2147483647, %v1487
          %vm1639 = vcmp.eq.f32.partialorder %v1638, 8.507059e+37
          %v1640 = vand.u32 %v1487, 2147483648
          %v1641 = vor.u32 1.1754944e-38, %v1640
          %v1642 = vsel %vm1639, %v1641, %v1637
          %v1643 = vmul.f32 1.0, %v1642
          %v1644 = vrcp.pop %v1488
          %v1645 = vmul.f32 %v1488, %v1644
          %v1646 = vsub.f32 1.0, %v1645
          %v1647 = vmul.f32 %v1644, %v1646
          %v1648 = vadd.f32 %v1644, %v1647
          %vm1649 = vweird.f32 %v1488
          %vm1650 = vweird.f32 %v1644
          %vm1651 = vmor %vm1649, %vm1650
          %v1652 = vsel %vm1651, %v1644, %v1648
          %v1653 = vand.u32 2147483647, %v1488
          %vm1654 = vcmp.eq.f32.partialorder %v1653, 8.507059e+37
          %v1655 = vand.u32 %v1488, 2147483648
          %v1656 = vor.u32 1.1754944e-38, %v1655
          %v1657 = vsel %vm1654, %v1656, %v1652
          %v1658 = vmul.f32 1.0, %v1657
          %v1659 = vrcp.pop %v1489
          %v1660 = vmul.f32 %v1489, %v1659
          %v1661 = vsub.f32 1.0, %v1660
          %v1662 = vmul.f32 %v1659, %v1661
          %v1663 = vadd.f32 %v1659, %v1662
          %vm1664 = vweird.f32 %v1489
          %vm1665 = vweird.f32 %v1659
          %vm1666 = vmor %vm1664, %vm1665
          %v1667 = vsel %vm1666, %v1659, %v1663
          %v1668 = vand.u32 2147483647, %v1489
          %vm1669 = vcmp.eq.f32.partialorder %v1668, 8.507059e+37
          %v1670 = vand.u32 %v1489, 2147483648
          %v1671 = vor.u32 1.1754944e-38, %v1670
          %v1672 = vsel %vm1669, %v1671, %v1667
          %v1673 = vmul.f32 1.0, %v1672
          %v1674 = vrcp.pop %v1490
          %v1675 = vmul.f32 %v1490, %v1674
          %v1676 = vsub.f32 1.0, %v1675
          %v1677 = vmul.f32 %v1674, %v1676
          %v1678 = vadd.f32 %v1674, %v1677
          %vm1679 = vweird.f32 %v1490
          %vm1680 = vweird.f32 %v1674
          %vm1681 = vmor %vm1679, %vm1680
          %v1682 = vsel %vm1681, %v1674, %v1678
          %v1683 = vand.u32 2147483647, %v1490
          %vm1684 = vcmp.eq.f32.partialorder %v1683, 8.507059e+37
          %v1685 = vand.u32 %v1490, 2147483648
          %v1686 = vor.u32 1.1754944e-38, %v1685
          %v1687 = vsel %vm1684, %v1686, %v1682
          %v1688 = vmul.f32 1.0, %v1687
          %v1689 = vrcp.pop %v1491
          %v1690 = vmul.f32 %v1491, %v1689
          %v1691 = vsub.f32 1.0, %v1690
          %v1692 = vmul.f32 %v1689, %v1691
          %v1693 = vadd.f32 %v1689, %v1692
          %vm1694 = vweird.f32 %v1491
          %vm1695 = vweird.f32 %v1689
          %vm1696 = vmor %vm1694, %vm1695
          %v1697 = vsel %vm1696, %v1689, %v1693
          %v1698 = vand.u32 2147483647, %v1491
          %vm1699 = vcmp.eq.f32.partialorder %v1698, 8.507059e+37
          %v1700 = vand.u32 %v1491, 2147483648
          %v1701 = vor.u32 1.1754944e-38, %v1700
          %v1702 = vsel %vm1699, %v1701, %v1697
          %v1703 = vmul.f32 1.0, %v1702
          %v1704 = vrcp.pop %v1492
          %v1705 = vmul.f32 %v1492, %v1704
          %v1706 = vsub.f32 1.0, %v1705
          %v1707 = vmul.f32 %v1704, %v1706
          %v1708 = vadd.f32 %v1704, %v1707
          %vm1709 = vweird.f32 %v1492
          %vm1710 = vweird.f32 %v1704
          %vm1711 = vmor %vm1709, %vm1710
          %v1712 = vsel %vm1711, %v1704, %v1708
          %v1713 = vand.u32 2147483647, %v1492
          %vm1714 = vcmp.eq.f32.partialorder %v1713, 8.507059e+37
          %v1715 = vand.u32 %v1492, 2147483648
          %v1716 = vor.u32 1.1754944e-38, %v1715
          %v1717 = vsel %vm1714, %v1716, %v1712
          %v1718 = vmul.f32 1.0, %v1717
          %v1719 = vrcp.pop %v1493
          %v1720 = vmul.f32 %v1493, %v1719
          %v1721 = vsub.f32 1.0, %v1720
          %v1722 = vmul.f32 %v1719, %v1721
          %v1723 = vadd.f32 %v1719, %v1722
          %vm1724 = vweird.f32 %v1493
          %vm1725 = vweird.f32 %v1719
          %vm1726 = vmor %vm1724, %vm1725
          %v1727 = vsel %vm1726, %v1719, %v1723
          %v1728 = vand.u32 2147483647, %v1493
          %vm1729 = vcmp.eq.f32.partialorder %v1728, 8.507059e+37
          %v1730 = vand.u32 %v1493, 2147483648
          %v1731 = vor.u32 1.1754944e-38, %v1730
          %v1732 = vsel %vm1729, %v1731, %v1727
          %v1733 = vmul.f32 1.0, %v1732
          %v1734 = vtanh.pop %v1383
          %v1735 = vtanh.pop %v1386
          %v1736 = vtanh.pop %v1389
          %v1737 = vtanh.pop %v1392
          %v1738 = vtanh.pop %v1395
          %v1739 = vtanh.pop %v1398
          %v1740 = vtanh.pop %v1401
          %v1741 = vtanh.pop %v1404
          %v1742 = vtanh.pop %v1407
          %v1743 = vtanh.pop %v1410
          %v1744 = vtanh.pop %v1413
          %v1745 = vtanh.pop %v1416
          %v1746 = vtanh.pop %v1419
          %v1747 = vtanh.pop %v1422
          %v1748 = vtanh.pop %v1425
          %v1749 = vtanh.pop %v1428
          %v1750 = vxor.u32 %v1384, 2147483648
          %v1751 = vxor.u32 %v1387, 2147483648
          %v1752 = vxor.u32 %v1390, 2147483648
          %v1753 = vxor.u32 %v1393, 2147483648
          %v1754 = vxor.u32 %v1396, 2147483648
          %v1755 = vxor.u32 %v1399, 2147483648
          %v1756 = vxor.u32 %v1402, 2147483648
          %v1757 = vxor.u32 %v1405, 2147483648
          %v1758 = vxor.u32 %v1408, 2147483648
          %v1759 = vxor.u32 %v1411, 2147483648
          %v1760 = vxor.u32 %v1414, 2147483648
          %v1761 = vxor.u32 %v1417, 2147483648
          %v1762 = vxor.u32 %v1420, 2147483648
          %v1763 = vxor.u32 %v1423, 2147483648
          %v1764 = vxor.u32 %v1426, 2147483648
          %v1765 = vxor.u32 %v1429, 2147483648
          %v1766 = vmul.f32 %v1750, 1.442695
          %v1767 = vpow.pop %v1766
          %v1768 = vmul.f32 %v1751, 1.442695
          %v1769 = vpow.pop %v1768
          %v1770 = vmul.f32 %v1752, 1.442695
          %v1771 = vpow.pop %v1770
          %v1772 = vmul.f32 %v1753, 1.442695
          %v1773 = vpow.pop %v1772
          %v1774 = vmul.f32 %v1754, 1.442695
          %v1775 = vpow.pop %v1774
          %v1776 = vmul.f32 %v1755, 1.442695
          %v1777 = vpow.pop %v1776
          %v1778 = vmul.f32 %v1756, 1.442695
          %v1779 = vpow.pop %v1778
          %v1780 = vmul.f32 %v1757, 1.442695
          %v1781 = vpow.pop %v1780
          %v1782 = vmul.f32 %v1758, 1.442695
          %v1783 = vpow.pop %v1782
          %v1784 = vmul.f32 %v1759, 1.442695
          %v1785 = vpow.pop %v1784
          %v1786 = vmul.f32 %v1760, 1.442695
          %v1787 = vpow.pop %v1786
          %v1788 = vmul.f32 %v1761, 1.442695
          %v1789 = vpow.pop %v1788
          %v1790 = vmul.f32 %v1762, 1.442695
          %v1791 = vpow.pop %v1790
          %v1792 = vmul.f32 %v1763, 1.442695
          %v1793 = vpow.pop %v1792
          %v1794 = vmul.f32 %v1764, 1.442695
          %v1795 = vpow.pop %v1794
          %v1796 = vmul.f32 %v1765, 1.442695
          %v1797 = vpow.pop %v1796
          %v1798 = vadd.f32 %v1767, 1.0
          %v1799 = vadd.f32 %v1769, 1.0
          %v1800 = vadd.f32 %v1771, 1.0
          %v1801 = vadd.f32 %v1773, 1.0
          %v1802 = vadd.f32 %v1775, 1.0
          %v1803 = vadd.f32 %v1777, 1.0
          %v1804 = vadd.f32 %v1779, 1.0
          %v1805 = vadd.f32 %v1781, 1.0
          %v1806 = vadd.f32 %v1783, 1.0
          %v1807 = vadd.f32 %v1785, 1.0
          %v1808 = vadd.f32 %v1787, 1.0
          %v1809 = vadd.f32 %v1789, 1.0
          %v1810 = vadd.f32 %v1791, 1.0
          %v1811 = vadd.f32 %v1793, 1.0
          %v1812 = vadd.f32 %v1795, 1.0
          %v1813 = vadd.f32 %v1797, 1.0
          %v1814 = vrcp.pop %v1798
          %v1815 = vmul.f32 %v1798, %v1814
          %v1816 = vsub.f32 1.0, %v1815
          %v1817 = vmul.f32 %v1814, %v1816
          %v1818 = vadd.f32 %v1814, %v1817
          %vm1819 = vweird.f32 %v1798
          %vm1820 = vweird.f32 %v1814
          %vm1821 = vmor %vm1819, %vm1820
          %v1822 = vsel %vm1821, %v1814, %v1818
          %v1823 = vand.u32 2147483647, %v1798
          %vm1824 = vcmp.eq.f32.partialorder %v1823, 8.507059e+37
          %v1825 = vand.u32 %v1798, 2147483648
          %v1826 = vor.u32 1.1754944e-38, %v1825
          %v1827 = vsel %vm1824, %v1826, %v1822
          %v1828 = vmul.f32 1.0, %v1827
          %v1829 = vrcp.pop %v1799
          %v1830 = vmul.f32 %v1799, %v1829
          %v1831 = vsub.f32 1.0, %v1830
          %v1832 = vmul.f32 %v1829, %v1831
          %v1833 = vadd.f32 %v1829, %v1832
          %vm1834 = vweird.f32 %v1799
          %vm1835 = vweird.f32 %v1829
          %vm1836 = vmor %vm1834, %vm1835
          %v1837 = vsel %vm1836, %v1829, %v1833
          %v1838 = vand.u32 2147483647, %v1799
          %vm1839 = vcmp.eq.f32.partialorder %v1838, 8.507059e+37
          %v1840 = vand.u32 %v1799, 2147483648
          %v1841 = vor.u32 1.1754944e-38, %v1840
          %v1842 = vsel %vm1839, %v1841, %v1837
          %v1843 = vmul.f32 1.0, %v1842
          %v1844 = vrcp.pop %v1800
          %v1845 = vmul.f32 %v1800, %v1844
          %v1846 = vsub.f32 1.0, %v1845
          %v1847 = vmul.f32 %v1844, %v1846
          %v1848 = vadd.f32 %v1844, %v1847
          %vm1849 = vweird.f32 %v1800
          %vm1850 = vweird.f32 %v1844
          %vm1851 = vmor %vm1849, %vm1850
          %v1852 = vsel %vm1851, %v1844, %v1848
          %v1853 = vand.u32 2147483647, %v1800
          %vm1854 = vcmp.eq.f32.partialorder %v1853, 8.507059e+37
          %v1855 = vand.u32 %v1800, 2147483648
          %v1856 = vor.u32 1.1754944e-38, %v1855
          %v1857 = vsel %vm1854, %v1856, %v1852
          %v1858 = vmul.f32 1.0, %v1857
          %v1859 = vrcp.pop %v1801
          %v1860 = vmul.f32 %v1801, %v1859
          %v1861 = vsub.f32 1.0, %v1860
          %v1862 = vmul.f32 %v1859, %v1861
          %v1863 = vadd.f32 %v1859, %v1862
          %vm1864 = vweird.f32 %v1801
          %vm1865 = vweird.f32 %v1859
          %vm1866 = vmor %vm1864, %vm1865
          %v1867 = vsel %vm1866, %v1859, %v1863
          %v1868 = vand.u32 2147483647, %v1801
          %vm1869 = vcmp.eq.f32.partialorder %v1868, 8.507059e+37
          %v1870 = vand.u32 %v1801, 2147483648
          %v1871 = vor.u32 1.1754944e-38, %v1870
          %v1872 = vsel %vm1869, %v1871, %v1867
          %v1873 = vmul.f32 1.0, %v1872
          %v1874 = vrcp.pop %v1802
          %v1875 = vmul.f32 %v1802, %v1874
          %v1876 = vsub.f32 1.0, %v1875
          %v1877 = vmul.f32 %v1874, %v1876
          %v1878 = vadd.f32 %v1874, %v1877
          %vm1879 = vweird.f32 %v1802
          %vm1880 = vweird.f32 %v1874
          %vm1881 = vmor %vm1879, %vm1880
          %v1882 = vsel %vm1881, %v1874, %v1878
          %v1883 = vand.u32 2147483647, %v1802
          %vm1884 = vcmp.eq.f32.partialorder %v1883, 8.507059e+37
          %v1885 = vand.u32 %v1802, 2147483648
          %v1886 = vor.u32 1.1754944e-38, %v1885
          %v1887 = vsel %vm1884, %v1886, %v1882
          %v1888 = vmul.f32 1.0, %v1887
          %v1889 = vrcp.pop %v1803
          %v1890 = vmul.f32 %v1803, %v1889
          %v1891 = vsub.f32 1.0, %v1890
          %v1892 = vmul.f32 %v1889, %v1891
          %v1893 = vadd.f32 %v1889, %v1892
          %vm1894 = vweird.f32 %v1803
          %vm1895 = vweird.f32 %v1889
          %vm1896 = vmor %vm1894, %vm1895
          %v1897 = vsel %vm1896, %v1889, %v1893
          %v1898 = vand.u32 2147483647, %v1803
          %vm1899 = vcmp.eq.f32.partialorder %v1898, 8.507059e+37
          %v1900 = vand.u32 %v1803, 2147483648
          %v1901 = vor.u32 1.1754944e-38, %v1900
          %v1902 = vsel %vm1899, %v1901, %v1897
          %v1903 = vmul.f32 1.0, %v1902
          %v1904 = vrcp.pop %v1804
          %v1905 = vmul.f32 %v1804, %v1904
          %v1906 = vsub.f32 1.0, %v1905
          %v1907 = vmul.f32 %v1904, %v1906
          %v1908 = vadd.f32 %v1904, %v1907
          %vm1909 = vweird.f32 %v1804
          %vm1910 = vweird.f32 %v1904
          %vm1911 = vmor %vm1909, %vm1910
          %v1912 = vsel %vm1911, %v1904, %v1908
          %v1913 = vand.u32 2147483647, %v1804
          %vm1914 = vcmp.eq.f32.partialorder %v1913, 8.507059e+37
          %v1915 = vand.u32 %v1804, 2147483648
          %v1916 = vor.u32 1.1754944e-38, %v1915
          %v1917 = vsel %vm1914, %v1916, %v1912
          %v1918 = vmul.f32 1.0, %v1917
          %v1919 = vrcp.pop %v1805
          %v1920 = vmul.f32 %v1805, %v1919
          %v1921 = vsub.f32 1.0, %v1920
          %v1922 = vmul.f32 %v1919, %v1921
          %v1923 = vadd.f32 %v1919, %v1922
          %vm1924 = vweird.f32 %v1805
          %vm1925 = vweird.f32 %v1919
          %vm1926 = vmor %vm1924, %vm1925
          %v1927 = vsel %vm1926, %v1919, %v1923
          %v1928 = vand.u32 2147483647, %v1805
          %vm1929 = vcmp.eq.f32.partialorder %v1928, 8.507059e+37
          %v1930 = vand.u32 %v1805, 2147483648
          %v1931 = vor.u32 1.1754944e-38, %v1930
          %v1932 = vsel %vm1929, %v1931, %v1927
          %v1933 = vmul.f32 1.0, %v1932
          %v1934 = vrcp.pop %v1806
          %v1935 = vmul.f32 %v1806, %v1934
          %v1936 = vsub.f32 1.0, %v1935
          %v1937 = vmul.f32 %v1934, %v1936
          %v1938 = vadd.f32 %v1934, %v1937
          %vm1939 = vweird.f32 %v1806
          %vm1940 = vweird.f32 %v1934
          %vm1941 = vmor %vm1939, %vm1940
          %v1942 = vsel %vm1941, %v1934, %v1938
          %v1943 = vand.u32 2147483647, %v1806
          %vm1944 = vcmp.eq.f32.partialorder %v1943, 8.507059e+37
          %v1945 = vand.u32 %v1806, 2147483648
          %v1946 = vor.u32 1.1754944e-38, %v1945
          %v1947 = vsel %vm1944, %v1946, %v1942
          %v1948 = vmul.f32 1.0, %v1947
          %v1949 = vrcp.pop %v1807
          %v1950 = vmul.f32 %v1807, %v1949
          %v1951 = vsub.f32 1.0, %v1950
          %v1952 = vmul.f32 %v1949, %v1951
          %v1953 = vadd.f32 %v1949, %v1952
          %vm1954 = vweird.f32 %v1807
          %vm1955 = vweird.f32 %v1949
          %vm1956 = vmor %vm1954, %vm1955
          %v1957 = vsel %vm1956, %v1949, %v1953
          %v1958 = vand.u32 2147483647, %v1807
          %vm1959 = vcmp.eq.f32.partialorder %v1958, 8.507059e+37
          %v1960 = vand.u32 %v1807, 2147483648
          %v1961 = vor.u32 1.1754944e-38, %v1960
          %v1962 = vsel %vm1959, %v1961, %v1957
          %v1963 = vmul.f32 1.0, %v1962
          %v1964 = vrcp.pop %v1808
          %v1965 = vmul.f32 %v1808, %v1964
          %v1966 = vsub.f32 1.0, %v1965
          %v1967 = vmul.f32 %v1964, %v1966
          %v1968 = vadd.f32 %v1964, %v1967
          %vm1969 = vweird.f32 %v1808
          %vm1970 = vweird.f32 %v1964
          %vm1971 = vmor %vm1969, %vm1970
          %v1972 = vsel %vm1971, %v1964, %v1968
          %v1973 = vand.u32 2147483647, %v1808
          %vm1974 = vcmp.eq.f32.partialorder %v1973, 8.507059e+37
          %v1975 = vand.u32 %v1808, 2147483648
          %v1976 = vor.u32 1.1754944e-38, %v1975
          %v1977 = vsel %vm1974, %v1976, %v1972
          %v1978 = vmul.f32 1.0, %v1977
          %v1979 = vrcp.pop %v1809
          %v1980 = vmul.f32 %v1809, %v1979
          %v1981 = vsub.f32 1.0, %v1980
          %v1982 = vmul.f32 %v1979, %v1981
          %v1983 = vadd.f32 %v1979, %v1982
          %vm1984 = vweird.f32 %v1809
          %vm1985 = vweird.f32 %v1979
          %vm1986 = vmor %vm1984, %vm1985
          %v1987 = vsel %vm1986, %v1979, %v1983
          %v1988 = vand.u32 2147483647, %v1809
          %vm1989 = vcmp.eq.f32.partialorder %v1988, 8.507059e+37
          %v1990 = vand.u32 %v1809, 2147483648
          %v1991 = vor.u32 1.1754944e-38, %v1990
          %v1992 = vsel %vm1989, %v1991, %v1987
          %v1993 = vmul.f32 1.0, %v1992
          %v1994 = vrcp.pop %v1810
          %v1995 = vmul.f32 %v1810, %v1994
          %v1996 = vsub.f32 1.0, %v1995
          %v1997 = vmul.f32 %v1994, %v1996
          %v1998 = vadd.f32 %v1994, %v1997
          %vm1999 = vweird.f32 %v1810
          %vm2000 = vweird.f32 %v1994
          %vm2001 = vmor %vm1999, %vm2000
          %v2002 = vsel %vm2001, %v1994, %v1998
          %v2003 = vand.u32 2147483647, %v1810
          %vm2004 = vcmp.eq.f32.partialorder %v2003, 8.507059e+37
          %v2005 = vand.u32 %v1810, 2147483648
          %v2006 = vor.u32 1.1754944e-38, %v2005
          %v2007 = vsel %vm2004, %v2006, %v2002
          %v2008 = vmul.f32 1.0, %v2007
          %v2009 = vrcp.pop %v1811
          %v2010 = vmul.f32 %v1811, %v2009
          %v2011 = vsub.f32 1.0, %v2010
          %v2012 = vmul.f32 %v2009, %v2011
          %v2013 = vadd.f32 %v2009, %v2012
          %vm2014 = vweird.f32 %v1811
          %vm2015 = vweird.f32 %v2009
          %vm2016 = vmor %vm2014, %vm2015
          %v2017 = vsel %vm2016, %v2009, %v2013
          %v2018 = vand.u32 2147483647, %v1811
          %vm2019 = vcmp.eq.f32.partialorder %v2018, 8.507059e+37
          %v2020 = vand.u32 %v1811, 2147483648
          %v2021 = vor.u32 1.1754944e-38, %v2020
          %v2022 = vsel %vm2019, %v2021, %v2017
          %v2023 = vmul.f32 1.0, %v2022
          %v2024 = vrcp.pop %v1812
          %v2025 = vmul.f32 %v1812, %v2024
          %v2026 = vsub.f32 1.0, %v2025
          %v2027 = vmul.f32 %v2024, %v2026
          %v2028 = vadd.f32 %v2024, %v2027
          %vm2029 = vweird.f32 %v1812
          %vm2030 = vweird.f32 %v2024
          %vm2031 = vmor %vm2029, %vm2030
          %v2032 = vsel %vm2031, %v2024, %v2028
          %v2033 = vand.u32 2147483647, %v1812
          %vm2034 = vcmp.eq.f32.partialorder %v2033, 8.507059e+37
          %v2035 = vand.u32 %v1812, 2147483648
          %v2036 = vor.u32 1.1754944e-38, %v2035
          %v2037 = vsel %vm2034, %v2036, %v2032
          %v2038 = vmul.f32 1.0, %v2037
          %v2039 = vrcp.pop %v1813
          %v2040 = vmul.f32 %v1813, %v2039
          %v2041 = vsub.f32 1.0, %v2040
          %v2042 = vmul.f32 %v2039, %v2041
          %v2043 = vadd.f32 %v2039, %v2042
          %vm2044 = vweird.f32 %v1813
          %vm2045 = vweird.f32 %v2039
          %vm2046 = vmor %vm2044, %vm2045
          %v2047 = vsel %vm2046, %v2039, %v2043
          %v2048 = vand.u32 2147483647, %v1813
          %vm2049 = vcmp.eq.f32.partialorder %v2048, 8.507059e+37
          %v2050 = vand.u32 %v1813, 2147483648
          %v2051 = vor.u32 1.1754944e-38, %v2050
          %v2052 = vsel %vm2049, %v2051, %v2047
          %v2053 = vmul.f32 1.0, %v2052
          %v2054 = vmul.f32 %v1508, %v1734
          %v2055 = vmul.f32 %v1523, %v1735
          %v2056 = vmul.f32 %v1538, %v1736
          %v2057 = vmul.f32 %v1553, %v1737
          %v2058 = vmul.f32 %v1568, %v1738
          %v2059 = vmul.f32 %v1583, %v1739
          %v2060 = vmul.f32 %v1598, %v1740
          %v2061 = vmul.f32 %v1613, %v1741
          %v2062 = vmul.f32 %v1628, %v1742
          %v2063 = vmul.f32 %v1643, %v1743
          %v2064 = vmul.f32 %v1658, %v1744
          %v2065 = vmul.f32 %v1673, %v1745
          %v2066 = vmul.f32 %v1688, %v1746
          %v2067 = vmul.f32 %v1703, %v1747
          %v2068 = vmul.f32 %v1718, %v1748
          %v2069 = vmul.f32 %v1733, %v1749
          %v2070 = vtanh.pop %v2054
          %v2071 = vtanh.pop %v2055
          %v2072 = vtanh.pop %v2056
          %v2073 = vtanh.pop %v2057
          %v2074 = vtanh.pop %v2058
          %v2075 = vtanh.pop %v2059
          %v2076 = vtanh.pop %v2060
          %v2077 = vtanh.pop %v2061
          %v2078 = vtanh.pop %v2062
          %v2079 = vtanh.pop %v2063
          %v2080 = vtanh.pop %v2064
          %v2081 = vtanh.pop %v2065
          %v2082 = vtanh.pop %v2066
          %v2083 = vtanh.pop %v2067
          %v2084 = vtanh.pop %v2068
          %v2085 = vtanh.pop %v2069
          %v2086 = vmul.f32 %v1828, %v2070
          %v2087 = vmul.f32 %v1843, %v2071
          %v2088 = vmul.f32 %v1858, %v2072
          %v2089 = vmul.f32 %v1873, %v2073
          %v2090 = vmul.f32 %v1888, %v2074
          %v2091 = vmul.f32 %v1903, %v2075
          %v2092 = vmul.f32 %v1918, %v2076
          %v2093 = vmul.f32 %v1933, %v2077
          %v2094 = vmul.f32 %v1948, %v2078
          %v2095 = vmul.f32 %v1963, %v2079
          %v2096 = vmul.f32 %v1978, %v2080
          %v2097 = vmul.f32 %v1993, %v2081
          %v2098 = vmul.f32 %v2008, %v2082
          %v2099 = vmul.f32 %v2023, %v2083
          %v2100 = vmul.f32 %v2038, %v2084
          %v2101 = vmul.f32 %v2053, %v2085
          %v2102 = vpack.c.bf16 %v2087, %v2086
          %v2103 = vpack.c.bf16 %v2089, %v2088
          %v2104 = vpack.c.bf16 %v2091, %v2090
          %v2105 = vpack.c.bf16 %v2093, %v2092
          %v2106 = vpack.c.bf16 %v2095, %v2094
          %v2107 = vpack.c.bf16 %v2097, %v2096
          %v2108 = vpack.c.bf16 %v2099, %v2098
          %v2109 = vpack.c.bf16 %v2101, %v2100
          %v2110 = vld [vmem:[#allocation9] sm:$0xff]
          %v2111 = vld [vmem:[#allocation9 + $0x8] sm:$0xf]
          %v2112 = vld [vmem:[#allocation9 + $0xc] sm:$0xff]
          %v2113 = vld [vmem:[#allocation9 + $0x14] sm:$0xf]
          %v2114 = vld [vmem:[#allocation9 + $0x18] sm:$0xff]
          %v2115 = vld [vmem:[#allocation9 + $0x20] sm:$0xf]
          %v2116 = vld [vmem:[#allocation9 + $0x24] sm:$0xff]
          %v2117 = vld [vmem:[#allocation9 + $0x2c] sm:$0xf]
          %v2118 = vld [vmem:[#allocation9 + $0x30] sm:$0xff]
          %v2119 = vld [vmem:[#allocation9 + $0x38] sm:$0xf]
          %v2120 = vld [vmem:[#allocation9 + $0x3c] sm:$0xff]
          %v2121 = vld [vmem:[#allocation9 + $0x44] sm:$0xf]
          %v2122 = vld [vmem:[#allocation9 + $0x48] sm:$0xff]
          %v2123 = vld [vmem:[#allocation9 + $0x50] sm:$0xf]
          %v2124 = vld [vmem:[#allocation9 + $0x54] sm:$0xff]
          %v2125 = vld [vmem:[#allocation9 + $0x5c] sm:$0xf]
          %v2126 = vld [vmem:[#allocation9 + $0x60] sm:$0xff]
          %v2127 = vld [vmem:[#allocation9 + $0x68] sm:$0xf]
          %v2128 = vld [vmem:[#allocation9 + $0x6c] sm:$0xff]
          %v2129 = vld [vmem:[#allocation9 + $0x74] sm:$0xf]
          %v2130 = vld [vmem:[#allocation9 + $0x78] sm:$0xff]
          %v2131 = vld [vmem:[#allocation9 + $0x80] sm:$0xf]
          %v2132 = vld [vmem:[#allocation9 + $0x84] sm:$0xff]
          %v2133 = vld [vmem:[#allocation9 + $0x8c] sm:$0xf]
          %v2134 = vld [vmem:[#allocation9 + $0x90] sm:$0xff]
          %v2135 = vld [vmem:[#allocation9 + $0x98] sm:$0xf]
          %v2136 = vld [vmem:[#allocation9 + $0x9c] sm:$0xff]
          %v2137 = vld [vmem:[#allocation9 + $0xa4] sm:$0xf]
          %v2138 = vld [vmem:[#allocation9 + $0xa8] sm:$0xff]
          %v2139 = vld [vmem:[#allocation9 + $0xb0] sm:$0xf]
          %v2140 = vld [vmem:[#allocation9 + $0xb4] sm:$0xff]
          %v2141 = vld [vmem:[#allocation9 + $0xbc] sm:$0xf]
          %v2142 = vld [vmem:[%s4] sm:$0x7]
          %v2144 = vperm.slane %v2142, 0
          %v2145 = vperm.slane %v2142, 1
          %v2146 = vperm.slane %v2142, 2
          %v2182 = vunpack.c.l.b16 %v2110
          %v2183 = vunpack.c.h.b16 %v2110
          %v2184 = vunpack.c.l.b16 %v2111
          %v2185 = vunpack.c.l.b16 %v2112
          %v2186 = vunpack.c.h.b16 %v2112
          %v2187 = vunpack.c.l.b16 %v2113
          %v2188 = vunpack.c.l.b16 %v2114
          %v2189 = vunpack.c.h.b16 %v2114
          %v2190 = vunpack.c.l.b16 %v2115
          %v2191 = vunpack.c.l.b16 %v2116
          %v2192 = vunpack.c.h.b16 %v2116
          %v2193 = vunpack.c.l.b16 %v2117
          %v2194 = vunpack.c.l.b16 %v2118
          %v2195 = vunpack.c.h.b16 %v2118
          %v2196 = vunpack.c.l.b16 %v2119
          %v2197 = vunpack.c.l.b16 %v2120
          %v2198 = vunpack.c.h.b16 %v2120
          %v2199 = vunpack.c.l.b16 %v2121
          %v2200 = vunpack.c.l.b16 %v2122
          %v2201 = vunpack.c.h.b16 %v2122
          %v2202 = vunpack.c.l.b16 %v2123
          %v2203 = vunpack.c.l.b16 %v2124
          %v2204 = vunpack.c.h.b16 %v2124
          %v2205 = vunpack.c.l.b16 %v2125
          %v2206 = vunpack.c.l.b16 %v2126
          %v2207 = vunpack.c.h.b16 %v2126
          %v2208 = vunpack.c.l.b16 %v2127
          %v2209 = vunpack.c.l.b16 %v2128
          %v2210 = vunpack.c.h.b16 %v2128
          %v2211 = vunpack.c.l.b16 %v2129
          %v2212 = vunpack.c.l.b16 %v2130
          %v2213 = vunpack.c.h.b16 %v2130
          %v2214 = vunpack.c.l.b16 %v2131
          %v2215 = vunpack.c.l.b16 %v2132
          %v2216 = vunpack.c.h.b16 %v2132
          %v2217 = vunpack.c.l.b16 %v2133
          %v2218 = vunpack.c.l.b16 %v2134
          %v2219 = vunpack.c.h.b16 %v2134
          %v2220 = vunpack.c.l.b16 %v2135
          %v2221 = vunpack.c.l.b16 %v2136
          %v2222 = vunpack.c.h.b16 %v2136
          %v2223 = vunpack.c.l.b16 %v2137
          %v2224 = vunpack.c.l.b16 %v2138
          %v2225 = vunpack.c.h.b16 %v2138
          %v2226 = vunpack.c.l.b16 %v2139
          %v2227 = vunpack.c.l.b16 %v2140
          %v2228 = vunpack.c.h.b16 %v2140
          %v2229 = vunpack.c.l.b16 %v2141
          %v2230 = vpack.c.b16 %v2185, %v2182
          %v2231 = vpack.c.b16 %v2186, %v2183
          %v2232 = vpack.c.b16 %v2187, %v2184
          %v2233 = vpack.c.b16 %v2191, %v2188
          %v2234 = vpack.c.b16 %v2192, %v2189
          %v2235 = vpack.c.b16 %v2193, %v2190
          %v2236 = vpack.c.b16 %v2197, %v2194
          %v2237 = vpack.c.b16 %v2198, %v2195
          %v2238 = vpack.c.b16 %v2199, %v2196
          %v2239 = vpack.c.b16 %v2203, %v2200
          %v2240 = vpack.c.b16 %v2204, %v2201
          %v2241 = vpack.c.b16 %v2205, %v2202
          %v2242 = vpack.c.b16 %v2209, %v2206
          %v2243 = vpack.c.b16 %v2210, %v2207
          %v2244 = vpack.c.b16 %v2211, %v2208
          %v2245 = vpack.c.b16 %v2215, %v2212
          %v2246 = vpack.c.b16 %v2216, %v2213
          %v2247 = vpack.c.b16 %v2217, %v2214
          %v2248 = vpack.c.b16 %v2221, %v2218
          %v2249 = vpack.c.b16 %v2222, %v2219
          %v2250 = vpack.c.b16 %v2223, %v2220
          %v2251 = vpack.c.b16 %v2227, %v2224
          %v2252 = vpack.c.b16 %v2228, %v2225
          %v2253 = vpack.c.b16 %v2229, %v2226
          %2278 = vmatpush.bf16.msra.mxu0 %v2251
          %2279 = vmatpush.bf16.msra.mxu0 %v2248
          %2280 = vmatpush.bf16.msra.mxu0 %v2245
          %2281 = vmatpush.bf16.msra.mxu0 %v2242
          %2282 = vmatpush.bf16.msra.mxu0 %v2239
          %2283 = vmatpush.bf16.msra.mxu0 %v2236
          %2284 = vmatpush.bf16.msra.mxu0 %v2233
          %2285 = vmatpush.bf16.msra.mxu0 %v2230
          %2286 = vmatmul.bf16.gmra.mxu0 %v2102
          %v2287 = vpop.f32.mrf.mxu0
          %v2288 = vadd.f32 %v2144, %v2287
          %v2289 = vpop.f32.mrf.mxu0
          %v2290 = vadd.f32 %v2144, %v2289
          %2291 = vmatmul.bf16.gmra.mxu0 %v2103
          %v2292 = vpop.f32.mrf.mxu0
          %v2293 = vadd.f32 %v2144, %v2292
          %v2294 = vpop.f32.mrf.mxu0
          %v2295 = vadd.f32 %v2144, %v2294
          %2296 = vmatmul.bf16.gmra.mxu0 %v2104
          %v2297 = vpop.f32.mrf.mxu0
          %v2298 = vadd.f32 %v2144, %v2297
          %v2299 = vpop.f32.mrf.mxu0
          %v2300 = vadd.f32 %v2144, %v2299
          %2301 = vmatmul.bf16.gmra.mxu0 %v2105
          %v2302 = vpop.f32.mrf.mxu0
          %v2303 = vadd.f32 %v2144, %v2302
          %v2304 = vpop.f32.mrf.mxu0
          %v2305 = vadd.f32 %v2144, %v2304
          %2306 = vmatmul.bf16.gmra.mxu0 %v2106
          %v2307 = vpop.f32.mrf.mxu0
          %v2308 = vadd.f32 %v2144, %v2307
          %v2309 = vpop.f32.mrf.mxu0
          %v2310 = vadd.f32 %v2144, %v2309
          %2311 = vmatmul.bf16.gmra.mxu0 %v2107
          %v2312 = vpop.f32.mrf.mxu0
          %v2313 = vadd.f32 %v2144, %v2312
          %v2314 = vpop.f32.mrf.mxu0
          %v2315 = vadd.f32 %v2144, %v2314
          %2316 = vmatmul.bf16.gmra.mxu0 %v2108
          %v2317 = vpop.f32.mrf.mxu0
          %v2318 = vadd.f32 %v2144, %v2317
          %v2319 = vpop.f32.mrf.mxu0
          %v2320 = vadd.f32 %v2144, %v2319
          %2321 = vmatmul.bf16.gmra.mxu0 %v2109
          %v2322 = vpop.f32.mrf.mxu0
          %v2323 = vadd.f32 %v2144, %v2322
          %v2324 = vpop.f32.mrf.mxu0
          %v2325 = vadd.f32 %v2144, %v2324
          %2326 = vdwg.mxu0
          %2327 = vmatpush.bf16.msra.mxu0 %v2252
          %2328 = vmatpush.bf16.msra.mxu0 %v2249
          %2329 = vmatpush.bf16.msra.mxu0 %v2246
          %2330 = vmatpush.bf16.msra.mxu0 %v2243
          %2331 = vmatpush.bf16.msra.mxu0 %v2240
          %2332 = vmatpush.bf16.msra.mxu0 %v2237
          %2333 = vmatpush.bf16.msra.mxu0 %v2234
          %2334 = vmatpush.bf16.msra.mxu0 %v2231
          %2335 = vmatmul.bf16.gmra.mxu0 %v2102
          %v2336 = vpop.f32.mrf.mxu0
          %v2337 = vadd.f32 %v2145, %v2336
          %v2338 = vpop.f32.mrf.mxu0
          %v2339 = vadd.f32 %v2145, %v2338
          %2340 = vmatmul.bf16.gmra.mxu0 %v2103
          %v2341 = vpop.f32.mrf.mxu0
          %v2342 = vadd.f32 %v2145, %v2341
          %v2343 = vpop.f32.mrf.mxu0
          %v2344 = vadd.f32 %v2145, %v2343
          %2345 = vmatmul.bf16.gmra.mxu0 %v2104
          %v2346 = vpop.f32.mrf.mxu0
          %v2347 = vadd.f32 %v2145, %v2346
          %v2348 = vpop.f32.mrf.mxu0
          %v2349 = vadd.f32 %v2145, %v2348
          %2350 = vmatmul.bf16.gmra.mxu0 %v2105
          %v2351 = vpop.f32.mrf.mxu0
          %v2352 = vadd.f32 %v2145, %v2351
          %v2353 = vpop.f32.mrf.mxu0
          %v2354 = vadd.f32 %v2145, %v2353
          %2355 = vmatmul.bf16.gmra.mxu0 %v2106
          %v2356 = vpop.f32.mrf.mxu0
          %v2357 = vadd.f32 %v2145, %v2356
          %v2358 = vpop.f32.mrf.mxu0
          %v2359 = vadd.f32 %v2145, %v2358
          %2360 = vmatmul.bf16.gmra.mxu0 %v2107
          %v2361 = vpop.f32.mrf.mxu0
          %v2362 = vadd.f32 %v2145, %v2361
          %v2363 = vpop.f32.mrf.mxu0
          %v2364 = vadd.f32 %v2145, %v2363
          %2365 = vmatmul.bf16.gmra.mxu0 %v2108
          %v2366 = vpop.f32.mrf.mxu0
          %v2367 = vadd.f32 %v2145, %v2366
          %v2368 = vpop.f32.mrf.mxu0
          %v2369 = vadd.f32 %v2145, %v2368
          %2370 = vmatmul.bf16.gmra.mxu0 %v2109
          %v2371 = vpop.f32.mrf.mxu0
          %v2372 = vadd.f32 %v2145, %v2371
          %v2373 = vpop.f32.mrf.mxu0
          %v2374 = vadd.f32 %v2145, %v2373
          %2375 = vdwg.mxu0
          %2376 = vmatpush.bf16.msra.mxu0 %v2253
          %2377 = vmatpush.bf16.msra.mxu0 %v2250
          %2378 = vmatpush.bf16.msra.mxu0 %v2247
          %2379 = vmatpush.bf16.msra.mxu0 %v2244
          %2380 = vmatpush.bf16.msra.mxu0 %v2241
          %2381 = vmatpush.bf16.msra.mxu0 %v2238
          %2382 = vmatpush.bf16.msra.mxu0 %v2235
          %2383 = vmatpush.bf16.msra.mxu0 %v2232
          %2384 = vmatmul.bf16.gmra.mxu0 %v2102
          %v2385 = vpop.f32.mrf.mxu0
          %v2386 = vadd.f32 %v2146, %v2385
          %v2387 = vpop.f32.mrf.mxu0
          %v2388 = vadd.f32 %v2146, %v2387
          %2389 = vmatmul.bf16.gmra.mxu0 %v2103
          %v2390 = vpop.f32.mrf.mxu0
          %v2391 = vadd.f32 %v2146, %v2390
          %v2392 = vpop.f32.mrf.mxu0
          %v2393 = vadd.f32 %v2146, %v2392
          %2394 = vmatmul.bf16.gmra.mxu0 %v2104
          %v2395 = vpop.f32.mrf.mxu0
          %v2396 = vadd.f32 %v2146, %v2395
          %v2397 = vpop.f32.mrf.mxu0
          %v2398 = vadd.f32 %v2146, %v2397
          %2399 = vmatmul.bf16.gmra.mxu0 %v2105
          %v2400 = vpop.f32.mrf.mxu0
          %v2401 = vadd.f32 %v2146, %v2400
          %v2402 = vpop.f32.mrf.mxu0
          %v2403 = vadd.f32 %v2146, %v2402
          %2404 = vmatmul.bf16.gmra.mxu0 %v2106
          %v2405 = vpop.f32.mrf.mxu0
          %v2406 = vadd.f32 %v2146, %v2405
          %v2407 = vpop.f32.mrf.mxu0
          %v2408 = vadd.f32 %v2146, %v2407
          %2409 = vmatmul.bf16.gmra.mxu0 %v2107
          %v2410 = vpop.f32.mrf.mxu0
          %v2411 = vadd.f32 %v2146, %v2410
          %v2412 = vpop.f32.mrf.mxu0
          %v2413 = vadd.f32 %v2146, %v2412
          %2414 = vmatmul.bf16.gmra.mxu0 %v2108
          %v2415 = vpop.f32.mrf.mxu0
          %v2416 = vadd.f32 %v2146, %v2415
          %v2417 = vpop.f32.mrf.mxu0
          %v2418 = vadd.f32 %v2146, %v2417
          %2419 = vmatmul.bf16.gmra.mxu0 %v2109
          %v2420 = vpop.f32.mrf.mxu0
          %v2421 = vadd.f32 %v2146, %v2420
          %v2422 = vpop.f32.mrf.mxu0
          %v2423 = vadd.f32 %v2146, %v2422
          %2424 = vdwg.mxu0
          %v2425 = vxor.u32 %v2288, 2147483648
          %v2426 = vxor.u32 %v2290, 2147483648
          %v2427 = vxor.u32 %v2293, 2147483648
          %v2428 = vxor.u32 %v2295, 2147483648
          %v2429 = vxor.u32 %v2298, 2147483648
          %v2430 = vxor.u32 %v2300, 2147483648
          %v2431 = vxor.u32 %v2303, 2147483648
          %v2432 = vxor.u32 %v2305, 2147483648
          %v2433 = vxor.u32 %v2308, 2147483648
          %v2434 = vxor.u32 %v2310, 2147483648
          %v2435 = vxor.u32 %v2313, 2147483648
          %v2436 = vxor.u32 %v2315, 2147483648
          %v2437 = vxor.u32 %v2318, 2147483648
          %v2438 = vxor.u32 %v2320, 2147483648
          %v2439 = vxor.u32 %v2323, 2147483648
          %v2440 = vxor.u32 %v2325, 2147483648
          %v2441 = vmul.f32 %v2425, 1.442695
          %v2442 = vpow.pop %v2441
          %v2443 = vmul.f32 %v2426, 1.442695
          %v2444 = vpow.pop %v2443
          %v2445 = vmul.f32 %v2427, 1.442695
          %v2446 = vpow.pop %v2445
          %v2447 = vmul.f32 %v2428, 1.442695
          %v2448 = vpow.pop %v2447
          %v2449 = vmul.f32 %v2429, 1.442695
          %v2450 = vpow.pop %v2449
          %v2451 = vmul.f32 %v2430, 1.442695
          %v2452 = vpow.pop %v2451
          %v2453 = vmul.f32 %v2431, 1.442695
          %v2454 = vpow.pop %v2453
          %v2455 = vmul.f32 %v2432, 1.442695
          %v2456 = vpow.pop %v2455
          %v2457 = vmul.f32 %v2433, 1.442695
          %v2458 = vpow.pop %v2457
          %v2459 = vmul.f32 %v2434, 1.442695
          %v2460 = vpow.pop %v2459
          %v2461 = vmul.f32 %v2435, 1.442695
          %v2462 = vpow.pop %v2461
          %v2463 = vmul.f32 %v2436, 1.442695
          %v2464 = vpow.pop %v2463
          %v2465 = vmul.f32 %v2437, 1.442695
          %v2466 = vpow.pop %v2465
          %v2467 = vmul.f32 %v2438, 1.442695
          %v2468 = vpow.pop %v2467
          %v2469 = vmul.f32 %v2439, 1.442695
          %v2470 = vpow.pop %v2469
          %v2471 = vmul.f32 %v2440, 1.442695
          %v2472 = vpow.pop %v2471
          %v2473 = vadd.f32 %v2442, 1.0
          %v2474 = vadd.f32 %v2444, 1.0
          %v2475 = vadd.f32 %v2446, 1.0
          %v2476 = vadd.f32 %v2448, 1.0
          %v2477 = vadd.f32 %v2450, 1.0
          %v2478 = vadd.f32 %v2452, 1.0
          %v2479 = vadd.f32 %v2454, 1.0
          %v2480 = vadd.f32 %v2456, 1.0
          %v2481 = vadd.f32 %v2458, 1.0
          %v2482 = vadd.f32 %v2460, 1.0
          %v2483 = vadd.f32 %v2462, 1.0
          %v2484 = vadd.f32 %v2464, 1.0
          %v2485 = vadd.f32 %v2466, 1.0
          %v2486 = vadd.f32 %v2468, 1.0
          %v2487 = vadd.f32 %v2470, 1.0
          %v2488 = vadd.f32 %v2472, 1.0
          %v2489 = vrcp.pop %v2473
          %v2490 = vmul.f32 %v2473, %v2489
          %v2491 = vsub.f32 1.0, %v2490
          %v2492 = vmul.f32 %v2489, %v2491
          %v2493 = vadd.f32 %v2489, %v2492
          %vm2494 = vweird.f32 %v2473
          %vm2495 = vweird.f32 %v2489
          %vm2496 = vmor %vm2494, %vm2495
          %v2497 = vsel %vm2496, %v2489, %v2493
          %v2498 = vand.u32 2147483647, %v2473
          %vm2499 = vcmp.eq.f32.partialorder %v2498, 8.507059e+37
          %v2500 = vand.u32 %v2473, 2147483648
          %v2501 = vor.u32 1.1754944e-38, %v2500
          %v2502 = vsel %vm2499, %v2501, %v2497
          %v2503 = vmul.f32 1.0, %v2502
          %v2504 = vrcp.pop %v2474
          %v2505 = vmul.f32 %v2474, %v2504
          %v2506 = vsub.f32 1.0, %v2505
          %v2507 = vmul.f32 %v2504, %v2506
          %v2508 = vadd.f32 %v2504, %v2507
          %vm2509 = vweird.f32 %v2474
          %vm2510 = vweird.f32 %v2504
          %vm2511 = vmor %vm2509, %vm2510
          %v2512 = vsel %vm2511, %v2504, %v2508
          %v2513 = vand.u32 2147483647, %v2474
          %vm2514 = vcmp.eq.f32.partialorder %v2513, 8.507059e+37
          %v2515 = vand.u32 %v2474, 2147483648
          %v2516 = vor.u32 1.1754944e-38, %v2515
          %v2517 = vsel %vm2514, %v2516, %v2512
          %v2518 = vmul.f32 1.0, %v2517
          %v2519 = vrcp.pop %v2475
          %v2520 = vmul.f32 %v2475, %v2519
          %v2521 = vsub.f32 1.0, %v2520
          %v2522 = vmul.f32 %v2519, %v2521
          %v2523 = vadd.f32 %v2519, %v2522
          %vm2524 = vweird.f32 %v2475
          %vm2525 = vweird.f32 %v2519
          %vm2526 = vmor %vm2524, %vm2525
          %v2527 = vsel %vm2526, %v2519, %v2523
          %v2528 = vand.u32 2147483647, %v2475
          %vm2529 = vcmp.eq.f32.partialorder %v2528, 8.507059e+37
          %v2530 = vand.u32 %v2475, 2147483648
          %v2531 = vor.u32 1.1754944e-38, %v2530
          %v2532 = vsel %vm2529, %v2531, %v2527
          %v2533 = vmul.f32 1.0, %v2532
          %v2534 = vrcp.pop %v2476
          %v2535 = vmul.f32 %v2476, %v2534
          %v2536 = vsub.f32 1.0, %v2535
          %v2537 = vmul.f32 %v2534, %v2536
          %v2538 = vadd.f32 %v2534, %v2537
          %vm2539 = vweird.f32 %v2476
          %vm2540 = vweird.f32 %v2534
          %vm2541 = vmor %vm2539, %vm2540
          %v2542 = vsel %vm2541, %v2534, %v2538
          %v2543 = vand.u32 2147483647, %v2476
          %vm2544 = vcmp.eq.f32.partialorder %v2543, 8.507059e+37
          %v2545 = vand.u32 %v2476, 2147483648
          %v2546 = vor.u32 1.1754944e-38, %v2545
          %v2547 = vsel %vm2544, %v2546, %v2542
          %v2548 = vmul.f32 1.0, %v2547
          %v2549 = vrcp.pop %v2477
          %v2550 = vmul.f32 %v2477, %v2549
          %v2551 = vsub.f32 1.0, %v2550
          %v2552 = vmul.f32 %v2549, %v2551
          %v2553 = vadd.f32 %v2549, %v2552
          %vm2554 = vweird.f32 %v2477
          %vm2555 = vweird.f32 %v2549
          %vm2556 = vmor %vm2554, %vm2555
          %v2557 = vsel %vm2556, %v2549, %v2553
          %v2558 = vand.u32 2147483647, %v2477
          %vm2559 = vcmp.eq.f32.partialorder %v2558, 8.507059e+37
          %v2560 = vand.u32 %v2477, 2147483648
          %v2561 = vor.u32 1.1754944e-38, %v2560
          %v2562 = vsel %vm2559, %v2561, %v2557
          %v2563 = vmul.f32 1.0, %v2562
          %v2564 = vrcp.pop %v2478
          %v2565 = vmul.f32 %v2478, %v2564
          %v2566 = vsub.f32 1.0, %v2565
          %v2567 = vmul.f32 %v2564, %v2566
          %v2568 = vadd.f32 %v2564, %v2567
          %vm2569 = vweird.f32 %v2478
          %vm2570 = vweird.f32 %v2564
          %vm2571 = vmor %vm2569, %vm2570
          %v2572 = vsel %vm2571, %v2564, %v2568
          %v2573 = vand.u32 2147483647, %v2478
          %vm2574 = vcmp.eq.f32.partialorder %v2573, 8.507059e+37
          %v2575 = vand.u32 %v2478, 2147483648
          %v2576 = vor.u32 1.1754944e-38, %v2575
          %v2577 = vsel %vm2574, %v2576, %v2572
          %v2578 = vmul.f32 1.0, %v2577
          %v2579 = vrcp.pop %v2479
          %v2580 = vmul.f32 %v2479, %v2579
          %v2581 = vsub.f32 1.0, %v2580
          %v2582 = vmul.f32 %v2579, %v2581
          %v2583 = vadd.f32 %v2579, %v2582
          %vm2584 = vweird.f32 %v2479
          %vm2585 = vweird.f32 %v2579
          %vm2586 = vmor %vm2584, %vm2585
          %v2587 = vsel %vm2586, %v2579, %v2583
          %v2588 = vand.u32 2147483647, %v2479
          %vm2589 = vcmp.eq.f32.partialorder %v2588, 8.507059e+37
          %v2590 = vand.u32 %v2479, 2147483648
          %v2591 = vor.u32 1.1754944e-38, %v2590
          %v2592 = vsel %vm2589, %v2591, %v2587
          %v2593 = vmul.f32 1.0, %v2592
          %v2594 = vrcp.pop %v2480
          %v2595 = vmul.f32 %v2480, %v2594
          %v2596 = vsub.f32 1.0, %v2595
          %v2597 = vmul.f32 %v2594, %v2596
          %v2598 = vadd.f32 %v2594, %v2597
          %vm2599 = vweird.f32 %v2480
          %vm2600 = vweird.f32 %v2594
          %vm2601 = vmor %vm2599, %vm2600
          %v2602 = vsel %vm2601, %v2594, %v2598
          %v2603 = vand.u32 2147483647, %v2480
          %vm2604 = vcmp.eq.f32.partialorder %v2603, 8.507059e+37
          %v2605 = vand.u32 %v2480, 2147483648
          %v2606 = vor.u32 1.1754944e-38, %v2605
          %v2607 = vsel %vm2604, %v2606, %v2602
          %v2608 = vmul.f32 1.0, %v2607
          %v2609 = vrcp.pop %v2481
          %v2610 = vmul.f32 %v2481, %v2609
          %v2611 = vsub.f32 1.0, %v2610
          %v2612 = vmul.f32 %v2609, %v2611
          %v2613 = vadd.f32 %v2609, %v2612
          %vm2614 = vweird.f32 %v2481
          %vm2615 = vweird.f32 %v2609
          %vm2616 = vmor %vm2614, %vm2615
          %v2617 = vsel %vm2616, %v2609, %v2613
          %v2618 = vand.u32 2147483647, %v2481
          %vm2619 = vcmp.eq.f32.partialorder %v2618, 8.507059e+37
          %v2620 = vand.u32 %v2481, 2147483648
          %v2621 = vor.u32 1.1754944e-38, %v2620
          %v2622 = vsel %vm2619, %v2621, %v2617
          %v2623 = vmul.f32 1.0, %v2622
          %v2624 = vrcp.pop %v2482
          %v2625 = vmul.f32 %v2482, %v2624
          %v2626 = vsub.f32 1.0, %v2625
          %v2627 = vmul.f32 %v2624, %v2626
          %v2628 = vadd.f32 %v2624, %v2627
          %vm2629 = vweird.f32 %v2482
          %vm2630 = vweird.f32 %v2624
          %vm2631 = vmor %vm2629, %vm2630
          %v2632 = vsel %vm2631, %v2624, %v2628
          %v2633 = vand.u32 2147483647, %v2482
          %vm2634 = vcmp.eq.f32.partialorder %v2633, 8.507059e+37
          %v2635 = vand.u32 %v2482, 2147483648
          %v2636 = vor.u32 1.1754944e-38, %v2635
          %v2637 = vsel %vm2634, %v2636, %v2632
          %v2638 = vmul.f32 1.0, %v2637
          %v2639 = vrcp.pop %v2483
          %v2640 = vmul.f32 %v2483, %v2639
          %v2641 = vsub.f32 1.0, %v2640
          %v2642 = vmul.f32 %v2639, %v2641
          %v2643 = vadd.f32 %v2639, %v2642
          %vm2644 = vweird.f32 %v2483
          %vm2645 = vweird.f32 %v2639
          %vm2646 = vmor %vm2644, %vm2645
          %v2647 = vsel %vm2646, %v2639, %v2643
          %v2648 = vand.u32 2147483647, %v2483
          %vm2649 = vcmp.eq.f32.partialorder %v2648, 8.507059e+37
          %v2650 = vand.u32 %v2483, 2147483648
          %v2651 = vor.u32 1.1754944e-38, %v2650
          %v2652 = vsel %vm2649, %v2651, %v2647
          %v2653 = vmul.f32 1.0, %v2652
          %v2654 = vrcp.pop %v2484
          %v2655 = vmul.f32 %v2484, %v2654
          %v2656 = vsub.f32 1.0, %v2655
          %v2657 = vmul.f32 %v2654, %v2656
          %v2658 = vadd.f32 %v2654, %v2657
          %vm2659 = vweird.f32 %v2484
          %vm2660 = vweird.f32 %v2654
          %vm2661 = vmor %vm2659, %vm2660
          %v2662 = vsel %vm2661, %v2654, %v2658
          %v2663 = vand.u32 2147483647, %v2484
          %vm2664 = vcmp.eq.f32.partialorder %v2663, 8.507059e+37
          %v2665 = vand.u32 %v2484, 2147483648
          %v2666 = vor.u32 1.1754944e-38, %v2665
          %v2667 = vsel %vm2664, %v2666, %v2662
          %v2668 = vmul.f32 1.0, %v2667
          %v2669 = vrcp.pop %v2485
          %v2670 = vmul.f32 %v2485, %v2669
          %v2671 = vsub.f32 1.0, %v2670
          %v2672 = vmul.f32 %v2669, %v2671
          %v2673 = vadd.f32 %v2669, %v2672
          %vm2674 = vweird.f32 %v2485
          %vm2675 = vweird.f32 %v2669
          %vm2676 = vmor %vm2674, %vm2675
          %v2677 = vsel %vm2676, %v2669, %v2673
          %v2678 = vand.u32 2147483647, %v2485
          %vm2679 = vcmp.eq.f32.partialorder %v2678, 8.507059e+37
          %v2680 = vand.u32 %v2485, 2147483648
          %v2681 = vor.u32 1.1754944e-38, %v2680
          %v2682 = vsel %vm2679, %v2681, %v2677
          %v2683 = vmul.f32 1.0, %v2682
          %v2684 = vrcp.pop %v2486
          %v2685 = vmul.f32 %v2486, %v2684
          %v2686 = vsub.f32 1.0, %v2685
          %v2687 = vmul.f32 %v2684, %v2686
          %v2688 = vadd.f32 %v2684, %v2687
          %vm2689 = vweird.f32 %v2486
          %vm2690 = vweird.f32 %v2684
          %vm2691 = vmor %vm2689, %vm2690
          %v2692 = vsel %vm2691, %v2684, %v2688
          %v2693 = vand.u32 2147483647, %v2486
          %vm2694 = vcmp.eq.f32.partialorder %v2693, 8.507059e+37
          %v2695 = vand.u32 %v2486, 2147483648
          %v2696 = vor.u32 1.1754944e-38, %v2695
          %v2697 = vsel %vm2694, %v2696, %v2692
          %v2698 = vmul.f32 1.0, %v2697
          %v2699 = vrcp.pop %v2487
          %v2700 = vmul.f32 %v2487, %v2699
          %v2701 = vsub.f32 1.0, %v2700
          %v2702 = vmul.f32 %v2699, %v2701
          %v2703 = vadd.f32 %v2699, %v2702
          %vm2704 = vweird.f32 %v2487
          %vm2705 = vweird.f32 %v2699
          %vm2706 = vmor %vm2704, %vm2705
          %v2707 = vsel %vm2706, %v2699, %v2703
          %v2708 = vand.u32 2147483647, %v2487
          %vm2709 = vcmp.eq.f32.partialorder %v2708, 8.507059e+37
          %v2710 = vand.u32 %v2487, 2147483648
          %v2711 = vor.u32 1.1754944e-38, %v2710
          %v2712 = vsel %vm2709, %v2711, %v2707
          %v2713 = vmul.f32 1.0, %v2712
          %v2714 = vrcp.pop %v2488
          %v2715 = vmul.f32 %v2488, %v2714
          %v2716 = vsub.f32 1.0, %v2715
          %v2717 = vmul.f32 %v2714, %v2716
          %v2718 = vadd.f32 %v2714, %v2717
          %vm2719 = vweird.f32 %v2488
          %vm2720 = vweird.f32 %v2714
          %vm2721 = vmor %vm2719, %vm2720
          %v2722 = vsel %vm2721, %v2714, %v2718
          %v2723 = vand.u32 2147483647, %v2488
          %vm2724 = vcmp.eq.f32.partialorder %v2723, 8.507059e+37
          %v2725 = vand.u32 %v2488, 2147483648
          %v2726 = vor.u32 1.1754944e-38, %v2725
          %v2727 = vsel %vm2724, %v2726, %v2722
          %v2728 = vmul.f32 1.0, %v2727
          %v2729 = vtanh.pop %v2337
          %v2730 = vtanh.pop %v2339
          %v2731 = vtanh.pop %v2342
          %v2732 = vtanh.pop %v2344
          %v2733 = vtanh.pop %v2347
          %v2734 = vtanh.pop %v2349
          %v2735 = vtanh.pop %v2352
          %v2736 = vtanh.pop %v2354
          %v2737 = vtanh.pop %v2357
          %v2738 = vtanh.pop %v2359
          %v2739 = vtanh.pop %v2362
          %v2740 = vtanh.pop %v2364
          %v2741 = vtanh.pop %v2367
          %v2742 = vtanh.pop %v2369
          %v2743 = vtanh.pop %v2372
          %v2744 = vtanh.pop %v2374
          %v2745 = vxor.u32 %v2386, 2147483648
          %v2746 = vxor.u32 %v2388, 2147483648
          %v2747 = vxor.u32 %v2391, 2147483648
          %v2748 = vxor.u32 %v2393, 2147483648
          %v2749 = vxor.u32 %v2396, 2147483648
          %v2750 = vxor.u32 %v2398, 2147483648
          %v2751 = vxor.u32 %v2401, 2147483648
          %v2752 = vxor.u32 %v2403, 2147483648
          %v2753 = vxor.u32 %v2406, 2147483648
          %v2754 = vxor.u32 %v2408, 2147483648
          %v2755 = vxor.u32 %v2411, 2147483648
          %v2756 = vxor.u32 %v2413, 2147483648
          %v2757 = vxor.u32 %v2416, 2147483648
          %v2758 = vxor.u32 %v2418, 2147483648
          %v2759 = vxor.u32 %v2421, 2147483648
          %v2760 = vxor.u32 %v2423, 2147483648
          %v2761 = vmul.f32 %v2745, 1.442695
          %v2762 = vpow.pop %v2761
          %v2763 = vmul.f32 %v2746, 1.442695
          %v2764 = vpow.pop %v2763
          %v2765 = vmul.f32 %v2747, 1.442695
          %v2766 = vpow.pop %v2765
          %v2767 = vmul.f32 %v2748, 1.442695
          %v2768 = vpow.pop %v2767
          %v2769 = vmul.f32 %v2749, 1.442695
          %v2770 = vpow.pop %v2769
          %v2771 = vmul.f32 %v2750, 1.442695
          %v2772 = vpow.pop %v2771
          %v2773 = vmul.f32 %v2751, 1.442695
          %v2774 = vpow.pop %v2773
          %v2775 = vmul.f32 %v2752, 1.442695
          %v2776 = vpow.pop %v2775
          %v2777 = vmul.f32 %v2753, 1.442695
          %v2778 = vpow.pop %v2777
          %v2779 = vmul.f32 %v2754, 1.442695
          %v2780 = vpow.pop %v2779
          %v2781 = vmul.f32 %v2755, 1.442695
          %v2782 = vpow.pop %v2781
          %v2783 = vmul.f32 %v2756, 1.442695
          %v2784 = vpow.pop %v2783
          %v2785 = vmul.f32 %v2757, 1.442695
          %v2786 = vpow.pop %v2785
          %v2787 = vmul.f32 %v2758, 1.442695
          %v2788 = vpow.pop %v2787
          %v2789 = vmul.f32 %v2759, 1.442695
          %v2790 = vpow.pop %v2789
          %v2791 = vmul.f32 %v2760, 1.442695
          %v2792 = vpow.pop %v2791
          %v2793 = vadd.f32 %v2762, 1.0
          %v2794 = vadd.f32 %v2764, 1.0
          %v2795 = vadd.f32 %v2766, 1.0
          %v2796 = vadd.f32 %v2768, 1.0
          %v2797 = vadd.f32 %v2770, 1.0
          %v2798 = vadd.f32 %v2772, 1.0
          %v2799 = vadd.f32 %v2774, 1.0
          %v2800 = vadd.f32 %v2776, 1.0
          %v2801 = vadd.f32 %v2778, 1.0
          %v2802 = vadd.f32 %v2780, 1.0
          %v2803 = vadd.f32 %v2782, 1.0
          %v2804 = vadd.f32 %v2784, 1.0
          %v2805 = vadd.f32 %v2786, 1.0
          %v2806 = vadd.f32 %v2788, 1.0
          %v2807 = vadd.f32 %v2790, 1.0
          %v2808 = vadd.f32 %v2792, 1.0
          %v2809 = vrcp.pop %v2793
          %v2810 = vmul.f32 %v2793, %v2809
          %v2811 = vsub.f32 1.0, %v2810
          %v2812 = vmul.f32 %v2809, %v2811
          %v2813 = vadd.f32 %v2809, %v2812
          %vm2814 = vweird.f32 %v2793
          %vm2815 = vweird.f32 %v2809
          %vm2816 = vmor %vm2814, %vm2815
          %v2817 = vsel %vm2816, %v2809, %v2813
          %v2818 = vand.u32 2147483647, %v2793
          %vm2819 = vcmp.eq.f32.partialorder %v2818, 8.507059e+37
          %v2820 = vand.u32 %v2793, 2147483648
          %v2821 = vor.u32 1.1754944e-38, %v2820
          %v2822 = vsel %vm2819, %v2821, %v2817
          %v2823 = vmul.f32 1.0, %v2822
          %v2824 = vrcp.pop %v2794
          %v2825 = vmul.f32 %v2794, %v2824
          %v2826 = vsub.f32 1.0, %v2825
          %v2827 = vmul.f32 %v2824, %v2826
          %v2828 = vadd.f32 %v2824, %v2827
          %vm2829 = vweird.f32 %v2794
          %vm2830 = vweird.f32 %v2824
          %vm2831 = vmor %vm2829, %vm2830
          %v2832 = vsel %vm2831, %v2824, %v2828
          %v2833 = vand.u32 2147483647, %v2794
          %vm2834 = vcmp.eq.f32.partialorder %v2833, 8.507059e+37
          %v2835 = vand.u32 %v2794, 2147483648
          %v2836 = vor.u32 1.1754944e-38, %v2835
          %v2837 = vsel %vm2834, %v2836, %v2832
          %v2838 = vmul.f32 1.0, %v2837
          %v2839 = vrcp.pop %v2795
          %v2840 = vmul.f32 %v2795, %v2839
          %v2841 = vsub.f32 1.0, %v2840
          %v2842 = vmul.f32 %v2839, %v2841
          %v2843 = vadd.f32 %v2839, %v2842
          %vm2844 = vweird.f32 %v2795
          %vm2845 = vweird.f32 %v2839
          %vm2846 = vmor %vm2844, %vm2845
          %v2847 = vsel %vm2846, %v2839, %v2843
          %v2848 = vand.u32 2147483647, %v2795
          %vm2849 = vcmp.eq.f32.partialorder %v2848, 8.507059e+37
          %v2850 = vand.u32 %v2795, 2147483648
          %v2851 = vor.u32 1.1754944e-38, %v2850
          %v2852 = vsel %vm2849, %v2851, %v2847
          %v2853 = vmul.f32 1.0, %v2852
          %v2854 = vrcp.pop %v2796
          %v2855 = vmul.f32 %v2796, %v2854
          %v2856 = vsub.f32 1.0, %v2855
          %v2857 = vmul.f32 %v2854, %v2856
          %v2858 = vadd.f32 %v2854, %v2857
          %vm2859 = vweird.f32 %v2796
          %vm2860 = vweird.f32 %v2854
          %vm2861 = vmor %vm2859, %vm2860
          %v2862 = vsel %vm2861, %v2854, %v2858
          %v2863 = vand.u32 2147483647, %v2796
          %vm2864 = vcmp.eq.f32.partialorder %v2863, 8.507059e+37
          %v2865 = vand.u32 %v2796, 2147483648
          %v2866 = vor.u32 1.1754944e-38, %v2865
          %v2867 = vsel %vm2864, %v2866, %v2862
          %v2868 = vmul.f32 1.0, %v2867
          %v2869 = vrcp.pop %v2797
          %v2870 = vmul.f32 %v2797, %v2869
          %v2871 = vsub.f32 1.0, %v2870
          %v2872 = vmul.f32 %v2869, %v2871
          %v2873 = vadd.f32 %v2869, %v2872
          %vm2874 = vweird.f32 %v2797
          %vm2875 = vweird.f32 %v2869
          %vm2876 = vmor %vm2874, %vm2875
          %v2877 = vsel %vm2876, %v2869, %v2873
          %v2878 = vand.u32 2147483647, %v2797
          %vm2879 = vcmp.eq.f32.partialorder %v2878, 8.507059e+37
          %v2880 = vand.u32 %v2797, 2147483648
          %v2881 = vor.u32 1.1754944e-38, %v2880
          %v2882 = vsel %vm2879, %v2881, %v2877
          %v2883 = vmul.f32 1.0, %v2882
          %v2884 = vrcp.pop %v2798
          %v2885 = vmul.f32 %v2798, %v2884
          %v2886 = vsub.f32 1.0, %v2885
          %v2887 = vmul.f32 %v2884, %v2886
          %v2888 = vadd.f32 %v2884, %v2887
          %vm2889 = vweird.f32 %v2798
          %vm2890 = vweird.f32 %v2884
          %vm2891 = vmor %vm2889, %vm2890
          %v2892 = vsel %vm2891, %v2884, %v2888
          %v2893 = vand.u32 2147483647, %v2798
          %vm2894 = vcmp.eq.f32.partialorder %v2893, 8.507059e+37
          %v2895 = vand.u32 %v2798, 2147483648
          %v2896 = vor.u32 1.1754944e-38, %v2895
          %v2897 = vsel %vm2894, %v2896, %v2892
          %v2898 = vmul.f32 1.0, %v2897
          %v2899 = vrcp.pop %v2799
          %v2900 = vmul.f32 %v2799, %v2899
          %v2901 = vsub.f32 1.0, %v2900
          %v2902 = vmul.f32 %v2899, %v2901
          %v2903 = vadd.f32 %v2899, %v2902
          %vm2904 = vweird.f32 %v2799
          %vm2905 = vweird.f32 %v2899
          %vm2906 = vmor %vm2904, %vm2905
          %v2907 = vsel %vm2906, %v2899, %v2903
          %v2908 = vand.u32 2147483647, %v2799
          %vm2909 = vcmp.eq.f32.partialorder %v2908, 8.507059e+37
          %v2910 = vand.u32 %v2799, 2147483648
          %v2911 = vor.u32 1.1754944e-38, %v2910
          %v2912 = vsel %vm2909, %v2911, %v2907
          %v2913 = vmul.f32 1.0, %v2912
          %v2914 = vrcp.pop %v2800
          %v2915 = vmul.f32 %v2800, %v2914
          %v2916 = vsub.f32 1.0, %v2915
          %v2917 = vmul.f32 %v2914, %v2916
          %v2918 = vadd.f32 %v2914, %v2917
          %vm2919 = vweird.f32 %v2800
          %vm2920 = vweird.f32 %v2914
          %vm2921 = vmor %vm2919, %vm2920
          %v2922 = vsel %vm2921, %v2914, %v2918
          %v2923 = vand.u32 2147483647, %v2800
          %vm2924 = vcmp.eq.f32.partialorder %v2923, 8.507059e+37
          %v2925 = vand.u32 %v2800, 2147483648
          %v2926 = vor.u32 1.1754944e-38, %v2925
          %v2927 = vsel %vm2924, %v2926, %v2922
          %v2928 = vmul.f32 1.0, %v2927
          %v2929 = vrcp.pop %v2801
          %v2930 = vmul.f32 %v2801, %v2929
          %v2931 = vsub.f32 1.0, %v2930
          %v2932 = vmul.f32 %v2929, %v2931
          %v2933 = vadd.f32 %v2929, %v2932
          %vm2934 = vweird.f32 %v2801
          %vm2935 = vweird.f32 %v2929
          %vm2936 = vmor %vm2934, %vm2935
          %v2937 = vsel %vm2936, %v2929, %v2933
          %v2938 = vand.u32 2147483647, %v2801
          %vm2939 = vcmp.eq.f32.partialorder %v2938, 8.507059e+37
          %v2940 = vand.u32 %v2801, 2147483648
          %v2941 = vor.u32 1.1754944e-38, %v2940
          %v2942 = vsel %vm2939, %v2941, %v2937
          %v2943 = vmul.f32 1.0, %v2942
          %v2944 = vrcp.pop %v2802
          %v2945 = vmul.f32 %v2802, %v2944
          %v2946 = vsub.f32 1.0, %v2945
          %v2947 = vmul.f32 %v2944, %v2946
          %v2948 = vadd.f32 %v2944, %v2947
          %vm2949 = vweird.f32 %v2802
          %vm2950 = vweird.f32 %v2944
          %vm2951 = vmor %vm2949, %vm2950
          %v2952 = vsel %vm2951, %v2944, %v2948
          %v2953 = vand.u32 2147483647, %v2802
          %vm2954 = vcmp.eq.f32.partialorder %v2953, 8.507059e+37
          %v2955 = vand.u32 %v2802, 2147483648
          %v2956 = vor.u32 1.1754944e-38, %v2955
          %v2957 = vsel %vm2954, %v2956, %v2952
          %v2958 = vmul.f32 1.0, %v2957
          %v2959 = vrcp.pop %v2803
          %v2960 = vmul.f32 %v2803, %v2959
          %v2961 = vsub.f32 1.0, %v2960
          %v2962 = vmul.f32 %v2959, %v2961
          %v2963 = vadd.f32 %v2959, %v2962
          %vm2964 = vweird.f32 %v2803
          %vm2965 = vweird.f32 %v2959
          %vm2966 = vmor %vm2964, %vm2965
          %v2967 = vsel %vm2966, %v2959, %v2963
          %v2968 = vand.u32 2147483647, %v2803
          %vm2969 = vcmp.eq.f32.partialorder %v2968, 8.507059e+37
          %v2970 = vand.u32 %v2803, 2147483648
          %v2971 = vor.u32 1.1754944e-38, %v2970
          %v2972 = vsel %vm2969, %v2971, %v2967
          %v2973 = vmul.f32 1.0, %v2972
          %v2974 = vrcp.pop %v2804
          %v2975 = vmul.f32 %v2804, %v2974
          %v2976 = vsub.f32 1.0, %v2975
          %v2977 = vmul.f32 %v2974, %v2976
          %v2978 = vadd.f32 %v2974, %v2977
          %vm2979 = vweird.f32 %v2804
          %vm2980 = vweird.f32 %v2974
          %vm2981 = vmor %vm2979, %vm2980
          %v2982 = vsel %vm2981, %v2974, %v2978
          %v2983 = vand.u32 2147483647, %v2804
          %vm2984 = vcmp.eq.f32.partialorder %v2983, 8.507059e+37
          %v2985 = vand.u32 %v2804, 2147483648
          %v2986 = vor.u32 1.1754944e-38, %v2985
          %v2987 = vsel %vm2984, %v2986, %v2982
          %v2988 = vmul.f32 1.0, %v2987
          %v2989 = vrcp.pop %v2805
          %v2990 = vmul.f32 %v2805, %v2989
          %v2991 = vsub.f32 1.0, %v2990
          %v2992 = vmul.f32 %v2989, %v2991
          %v2993 = vadd.f32 %v2989, %v2992
          %vm2994 = vweird.f32 %v2805
          %vm2995 = vweird.f32 %v2989
          %vm2996 = vmor %vm2994, %vm2995
          %v2997 = vsel %vm2996, %v2989, %v2993
          %v2998 = vand.u32 2147483647, %v2805
          %vm2999 = vcmp.eq.f32.partialorder %v2998, 8.507059e+37
          %v3000 = vand.u32 %v2805, 2147483648
          %v3001 = vor.u32 1.1754944e-38, %v3000
          %v3002 = vsel %vm2999, %v3001, %v2997
          %v3003 = vmul.f32 1.0, %v3002
          %v3004 = vrcp.pop %v2806
          %v3005 = vmul.f32 %v2806, %v3004
          %v3006 = vsub.f32 1.0, %v3005
          %v3007 = vmul.f32 %v3004, %v3006
          %v3008 = vadd.f32 %v3004, %v3007
          %vm3009 = vweird.f32 %v2806
          %vm3010 = vweird.f32 %v3004
          %vm3011 = vmor %vm3009, %vm3010
          %v3012 = vsel %vm3011, %v3004, %v3008
          %v3013 = vand.u32 2147483647, %v2806
          %vm3014 = vcmp.eq.f32.partialorder %v3013, 8.507059e+37
          %v3015 = vand.u32 %v2806, 2147483648
          %v3016 = vor.u32 1.1754944e-38, %v3015
          %v3017 = vsel %vm3014, %v3016, %v3012
          %v3018 = vmul.f32 1.0, %v3017
          %v3019 = vrcp.pop %v2807
          %v3020 = vmul.f32 %v2807, %v3019
          %v3021 = vsub.f32 1.0, %v3020
          %v3022 = vmul.f32 %v3019, %v3021
          %v3023 = vadd.f32 %v3019, %v3022
          %vm3024 = vweird.f32 %v2807
          %vm3025 = vweird.f32 %v3019
          %vm3026 = vmor %vm3024, %vm3025
          %v3027 = vsel %vm3026, %v3019, %v3023
          %v3028 = vand.u32 2147483647, %v2807
          %vm3029 = vcmp.eq.f32.partialorder %v3028, 8.507059e+37
          %v3030 = vand.u32 %v2807, 2147483648
          %v3031 = vor.u32 1.1754944e-38, %v3030
          %v3032 = vsel %vm3029, %v3031, %v3027
          %v3033 = vmul.f32 1.0, %v3032
          %v3034 = vrcp.pop %v2808
          %v3035 = vmul.f32 %v2808, %v3034
          %v3036 = vsub.f32 1.0, %v3035
          %v3037 = vmul.f32 %v3034, %v3036
          %v3038 = vadd.f32 %v3034, %v3037
          %vm3039 = vweird.f32 %v2808
          %vm3040 = vweird.f32 %v3034
          %vm3041 = vmor %vm3039, %vm3040
          %v3042 = vsel %vm3041, %v3034, %v3038
          %v3043 = vand.u32 2147483647, %v2808
          %vm3044 = vcmp.eq.f32.partialorder %v3043, 8.507059e+37
          %v3045 = vand.u32 %v2808, 2147483648
          %v3046 = vor.u32 1.1754944e-38, %v3045
          %v3047 = vsel %vm3044, %v3046, %v3042
          %v3048 = vmul.f32 1.0, %v3047
          %v3049 = vmul.f32 %v2503, %v2729
          %v3050 = vmul.f32 %v2518, %v2730
          %v3051 = vmul.f32 %v2533, %v2731
          %v3052 = vmul.f32 %v2548, %v2732
          %v3053 = vmul.f32 %v2563, %v2733
          %v3054 = vmul.f32 %v2578, %v2734
          %v3055 = vmul.f32 %v2593, %v2735
          %v3056 = vmul.f32 %v2608, %v2736
          %v3057 = vmul.f32 %v2623, %v2737
          %v3058 = vmul.f32 %v2638, %v2738
          %v3059 = vmul.f32 %v2653, %v2739
          %v3060 = vmul.f32 %v2668, %v2740
          %v3061 = vmul.f32 %v2683, %v2741
          %v3062 = vmul.f32 %v2698, %v2742
          %v3063 = vmul.f32 %v2713, %v2743
          %v3064 = vmul.f32 %v2728, %v2744
          %v3065 = vtanh.pop %v3049
          %v3066 = vtanh.pop %v3050
          %v3067 = vtanh.pop %v3051
          %v3068 = vtanh.pop %v3052
          %v3069 = vtanh.pop %v3053
          %v3070 = vtanh.pop %v3054
          %v3071 = vtanh.pop %v3055
          %v3072 = vtanh.pop %v3056
          %v3073 = vtanh.pop %v3057
          %v3074 = vtanh.pop %v3058
          %v3075 = vtanh.pop %v3059
          %v3076 = vtanh.pop %v3060
          %v3077 = vtanh.pop %v3061
          %v3078 = vtanh.pop %v3062
          %v3079 = vtanh.pop %v3063
          %v3080 = vtanh.pop %v3064
          %v3081 = vmul.f32 %v2823, %v3065
          %v3082 = vmul.f32 %v2838, %v3066
          %v3083 = vmul.f32 %v2853, %v3067
          %v3084 = vmul.f32 %v2868, %v3068
          %v3085 = vmul.f32 %v2883, %v3069
          %v3086 = vmul.f32 %v2898, %v3070
          %v3087 = vmul.f32 %v2913, %v3071
          %v3088 = vmul.f32 %v2928, %v3072
          %v3089 = vmul.f32 %v2943, %v3073
          %v3090 = vmul.f32 %v2958, %v3074
          %v3091 = vmul.f32 %v2973, %v3075
          %v3092 = vmul.f32 %v2988, %v3076
          %v3093 = vmul.f32 %v3003, %v3077
          %v3094 = vmul.f32 %v3018, %v3078
          %v3095 = vmul.f32 %v3033, %v3079
          %v3096 = vmul.f32 %v3048, %v3080
          %v3097 = vpack.c.bf16 %v3082, %v3081
          %v3098 = vpack.c.bf16 %v3084, %v3083
          %v3099 = vpack.c.bf16 %v3086, %v3085
          %v3100 = vpack.c.bf16 %v3088, %v3087
          %v3101 = vpack.c.bf16 %v3090, %v3089
          %v3102 = vpack.c.bf16 %v3092, %v3091
          %v3103 = vpack.c.bf16 %v3094, %v3093
          %v3104 = vpack.c.bf16 %v3096, %v3095
          %v3105 = vld [vmem:[#allocation11] sm:$0xff]
          %v3106 = vld [vmem:[#allocation11 + $0x8] sm:$0xf]
          %v3107 = vld [vmem:[#allocation11 + $0xc] sm:$0xff]
          %v3108 = vld [vmem:[#allocation11 + $0x14] sm:$0xf]
          %v3109 = vld [vmem:[#allocation11 + $0x18] sm:$0xff]
          %v3110 = vld [vmem:[#allocation11 + $0x20] sm:$0xf]
          %v3111 = vld [vmem:[#allocation11 + $0x24] sm:$0xff]
          %v3112 = vld [vmem:[#allocation11 + $0x2c] sm:$0xf]
          %v3113 = vld [vmem:[#allocation11 + $0x30] sm:$0xff]
          %v3114 = vld [vmem:[#allocation11 + $0x38] sm:$0xf]
          %v3115 = vld [vmem:[#allocation11 + $0x3c] sm:$0xff]
          %v3116 = vld [vmem:[#allocation11 + $0x44] sm:$0xf]
          %v3117 = vld [vmem:[#allocation11 + $0x48] sm:$0xff]
          %v3118 = vld [vmem:[#allocation11 + $0x50] sm:$0xf]
          %v3119 = vld [vmem:[#allocation11 + $0x54] sm:$0xff]
          %v3120 = vld [vmem:[#allocation11 + $0x5c] sm:$0xf]
          %v3121 = vld [vmem:[#allocation11 + $0x60] sm:$0xff]
          %v3122 = vld [vmem:[#allocation11 + $0x68] sm:$0xf]
          %v3123 = vld [vmem:[#allocation11 + $0x6c] sm:$0xff]
          %v3124 = vld [vmem:[#allocation11 + $0x74] sm:$0xf]
          %v3125 = vld [vmem:[#allocation11 + $0x78] sm:$0xff]
          %v3126 = vld [vmem:[#allocation11 + $0x80] sm:$0xf]
          %v3127 = vld [vmem:[#allocation11 + $0x84] sm:$0xff]
          %v3128 = vld [vmem:[#allocation11 + $0x8c] sm:$0xf]
          %v3129 = vld [vmem:[#allocation11 + $0x90] sm:$0xff]
          %v3130 = vld [vmem:[#allocation11 + $0x98] sm:$0xf]
          %v3131 = vld [vmem:[#allocation11 + $0x9c] sm:$0xff]
          %v3132 = vld [vmem:[#allocation11 + $0xa4] sm:$0xf]
          %v3133 = vld [vmem:[#allocation11 + $0xa8] sm:$0xff]
          %v3134 = vld [vmem:[#allocation11 + $0xb0] sm:$0xf]
          %v3135 = vld [vmem:[#allocation11 + $0xb4] sm:$0xff]
          %v3136 = vld [vmem:[#allocation11 + $0xbc] sm:$0xf]
          %v3137 = vld [vmem:[#allocation12] sm:$0x7]
          %v3139 = vperm.slane %v3137, 0
          %v3140 = vperm.slane %v3137, 1
          %v3141 = vperm.slane %v3137, 2
          %v3177 = vunpack.c.l.b16 %v3105
          %v3178 = vunpack.c.h.b16 %v3105
          %v3179 = vunpack.c.l.b16 %v3106
          %v3180 = vunpack.c.l.b16 %v3107
          %v3181 = vunpack.c.h.b16 %v3107
          %v3182 = vunpack.c.l.b16 %v3108
          %v3183 = vunpack.c.l.b16 %v3109
          %v3184 = vunpack.c.h.b16 %v3109
          %v3185 = vunpack.c.l.b16 %v3110
          %v3186 = vunpack.c.l.b16 %v3111
          %v3187 = vunpack.c.h.b16 %v3111
          %v3188 = vunpack.c.l.b16 %v3112
          %v3189 = vunpack.c.l.b16 %v3113
          %v3190 = vunpack.c.h.b16 %v3113
          %v3191 = vunpack.c.l.b16 %v3114
          %v3192 = vunpack.c.l.b16 %v3115
          %v3193 = vunpack.c.h.b16 %v3115
          %v3194 = vunpack.c.l.b16 %v3116
          %v3195 = vunpack.c.l.b16 %v3117
          %v3196 = vunpack.c.h.b16 %v3117
          %v3197 = vunpack.c.l.b16 %v3118
          %v3198 = vunpack.c.l.b16 %v3119
          %v3199 = vunpack.c.h.b16 %v3119
          %v3200 = vunpack.c.l.b16 %v3120
          %v3201 = vunpack.c.l.b16 %v3121
          %v3202 = vunpack.c.h.b16 %v3121
          %v3203 = vunpack.c.l.b16 %v3122
          %v3204 = vunpack.c.l.b16 %v3123
          %v3205 = vunpack.c.h.b16 %v3123
          %v3206 = vunpack.c.l.b16 %v3124
          %v3207 = vunpack.c.l.b16 %v3125
          %v3208 = vunpack.c.h.b16 %v3125
          %v3209 = vunpack.c.l.b16 %v3126
          %v3210 = vunpack.c.l.b16 %v3127
          %v3211 = vunpack.c.h.b16 %v3127
          %v3212 = vunpack.c.l.b16 %v3128
          %v3213 = vunpack.c.l.b16 %v3129
          %v3214 = vunpack.c.h.b16 %v3129
          %v3215 = vunpack.c.l.b16 %v3130
          %v3216 = vunpack.c.l.b16 %v3131
          %v3217 = vunpack.c.h.b16 %v3131
          %v3218 = vunpack.c.l.b16 %v3132
          %v3219 = vunpack.c.l.b16 %v3133
          %v3220 = vunpack.c.h.b16 %v3133
          %v3221 = vunpack.c.l.b16 %v3134
          %v3222 = vunpack.c.l.b16 %v3135
          %v3223 = vunpack.c.h.b16 %v3135
          %v3224 = vunpack.c.l.b16 %v3136
          %v3225 = vpack.c.b16 %v3180, %v3177
          %v3226 = vpack.c.b16 %v3181, %v3178
          %v3227 = vpack.c.b16 %v3182, %v3179
          %v3228 = vpack.c.b16 %v3186, %v3183
          %v3229 = vpack.c.b16 %v3187, %v3184
          %v3230 = vpack.c.b16 %v3188, %v3185
          %v3231 = vpack.c.b16 %v3192, %v3189
          %v3232 = vpack.c.b16 %v3193, %v3190
          %v3233 = vpack.c.b16 %v3194, %v3191
          %v3234 = vpack.c.b16 %v3198, %v3195
          %v3235 = vpack.c.b16 %v3199, %v3196
          %v3236 = vpack.c.b16 %v3200, %v3197
          %v3237 = vpack.c.b16 %v3204, %v3201
          %v3238 = vpack.c.b16 %v3205, %v3202
          %v3239 = vpack.c.b16 %v3206, %v3203
          %v3240 = vpack.c.b16 %v3210, %v3207
          %v3241 = vpack.c.b16 %v3211, %v3208
          %v3242 = vpack.c.b16 %v3212, %v3209
          %v3243 = vpack.c.b16 %v3216, %v3213
          %v3244 = vpack.c.b16 %v3217, %v3214
          %v3245 = vpack.c.b16 %v3218, %v3215
          %v3246 = vpack.c.b16 %v3222, %v3219
          %v3247 = vpack.c.b16 %v3223, %v3220
          %v3248 = vpack.c.b16 %v3224, %v3221
          %3273 = vmatpush.bf16.msra.mxu0 %v3246
          %3274 = vmatpush.bf16.msra.mxu0 %v3243
          %3275 = vmatpush.bf16.msra.mxu0 %v3240
          %3276 = vmatpush.bf16.msra.mxu0 %v3237
          %3277 = vmatpush.bf16.msra.mxu0 %v3234
          %3278 = vmatpush.bf16.msra.mxu0 %v3231
          %3279 = vmatpush.bf16.msra.mxu0 %v3228
          %3280 = vmatpush.bf16.msra.mxu0 %v3225
          %3281 = vmatmul.bf16.gmra.mxu0 %v3097
          %v3282 = vpop.f32.mrf.mxu0
          %v3283 = vadd.f32 %v3139, %v3282
          %v3284 = vpop.f32.mrf.mxu0
          %v3285 = vadd.f32 %v3139, %v3284
          %3286 = vmatmul.bf16.gmra.mxu0 %v3098
          %v3287 = vpop.f32.mrf.mxu0
          %v3288 = vadd.f32 %v3139, %v3287
          %v3289 = vpop.f32.mrf.mxu0
          %v3290 = vadd.f32 %v3139, %v3289
          %3291 = vmatmul.bf16.gmra.mxu0 %v3099
          %v3292 = vpop.f32.mrf.mxu0
          %v3293 = vadd.f32 %v3139, %v3292
          %v3294 = vpop.f32.mrf.mxu0
          %v3295 = vadd.f32 %v3139, %v3294
          %3296 = vmatmul.bf16.gmra.mxu0 %v3100
          %v3297 = vpop.f32.mrf.mxu0
          %v3298 = vadd.f32 %v3139, %v3297
          %v3299 = vpop.f32.mrf.mxu0
          %v3300 = vadd.f32 %v3139, %v3299
          %3301 = vmatmul.bf16.gmra.mxu0 %v3101
          %v3302 = vpop.f32.mrf.mxu0
          %v3303 = vadd.f32 %v3139, %v3302
          %v3304 = vpop.f32.mrf.mxu0
          %v3305 = vadd.f32 %v3139, %v3304
          %3306 = vmatmul.bf16.gmra.mxu0 %v3102
          %v3307 = vpop.f32.mrf.mxu0
          %v3308 = vadd.f32 %v3139, %v3307
          %v3309 = vpop.f32.mrf.mxu0
          %v3310 = vadd.f32 %v3139, %v3309
          %3311 = vmatmul.bf16.gmra.mxu0 %v3103
          %v3312 = vpop.f32.mrf.mxu0
          %v3313 = vadd.f32 %v3139, %v3312
          %v3314 = vpop.f32.mrf.mxu0
          %v3315 = vadd.f32 %v3139, %v3314
          %3316 = vmatmul.bf16.gmra.mxu0 %v3104
          %v3317 = vpop.f32.mrf.mxu0
          %v3318 = vadd.f32 %v3139, %v3317
          %v3319 = vpop.f32.mrf.mxu0
          %v3320 = vadd.f32 %v3139, %v3319
          %3321 = vdwg.mxu0
          %3322 = vmatpush.bf16.msra.mxu0 %v3247
          %3323 = vmatpush.bf16.msra.mxu0 %v3244
          %3324 = vmatpush.bf16.msra.mxu0 %v3241
          %3325 = vmatpush.bf16.msra.mxu0 %v3238
          %3326 = vmatpush.bf16.msra.mxu0 %v3235
          %3327 = vmatpush.bf16.msra.mxu0 %v3232
          %3328 = vmatpush.bf16.msra.mxu0 %v3229
          %3329 = vmatpush.bf16.msra.mxu0 %v3226
          %3330 = vmatmul.bf16.gmra.mxu0 %v3097
          %v3331 = vpop.f32.mrf.mxu0
          %v3332 = vadd.f32 %v3140, %v3331
          %v3333 = vpop.f32.mrf.mxu0
          %v3334 = vadd.f32 %v3140, %v3333
          %3335 = vmatmul.bf16.gmra.mxu0 %v3098
          %v3336 = vpop.f32.mrf.mxu0
          %v3337 = vadd.f32 %v3140, %v3336
          %v3338 = vpop.f32.mrf.mxu0
          %v3339 = vadd.f32 %v3140, %v3338
          %3340 = vmatmul.bf16.gmra.mxu0 %v3099
          %v3341 = vpop.f32.mrf.mxu0
          %v3342 = vadd.f32 %v3140, %v3341
          %v3343 = vpop.f32.mrf.mxu0
          %v3344 = vadd.f32 %v3140, %v3343
          %3345 = vmatmul.bf16.gmra.mxu0 %v3100
          %v3346 = vpop.f32.mrf.mxu0
          %v3347 = vadd.f32 %v3140, %v3346
          %v3348 = vpop.f32.mrf.mxu0
          %v3349 = vadd.f32 %v3140, %v3348
          %3350 = vmatmul.bf16.gmra.mxu0 %v3101
          %v3351 = vpop.f32.mrf.mxu0
          %v3352 = vadd.f32 %v3140, %v3351
          %v3353 = vpop.f32.mrf.mxu0
          %v3354 = vadd.f32 %v3140, %v3353
          %3355 = vmatmul.bf16.gmra.mxu0 %v3102
          %v3356 = vpop.f32.mrf.mxu0
          %v3357 = vadd.f32 %v3140, %v3356
          %v3358 = vpop.f32.mrf.mxu0
          %v3359 = vadd.f32 %v3140, %v3358
          %3360 = vmatmul.bf16.gmra.mxu0 %v3103
          %v3361 = vpop.f32.mrf.mxu0
          %v3362 = vadd.f32 %v3140, %v3361
          %v3363 = vpop.f32.mrf.mxu0
          %v3364 = vadd.f32 %v3140, %v3363
          %3365 = vmatmul.bf16.gmra.mxu0 %v3104
          %v3366 = vpop.f32.mrf.mxu0
          %v3367 = vadd.f32 %v3140, %v3366
          %v3368 = vpop.f32.mrf.mxu0
          %v3369 = vadd.f32 %v3140, %v3368
          %3370 = vdwg.mxu0
          %3371 = vmatpush.bf16.msra.mxu0 %v3248
          %3372 = vmatpush.bf16.msra.mxu0 %v3245
          %3373 = vmatpush.bf16.msra.mxu0 %v3242
          %3374 = vmatpush.bf16.msra.mxu0 %v3239
          %3375 = vmatpush.bf16.msra.mxu0 %v3236
          %3376 = vmatpush.bf16.msra.mxu0 %v3233
          %3377 = vmatpush.bf16.msra.mxu0 %v3230
          %3378 = vmatpush.bf16.msra.mxu0 %v3227
          %3379 = vmatmul.bf16.gmra.mxu0 %v3097
          %v3380 = vpop.f32.mrf.mxu0
          %v3381 = vadd.f32 %v3141, %v3380
          %v3382 = vpop.f32.mrf.mxu0
          %v3383 = vadd.f32 %v3141, %v3382
          %3384 = vmatmul.bf16.gmra.mxu0 %v3098
          %v3385 = vpop.f32.mrf.mxu0
          %v3386 = vadd.f32 %v3141, %v3385
          %v3387 = vpop.f32.mrf.mxu0
          %v3388 = vadd.f32 %v3141, %v3387
          %3389 = vmatmul.bf16.gmra.mxu0 %v3099
          %v3390 = vpop.f32.mrf.mxu0
          %v3391 = vadd.f32 %v3141, %v3390
          %v3392 = vpop.f32.mrf.mxu0
          %v3393 = vadd.f32 %v3141, %v3392
          %3394 = vmatmul.bf16.gmra.mxu0 %v3100
          %v3395 = vpop.f32.mrf.mxu0
          %v3396 = vadd.f32 %v3141, %v3395
          %v3397 = vpop.f32.mrf.mxu0
          %v3398 = vadd.f32 %v3141, %v3397
          %3399 = vmatmul.bf16.gmra.mxu0 %v3101
          %v3400 = vpop.f32.mrf.mxu0
          %v3401 = vadd.f32 %v3141, %v3400
          %v3402 = vpop.f32.mrf.mxu0
          %v3403 = vadd.f32 %v3141, %v3402
          %3404 = vmatmul.bf16.gmra.mxu0 %v3102
          %v3405 = vpop.f32.mrf.mxu0
          %v3406 = vadd.f32 %v3141, %v3405
          %v3407 = vpop.f32.mrf.mxu0
          %v3408 = vadd.f32 %v3141, %v3407
          %3409 = vmatmul.bf16.gmra.mxu0 %v3103
          %v3410 = vpop.f32.mrf.mxu0
          %v3411 = vadd.f32 %v3141, %v3410
          %v3412 = vpop.f32.mrf.mxu0
          %v3413 = vadd.f32 %v3141, %v3412
          %3414 = vmatmul.bf16.gmra.mxu0 %v3104
          %v3415 = vpop.f32.mrf.mxu0
          %v3416 = vadd.f32 %v3141, %v3415
          %v3417 = vpop.f32.mrf.mxu0
          %v3418 = vadd.f32 %v3141, %v3417
          %3419 = vdwg.mxu0
          %v3420 = vxor.u32 %v3283, 2147483648
          %v3421 = vxor.u32 %v3285, 2147483648
          %v3422 = vxor.u32 %v3288, 2147483648
          %v3423 = vxor.u32 %v3290, 2147483648
          %v3424 = vxor.u32 %v3293, 2147483648
          %v3425 = vxor.u32 %v3295, 2147483648
          %v3426 = vxor.u32 %v3298, 2147483648
          %v3427 = vxor.u32 %v3300, 2147483648
          %v3428 = vxor.u32 %v3303, 2147483648
          %v3429 = vxor.u32 %v3305, 2147483648
          %v3430 = vxor.u32 %v3308, 2147483648
          %v3431 = vxor.u32 %v3310, 2147483648
          %v3432 = vxor.u32 %v3313, 2147483648
          %v3433 = vxor.u32 %v3315, 2147483648
          %v3434 = vxor.u32 %v3318, 2147483648
          %v3435 = vxor.u32 %v3320, 2147483648
          %v3436 = vmul.f32 %v3420, 1.442695
          %v3437 = vpow.pop %v3436
          %v3438 = vmul.f32 %v3421, 1.442695
          %v3439 = vpow.pop %v3438
          %v3440 = vmul.f32 %v3422, 1.442695
          %v3441 = vpow.pop %v3440
          %v3442 = vmul.f32 %v3423, 1.442695
          %v3443 = vpow.pop %v3442
          %v3444 = vmul.f32 %v3424, 1.442695
          %v3445 = vpow.pop %v3444
          %v3446 = vmul.f32 %v3425, 1.442695
          %v3447 = vpow.pop %v3446
          %v3448 = vmul.f32 %v3426, 1.442695
          %v3449 = vpow.pop %v3448
          %v3450 = vmul.f32 %v3427, 1.442695
          %v3451 = vpow.pop %v3450
          %v3452 = vmul.f32 %v3428, 1.442695
          %v3453 = vpow.pop %v3452
          %v3454 = vmul.f32 %v3429, 1.442695
          %v3455 = vpow.pop %v3454
          %v3456 = vmul.f32 %v3430, 1.442695
          %v3457 = vpow.pop %v3456
          %v3458 = vmul.f32 %v3431, 1.442695
          %v3459 = vpow.pop %v3458
          %v3460 = vmul.f32 %v3432, 1.442695
          %v3461 = vpow.pop %v3460
          %v3462 = vmul.f32 %v3433, 1.442695
          %v3463 = vpow.pop %v3462
          %v3464 = vmul.f32 %v3434, 1.442695
          %v3465 = vpow.pop %v3464
          %v3466 = vmul.f32 %v3435, 1.442695
          %v3467 = vpow.pop %v3466
          %v3468 = vadd.f32 %v3437, 1.0
          %v3469 = vadd.f32 %v3439, 1.0
          %v3470 = vadd.f32 %v3441, 1.0
          %v3471 = vadd.f32 %v3443, 1.0
          %v3472 = vadd.f32 %v3445, 1.0
          %v3473 = vadd.f32 %v3447, 1.0
          %v3474 = vadd.f32 %v3449, 1.0
          %v3475 = vadd.f32 %v3451, 1.0
          %v3476 = vadd.f32 %v3453, 1.0
          %v3477 = vadd.f32 %v3455, 1.0
          %v3478 = vadd.f32 %v3457, 1.0
          %v3479 = vadd.f32 %v3459, 1.0
          %v3480 = vadd.f32 %v3461, 1.0
          %v3481 = vadd.f32 %v3463, 1.0
          %v3482 = vadd.f32 %v3465, 1.0
          %v3483 = vadd.f32 %v3467, 1.0
          %v3484 = vrcp.pop %v3468
          %v3485 = vmul.f32 %v3468, %v3484
          %v3486 = vsub.f32 1.0, %v3485
          %v3487 = vmul.f32 %v3484, %v3486
          %v3488 = vadd.f32 %v3484, %v3487
          %vm3489 = vweird.f32 %v3468
          %vm3490 = vweird.f32 %v3484
          %vm3491 = vmor %vm3489, %vm3490
          %v3492 = vsel %vm3491, %v3484, %v3488
          %v3493 = vand.u32 2147483647, %v3468
          %vm3494 = vcmp.eq.f32.partialorder %v3493, 8.507059e+37
          %v3495 = vand.u32 %v3468, 2147483648
          %v3496 = vor.u32 1.1754944e-38, %v3495
          %v3497 = vsel %vm3494, %v3496, %v3492
          %v3498 = vmul.f32 1.0, %v3497
          %v3499 = vrcp.pop %v3469
          %v3500 = vmul.f32 %v3469, %v3499
          %v3501 = vsub.f32 1.0, %v3500
          %v3502 = vmul.f32 %v3499, %v3501
          %v3503 = vadd.f32 %v3499, %v3502
          %vm3504 = vweird.f32 %v3469
          %vm3505 = vweird.f32 %v3499
          %vm3506 = vmor %vm3504, %vm3505
          %v3507 = vsel %vm3506, %v3499, %v3503
          %v3508 = vand.u32 2147483647, %v3469
          %vm3509 = vcmp.eq.f32.partialorder %v3508, 8.507059e+37
          %v3510 = vand.u32 %v3469, 2147483648
          %v3511 = vor.u32 1.1754944e-38, %v3510
          %v3512 = vsel %vm3509, %v3511, %v3507
          %v3513 = vmul.f32 1.0, %v3512
          %v3514 = vrcp.pop %v3470
          %v3515 = vmul.f32 %v3470, %v3514
          %v3516 = vsub.f32 1.0, %v3515
          %v3517 = vmul.f32 %v3514, %v3516
          %v3518 = vadd.f32 %v3514, %v3517
          %vm3519 = vweird.f32 %v3470
          %vm3520 = vweird.f32 %v3514
          %vm3521 = vmor %vm3519, %vm3520
          %v3522 = vsel %vm3521, %v3514, %v3518
          %v3523 = vand.u32 2147483647, %v3470
          %vm3524 = vcmp.eq.f32.partialorder %v3523, 8.507059e+37
          %v3525 = vand.u32 %v3470, 2147483648
          %v3526 = vor.u32 1.1754944e-38, %v3525
          %v3527 = vsel %vm3524, %v3526, %v3522
          %v3528 = vmul.f32 1.0, %v3527
          %v3529 = vrcp.pop %v3471
          %v3530 = vmul.f32 %v3471, %v3529
          %v3531 = vsub.f32 1.0, %v3530
          %v3532 = vmul.f32 %v3529, %v3531
          %v3533 = vadd.f32 %v3529, %v3532
          %vm3534 = vweird.f32 %v3471
          %vm3535 = vweird.f32 %v3529
          %vm3536 = vmor %vm3534, %vm3535
          %v3537 = vsel %vm3536, %v3529, %v3533
          %v3538 = vand.u32 2147483647, %v3471
          %vm3539 = vcmp.eq.f32.partialorder %v3538, 8.507059e+37
          %v3540 = vand.u32 %v3471, 2147483648
          %v3541 = vor.u32 1.1754944e-38, %v3540
          %v3542 = vsel %vm3539, %v3541, %v3537
          %v3543 = vmul.f32 1.0, %v3542
          %v3544 = vrcp.pop %v3472
          %v3545 = vmul.f32 %v3472, %v3544
          %v3546 = vsub.f32 1.0, %v3545
          %v3547 = vmul.f32 %v3544, %v3546
          %v3548 = vadd.f32 %v3544, %v3547
          %vm3549 = vweird.f32 %v3472
          %vm3550 = vweird.f32 %v3544
          %vm3551 = vmor %vm3549, %vm3550
          %v3552 = vsel %vm3551, %v3544, %v3548
          %v3553 = vand.u32 2147483647, %v3472
          %vm3554 = vcmp.eq.f32.partialorder %v3553, 8.507059e+37
          %v3555 = vand.u32 %v3472, 2147483648
          %v3556 = vor.u32 1.1754944e-38, %v3555
          %v3557 = vsel %vm3554, %v3556, %v3552
          %v3558 = vmul.f32 1.0, %v3557
          %v3559 = vrcp.pop %v3473
          %v3560 = vmul.f32 %v3473, %v3559
          %v3561 = vsub.f32 1.0, %v3560
          %v3562 = vmul.f32 %v3559, %v3561
          %v3563 = vadd.f32 %v3559, %v3562
          %vm3564 = vweird.f32 %v3473
          %vm3565 = vweird.f32 %v3559
          %vm3566 = vmor %vm3564, %vm3565
          %v3567 = vsel %vm3566, %v3559, %v3563
          %v3568 = vand.u32 2147483647, %v3473
          %vm3569 = vcmp.eq.f32.partialorder %v3568, 8.507059e+37
          %v3570 = vand.u32 %v3473, 2147483648
          %v3571 = vor.u32 1.1754944e-38, %v3570
          %v3572 = vsel %vm3569, %v3571, %v3567
          %v3573 = vmul.f32 1.0, %v3572
          %v3574 = vrcp.pop %v3474
          %v3575 = vmul.f32 %v3474, %v3574
          %v3576 = vsub.f32 1.0, %v3575
          %v3577 = vmul.f32 %v3574, %v3576
          %v3578 = vadd.f32 %v3574, %v3577
          %vm3579 = vweird.f32 %v3474
          %vm3580 = vweird.f32 %v3574
          %vm3581 = vmor %vm3579, %vm3580
          %v3582 = vsel %vm3581, %v3574, %v3578
          %v3583 = vand.u32 2147483647, %v3474
          %vm3584 = vcmp.eq.f32.partialorder %v3583, 8.507059e+37
          %v3585 = vand.u32 %v3474, 2147483648
          %v3586 = vor.u32 1.1754944e-38, %v3585
          %v3587 = vsel %vm3584, %v3586, %v3582
          %v3588 = vmul.f32 1.0, %v3587
          %v3589 = vrcp.pop %v3475
          %v3590 = vmul.f32 %v3475, %v3589
          %v3591 = vsub.f32 1.0, %v3590
          %v3592 = vmul.f32 %v3589, %v3591
          %v3593 = vadd.f32 %v3589, %v3592
          %vm3594 = vweird.f32 %v3475
          %vm3595 = vweird.f32 %v3589
          %vm3596 = vmor %vm3594, %vm3595
          %v3597 = vsel %vm3596, %v3589, %v3593
          %v3598 = vand.u32 2147483647, %v3475
          %vm3599 = vcmp.eq.f32.partialorder %v3598, 8.507059e+37
          %v3600 = vand.u32 %v3475, 2147483648
          %v3601 = vor.u32 1.1754944e-38, %v3600
          %v3602 = vsel %vm3599, %v3601, %v3597
          %v3603 = vmul.f32 1.0, %v3602
          %v3604 = vrcp.pop %v3476
          %v3605 = vmul.f32 %v3476, %v3604
          %v3606 = vsub.f32 1.0, %v3605
          %v3607 = vmul.f32 %v3604, %v3606
          %v3608 = vadd.f32 %v3604, %v3607
          %vm3609 = vweird.f32 %v3476
          %vm3610 = vweird.f32 %v3604
          %vm3611 = vmor %vm3609, %vm3610
          %v3612 = vsel %vm3611, %v3604, %v3608
          %v3613 = vand.u32 2147483647, %v3476
          %vm3614 = vcmp.eq.f32.partialorder %v3613, 8.507059e+37
          %v3615 = vand.u32 %v3476, 2147483648
          %v3616 = vor.u32 1.1754944e-38, %v3615
          %v3617 = vsel %vm3614, %v3616, %v3612
          %v3618 = vmul.f32 1.0, %v3617
          %v3619 = vrcp.pop %v3477
          %v3620 = vmul.f32 %v3477, %v3619
          %v3621 = vsub.f32 1.0, %v3620
          %v3622 = vmul.f32 %v3619, %v3621
          %v3623 = vadd.f32 %v3619, %v3622
          %vm3624 = vweird.f32 %v3477
          %vm3625 = vweird.f32 %v3619
          %vm3626 = vmor %vm3624, %vm3625
          %v3627 = vsel %vm3626, %v3619, %v3623
          %v3628 = vand.u32 2147483647, %v3477
          %vm3629 = vcmp.eq.f32.partialorder %v3628, 8.507059e+37
          %v3630 = vand.u32 %v3477, 2147483648
          %v3631 = vor.u32 1.1754944e-38, %v3630
          %v3632 = vsel %vm3629, %v3631, %v3627
          %v3633 = vmul.f32 1.0, %v3632
          %v3634 = vrcp.pop %v3478
          %v3635 = vmul.f32 %v3478, %v3634
          %v3636 = vsub.f32 1.0, %v3635
          %v3637 = vmul.f32 %v3634, %v3636
          %v3638 = vadd.f32 %v3634, %v3637
          %vm3639 = vweird.f32 %v3478
          %vm3640 = vweird.f32 %v3634
          %vm3641 = vmor %vm3639, %vm3640
          %v3642 = vsel %vm3641, %v3634, %v3638
          %v3643 = vand.u32 2147483647, %v3478
          %vm3644 = vcmp.eq.f32.partialorder %v3643, 8.507059e+37
          %v3645 = vand.u32 %v3478, 2147483648
          %v3646 = vor.u32 1.1754944e-38, %v3645
          %v3647 = vsel %vm3644, %v3646, %v3642
          %v3648 = vmul.f32 1.0, %v3647
          %v3649 = vrcp.pop %v3479
          %v3650 = vmul.f32 %v3479, %v3649
          %v3651 = vsub.f32 1.0, %v3650
          %v3652 = vmul.f32 %v3649, %v3651
          %v3653 = vadd.f32 %v3649, %v3652
          %vm3654 = vweird.f32 %v3479
          %vm3655 = vweird.f32 %v3649
          %vm3656 = vmor %vm3654, %vm3655
          %v3657 = vsel %vm3656, %v3649, %v3653
          %v3658 = vand.u32 2147483647, %v3479
          %vm3659 = vcmp.eq.f32.partialorder %v3658, 8.507059e+37
          %v3660 = vand.u32 %v3479, 2147483648
          %v3661 = vor.u32 1.1754944e-38, %v3660
          %v3662 = vsel %vm3659, %v3661, %v3657
          %v3663 = vmul.f32 1.0, %v3662
          %v3664 = vrcp.pop %v3480
          %v3665 = vmul.f32 %v3480, %v3664
          %v3666 = vsub.f32 1.0, %v3665
          %v3667 = vmul.f32 %v3664, %v3666
          %v3668 = vadd.f32 %v3664, %v3667
          %vm3669 = vweird.f32 %v3480
          %vm3670 = vweird.f32 %v3664
          %vm3671 = vmor %vm3669, %vm3670
          %v3672 = vsel %vm3671, %v3664, %v3668
          %v3673 = vand.u32 2147483647, %v3480
          %vm3674 = vcmp.eq.f32.partialorder %v3673, 8.507059e+37
          %v3675 = vand.u32 %v3480, 2147483648
          %v3676 = vor.u32 1.1754944e-38, %v3675
          %v3677 = vsel %vm3674, %v3676, %v3672
          %v3678 = vmul.f32 1.0, %v3677
          %v3679 = vrcp.pop %v3481
          %v3680 = vmul.f32 %v3481, %v3679
          %v3681 = vsub.f32 1.0, %v3680
          %v3682 = vmul.f32 %v3679, %v3681
          %v3683 = vadd.f32 %v3679, %v3682
          %vm3684 = vweird.f32 %v3481
          %vm3685 = vweird.f32 %v3679
          %vm3686 = vmor %vm3684, %vm3685
          %v3687 = vsel %vm3686, %v3679, %v3683
          %v3688 = vand.u32 2147483647, %v3481
          %vm3689 = vcmp.eq.f32.partialorder %v3688, 8.507059e+37
          %v3690 = vand.u32 %v3481, 2147483648
          %v3691 = vor.u32 1.1754944e-38, %v3690
          %v3692 = vsel %vm3689, %v3691, %v3687
          %v3693 = vmul.f32 1.0, %v3692
          %v3694 = vrcp.pop %v3482
          %v3695 = vmul.f32 %v3482, %v3694
          %v3696 = vsub.f32 1.0, %v3695
          %v3697 = vmul.f32 %v3694, %v3696
          %v3698 = vadd.f32 %v3694, %v3697
          %vm3699 = vweird.f32 %v3482
          %vm3700 = vweird.f32 %v3694
          %vm3701 = vmor %vm3699, %vm3700
          %v3702 = vsel %vm3701, %v3694, %v3698
          %v3703 = vand.u32 2147483647, %v3482
          %vm3704 = vcmp.eq.f32.partialorder %v3703, 8.507059e+37
          %v3705 = vand.u32 %v3482, 2147483648
          %v3706 = vor.u32 1.1754944e-38, %v3705
          %v3707 = vsel %vm3704, %v3706, %v3702
          %v3708 = vmul.f32 1.0, %v3707
          %v3709 = vrcp.pop %v3483
          %v3710 = vmul.f32 %v3483, %v3709
          %v3711 = vsub.f32 1.0, %v3710
          %v3712 = vmul.f32 %v3709, %v3711
          %v3713 = vadd.f32 %v3709, %v3712
          %vm3714 = vweird.f32 %v3483
          %vm3715 = vweird.f32 %v3709
          %vm3716 = vmor %vm3714, %vm3715
          %v3717 = vsel %vm3716, %v3709, %v3713
          %v3718 = vand.u32 2147483647, %v3483
          %vm3719 = vcmp.eq.f32.partialorder %v3718, 8.507059e+37
          %v3720 = vand.u32 %v3483, 2147483648
          %v3721 = vor.u32 1.1754944e-38, %v3720
          %v3722 = vsel %vm3719, %v3721, %v3717
          %v3723 = vmul.f32 1.0, %v3722
          %v3724 = vtanh.pop %v3332
          %v3725 = vtanh.pop %v3334
          %v3726 = vtanh.pop %v3337
          %v3727 = vtanh.pop %v3339
          %v3728 = vtanh.pop %v3342
          %v3729 = vtanh.pop %v3344
          %v3730 = vtanh.pop %v3347
          %v3731 = vtanh.pop %v3349
          %v3732 = vtanh.pop %v3352
          %v3733 = vtanh.pop %v3354
          %v3734 = vtanh.pop %v3357
          %v3735 = vtanh.pop %v3359
          %v3736 = vtanh.pop %v3362
          %v3737 = vtanh.pop %v3364
          %v3738 = vtanh.pop %v3367
          %v3739 = vtanh.pop %v3369
          %v3740 = vxor.u32 %v3381, 2147483648
          %v3741 = vxor.u32 %v3383, 2147483648
          %v3742 = vxor.u32 %v3386, 2147483648
          %v3743 = vxor.u32 %v3388, 2147483648
          %v3744 = vxor.u32 %v3391, 2147483648
          %v3745 = vxor.u32 %v3393, 2147483648
          %v3746 = vxor.u32 %v3396, 2147483648
          %v3747 = vxor.u32 %v3398, 2147483648
          %v3748 = vxor.u32 %v3401, 2147483648
          %v3749 = vxor.u32 %v3403, 2147483648
          %v3750 = vxor.u32 %v3406, 2147483648
          %v3751 = vxor.u32 %v3408, 2147483648
          %v3752 = vxor.u32 %v3411, 2147483648
          %v3753 = vxor.u32 %v3413, 2147483648
          %v3754 = vxor.u32 %v3416, 2147483648
          %v3755 = vxor.u32 %v3418, 2147483648
          %v3756 = vmul.f32 %v3740, 1.442695
          %v3757 = vpow.pop %v3756
          %v3758 = vmul.f32 %v3741, 1.442695
          %v3759 = vpow.pop %v3758
          %v3760 = vmul.f32 %v3742, 1.442695
          %v3761 = vpow.pop %v3760
          %v3762 = vmul.f32 %v3743, 1.442695
          %v3763 = vpow.pop %v3762
          %v3764 = vmul.f32 %v3744, 1.442695
          %v3765 = vpow.pop %v3764
          %v3766 = vmul.f32 %v3745, 1.442695
          %v3767 = vpow.pop %v3766
          %v3768 = vmul.f32 %v3746, 1.442695
          %v3769 = vpow.pop %v3768
          %v3770 = vmul.f32 %v3747, 1.442695
          %v3771 = vpow.pop %v3770
          %v3772 = vmul.f32 %v3748, 1.442695
          %v3773 = vpow.pop %v3772
          %v3774 = vmul.f32 %v3749, 1.442695
          %v3775 = vpow.pop %v3774
          %v3776 = vmul.f32 %v3750, 1.442695
          %v3777 = vpow.pop %v3776
          %v3778 = vmul.f32 %v3751, 1.442695
          %v3779 = vpow.pop %v3778
          %v3780 = vmul.f32 %v3752, 1.442695
          %v3781 = vpow.pop %v3780
          %v3782 = vmul.f32 %v3753, 1.442695
          %v3783 = vpow.pop %v3782
          %v3784 = vmul.f32 %v3754, 1.442695
          %v3785 = vpow.pop %v3784
          %v3786 = vmul.f32 %v3755, 1.442695
          %v3787 = vpow.pop %v3786
          %v3788 = vadd.f32 %v3757, 1.0
          %v3789 = vadd.f32 %v3759, 1.0
          %v3790 = vadd.f32 %v3761, 1.0
          %v3791 = vadd.f32 %v3763, 1.0
          %v3792 = vadd.f32 %v3765, 1.0
          %v3793 = vadd.f32 %v3767, 1.0
          %v3794 = vadd.f32 %v3769, 1.0
          %v3795 = vadd.f32 %v3771, 1.0
          %v3796 = vadd.f32 %v3773, 1.0
          %v3797 = vadd.f32 %v3775, 1.0
          %v3798 = vadd.f32 %v3777, 1.0
          %v3799 = vadd.f32 %v3779, 1.0
          %v3800 = vadd.f32 %v3781, 1.0
          %v3801 = vadd.f32 %v3783, 1.0
          %v3802 = vadd.f32 %v3785, 1.0
          %v3803 = vadd.f32 %v3787, 1.0
          %v3804 = vrcp.pop %v3788
          %v3805 = vmul.f32 %v3788, %v3804
          %v3806 = vsub.f32 1.0, %v3805
          %v3807 = vmul.f32 %v3804, %v3806
          %v3808 = vadd.f32 %v3804, %v3807
          %vm3809 = vweird.f32 %v3788
          %vm3810 = vweird.f32 %v3804
          %vm3811 = vmor %vm3809, %vm3810
          %v3812 = vsel %vm3811, %v3804, %v3808
          %v3813 = vand.u32 2147483647, %v3788
          %vm3814 = vcmp.eq.f32.partialorder %v3813, 8.507059e+37
          %v3815 = vand.u32 %v3788, 2147483648
          %v3816 = vor.u32 1.1754944e-38, %v3815
          %v3817 = vsel %vm3814, %v3816, %v3812
          %v3818 = vmul.f32 1.0, %v3817
          %v3819 = vrcp.pop %v3789
          %v3820 = vmul.f32 %v3789, %v3819
          %v3821 = vsub.f32 1.0, %v3820
          %v3822 = vmul.f32 %v3819, %v3821
          %v3823 = vadd.f32 %v3819, %v3822
          %vm3824 = vweird.f32 %v3789
          %vm3825 = vweird.f32 %v3819
          %vm3826 = vmor %vm3824, %vm3825
          %v3827 = vsel %vm3826, %v3819, %v3823
          %v3828 = vand.u32 2147483647, %v3789
          %vm3829 = vcmp.eq.f32.partialorder %v3828, 8.507059e+37
          %v3830 = vand.u32 %v3789, 2147483648
          %v3831 = vor.u32 1.1754944e-38, %v3830
          %v3832 = vsel %vm3829, %v3831, %v3827
          %v3833 = vmul.f32 1.0, %v3832
          %v3834 = vrcp.pop %v3790
          %v3835 = vmul.f32 %v3790, %v3834
          %v3836 = vsub.f32 1.0, %v3835
          %v3837 = vmul.f32 %v3834, %v3836
          %v3838 = vadd.f32 %v3834, %v3837
          %vm3839 = vweird.f32 %v3790
          %vm3840 = vweird.f32 %v3834
          %vm3841 = vmor %vm3839, %vm3840
          %v3842 = vsel %vm3841, %v3834, %v3838
          %v3843 = vand.u32 2147483647, %v3790
          %vm3844 = vcmp.eq.f32.partialorder %v3843, 8.507059e+37
          %v3845 = vand.u32 %v3790, 2147483648
          %v3846 = vor.u32 1.1754944e-38, %v3845
          %v3847 = vsel %vm3844, %v3846, %v3842
          %v3848 = vmul.f32 1.0, %v3847
          %v3849 = vrcp.pop %v3791
          %v3850 = vmul.f32 %v3791, %v3849
          %v3851 = vsub.f32 1.0, %v3850
          %v3852 = vmul.f32 %v3849, %v3851
          %v3853 = vadd.f32 %v3849, %v3852
          %vm3854 = vweird.f32 %v3791
          %vm3855 = vweird.f32 %v3849
          %vm3856 = vmor %vm3854, %vm3855
          %v3857 = vsel %vm3856, %v3849, %v3853
          %v3858 = vand.u32 2147483647, %v3791
          %vm3859 = vcmp.eq.f32.partialorder %v3858, 8.507059e+37
          %v3860 = vand.u32 %v3791, 2147483648
          %v3861 = vor.u32 1.1754944e-38, %v3860
          %v3862 = vsel %vm3859, %v3861, %v3857
          %v3863 = vmul.f32 1.0, %v3862
          %v3864 = vrcp.pop %v3792
          %v3865 = vmul.f32 %v3792, %v3864
          %v3866 = vsub.f32 1.0, %v3865
          %v3867 = vmul.f32 %v3864, %v3866
          %v3868 = vadd.f32 %v3864, %v3867
          %vm3869 = vweird.f32 %v3792
          %vm3870 = vweird.f32 %v3864
          %vm3871 = vmor %vm3869, %vm3870
          %v3872 = vsel %vm3871, %v3864, %v3868
          %v3873 = vand.u32 2147483647, %v3792
          %vm3874 = vcmp.eq.f32.partialorder %v3873, 8.507059e+37
          %v3875 = vand.u32 %v3792, 2147483648
          %v3876 = vor.u32 1.1754944e-38, %v3875
          %v3877 = vsel %vm3874, %v3876, %v3872
          %v3878 = vmul.f32 1.0, %v3877
          %v3879 = vrcp.pop %v3793
          %v3880 = vmul.f32 %v3793, %v3879
          %v3881 = vsub.f32 1.0, %v3880
          %v3882 = vmul.f32 %v3879, %v3881
          %v3883 = vadd.f32 %v3879, %v3882
          %vm3884 = vweird.f32 %v3793
          %vm3885 = vweird.f32 %v3879
          %vm3886 = vmor %vm3884, %vm3885
          %v3887 = vsel %vm3886, %v3879, %v3883
          %v3888 = vand.u32 2147483647, %v3793
          %vm3889 = vcmp.eq.f32.partialorder %v3888, 8.507059e+37
          %v3890 = vand.u32 %v3793, 2147483648
          %v3891 = vor.u32 1.1754944e-38, %v3890
          %v3892 = vsel %vm3889, %v3891, %v3887
          %v3893 = vmul.f32 1.0, %v3892
          %v3894 = vrcp.pop %v3794
          %v3895 = vmul.f32 %v3794, %v3894
          %v3896 = vsub.f32 1.0, %v3895
          %v3897 = vmul.f32 %v3894, %v3896
          %v3898 = vadd.f32 %v3894, %v3897
          %vm3899 = vweird.f32 %v3794
          %vm3900 = vweird.f32 %v3894
          %vm3901 = vmor %vm3899, %vm3900
          %v3902 = vsel %vm3901, %v3894, %v3898
          %v3903 = vand.u32 2147483647, %v3794
          %vm3904 = vcmp.eq.f32.partialorder %v3903, 8.507059e+37
          %v3905 = vand.u32 %v3794, 2147483648
          %v3906 = vor.u32 1.1754944e-38, %v3905
          %v3907 = vsel %vm3904, %v3906, %v3902
          %v3908 = vmul.f32 1.0, %v3907
          %v3909 = vrcp.pop %v3795
          %v3910 = vmul.f32 %v3795, %v3909
          %v3911 = vsub.f32 1.0, %v3910
          %v3912 = vmul.f32 %v3909, %v3911
          %v3913 = vadd.f32 %v3909, %v3912
          %vm3914 = vweird.f32 %v3795
          %vm3915 = vweird.f32 %v3909
          %vm3916 = vmor %vm3914, %vm3915
          %v3917 = vsel %vm3916, %v3909, %v3913
          %v3918 = vand.u32 2147483647, %v3795
          %vm3919 = vcmp.eq.f32.partialorder %v3918, 8.507059e+37
          %v3920 = vand.u32 %v3795, 2147483648
          %v3921 = vor.u32 1.1754944e-38, %v3920
          %v3922 = vsel %vm3919, %v3921, %v3917
          %v3923 = vmul.f32 1.0, %v3922
          %v3924 = vrcp.pop %v3796
          %v3925 = vmul.f32 %v3796, %v3924
          %v3926 = vsub.f32 1.0, %v3925
          %v3927 = vmul.f32 %v3924, %v3926
          %v3928 = vadd.f32 %v3924, %v3927
          %vm3929 = vweird.f32 %v3796
          %vm3930 = vweird.f32 %v3924
          %vm3931 = vmor %vm3929, %vm3930
          %v3932 = vsel %vm3931, %v3924, %v3928
          %v3933 = vand.u32 2147483647, %v3796
          %vm3934 = vcmp.eq.f32.partialorder %v3933, 8.507059e+37
          %v3935 = vand.u32 %v3796, 2147483648
          %v3936 = vor.u32 1.1754944e-38, %v3935
          %v3937 = vsel %vm3934, %v3936, %v3932
          %v3938 = vmul.f32 1.0, %v3937
          %v3939 = vrcp.pop %v3797
          %v3940 = vmul.f32 %v3797, %v3939
          %v3941 = vsub.f32 1.0, %v3940
          %v3942 = vmul.f32 %v3939, %v3941
          %v3943 = vadd.f32 %v3939, %v3942
          %vm3944 = vweird.f32 %v3797
          %vm3945 = vweird.f32 %v3939
          %vm3946 = vmor %vm3944, %vm3945
          %v3947 = vsel %vm3946, %v3939, %v3943
          %v3948 = vand.u32 2147483647, %v3797
          %vm3949 = vcmp.eq.f32.partialorder %v3948, 8.507059e+37
          %v3950 = vand.u32 %v3797, 2147483648
          %v3951 = vor.u32 1.1754944e-38, %v3950
          %v3952 = vsel %vm3949, %v3951, %v3947
          %v3953 = vmul.f32 1.0, %v3952
          %v3954 = vrcp.pop %v3798
          %v3955 = vmul.f32 %v3798, %v3954
          %v3956 = vsub.f32 1.0, %v3955
          %v3957 = vmul.f32 %v3954, %v3956
          %v3958 = vadd.f32 %v3954, %v3957
          %vm3959 = vweird.f32 %v3798
          %vm3960 = vweird.f32 %v3954
          %vm3961 = vmor %vm3959, %vm3960
          %v3962 = vsel %vm3961, %v3954, %v3958
          %v3963 = vand.u32 2147483647, %v3798
          %vm3964 = vcmp.eq.f32.partialorder %v3963, 8.507059e+37
          %v3965 = vand.u32 %v3798, 2147483648
          %v3966 = vor.u32 1.1754944e-38, %v3965
          %v3967 = vsel %vm3964, %v3966, %v3962
          %v3968 = vmul.f32 1.0, %v3967
          %v3969 = vrcp.pop %v3799
          %v3970 = vmul.f32 %v3799, %v3969
          %v3971 = vsub.f32 1.0, %v3970
          %v3972 = vmul.f32 %v3969, %v3971
          %v3973 = vadd.f32 %v3969, %v3972
          %vm3974 = vweird.f32 %v3799
          %vm3975 = vweird.f32 %v3969
          %vm3976 = vmor %vm3974, %vm3975
          %v3977 = vsel %vm3976, %v3969, %v3973
          %v3978 = vand.u32 2147483647, %v3799
          %vm3979 = vcmp.eq.f32.partialorder %v3978, 8.507059e+37
          %v3980 = vand.u32 %v3799, 2147483648
          %v3981 = vor.u32 1.1754944e-38, %v3980
          %v3982 = vsel %vm3979, %v3981, %v3977
          %v3983 = vmul.f32 1.0, %v3982
          %v3984 = vrcp.pop %v3800
          %v3985 = vmul.f32 %v3800, %v3984
          %v3986 = vsub.f32 1.0, %v3985
          %v3987 = vmul.f32 %v3984, %v3986
          %v3988 = vadd.f32 %v3984, %v3987
          %vm3989 = vweird.f32 %v3800
          %vm3990 = vweird.f32 %v3984
          %vm3991 = vmor %vm3989, %vm3990
          %v3992 = vsel %vm3991, %v3984, %v3988
          %v3993 = vand.u32 2147483647, %v3800
          %vm3994 = vcmp.eq.f32.partialorder %v3993, 8.507059e+37
          %v3995 = vand.u32 %v3800, 2147483648
          %v3996 = vor.u32 1.1754944e-38, %v3995
          %v3997 = vsel %vm3994, %v3996, %v3992
          %v3998 = vmul.f32 1.0, %v3997
          %v3999 = vrcp.pop %v3801
          %v4000 = vmul.f32 %v3801, %v3999
          %v4001 = vsub.f32 1.0, %v4000
          %v4002 = vmul.f32 %v3999, %v4001
          %v4003 = vadd.f32 %v3999, %v4002
          %vm4004 = vweird.f32 %v3801
          %vm4005 = vweird.f32 %v3999
          %vm4006 = vmor %vm4004, %vm4005
          %v4007 = vsel %vm4006, %v3999, %v4003
          %v4008 = vand.u32 2147483647, %v3801
          %vm4009 = vcmp.eq.f32.partialorder %v4008, 8.507059e+37
          %v4010 = vand.u32 %v3801, 2147483648
          %v4011 = vor.u32 1.1754944e-38, %v4010
          %v4012 = vsel %vm4009, %v4011, %v4007
          %v4013 = vmul.f32 1.0, %v4012
          %v4014 = vrcp.pop %v3802
          %v4015 = vmul.f32 %v3802, %v4014
          %v4016 = vsub.f32 1.0, %v4015
          %v4017 = vmul.f32 %v4014, %v4016
          %v4018 = vadd.f32 %v4014, %v4017
          %vm4019 = vweird.f32 %v3802
          %vm4020 = vweird.f32 %v4014
          %vm4021 = vmor %vm4019, %vm4020
          %v4022 = vsel %vm4021, %v4014, %v4018
          %v4023 = vand.u32 2147483647, %v3802
          %vm4024 = vcmp.eq.f32.partialorder %v4023, 8.507059e+37
          %v4025 = vand.u32 %v3802, 2147483648
          %v4026 = vor.u32 1.1754944e-38, %v4025
          %v4027 = vsel %vm4024, %v4026, %v4022
          %v4028 = vmul.f32 1.0, %v4027
          %v4029 = vrcp.pop %v3803
          %v4030 = vmul.f32 %v3803, %v4029
          %v4031 = vsub.f32 1.0, %v4030
          %v4032 = vmul.f32 %v4029, %v4031
          %v4033 = vadd.f32 %v4029, %v4032
          %vm4034 = vweird.f32 %v3803
          %vm4035 = vweird.f32 %v4029
          %vm4036 = vmor %vm4034, %vm4035
          %v4037 = vsel %vm4036, %v4029, %v4033
          %v4038 = vand.u32 2147483647, %v3803
          %vm4039 = vcmp.eq.f32.partialorder %v4038, 8.507059e+37
          %v4040 = vand.u32 %v3803, 2147483648
          %v4041 = vor.u32 1.1754944e-38, %v4040
          %v4042 = vsel %vm4039, %v4041, %v4037
          %v4043 = vmul.f32 1.0, %v4042
          %v4044 = vmul.f32 %v3498, %v3724
          %v4045 = vmul.f32 %v3513, %v3725
          %v4046 = vmul.f32 %v3528, %v3726
          %v4047 = vmul.f32 %v3543, %v3727
          %v4048 = vmul.f32 %v3558, %v3728
          %v4049 = vmul.f32 %v3573, %v3729
          %v4050 = vmul.f32 %v3588, %v3730
          %v4051 = vmul.f32 %v3603, %v3731
          %v4052 = vmul.f32 %v3618, %v3732
          %v4053 = vmul.f32 %v3633, %v3733
          %v4054 = vmul.f32 %v3648, %v3734
          %v4055 = vmul.f32 %v3663, %v3735
          %v4056 = vmul.f32 %v3678, %v3736
          %v4057 = vmul.f32 %v3693, %v3737
          %v4058 = vmul.f32 %v3708, %v3738
          %v4059 = vmul.f32 %v3723, %v3739
          %v4060 = vtanh.pop %v4044
          %v4061 = vtanh.pop %v4045
          %v4062 = vtanh.pop %v4046
          %v4063 = vtanh.pop %v4047
          %v4064 = vtanh.pop %v4048
          %v4065 = vtanh.pop %v4049
          %v4066 = vtanh.pop %v4050
          %v4067 = vtanh.pop %v4051
          %v4068 = vtanh.pop %v4052
          %v4069 = vtanh.pop %v4053
          %v4070 = vtanh.pop %v4054
          %v4071 = vtanh.pop %v4055
          %v4072 = vtanh.pop %v4056
          %v4073 = vtanh.pop %v4057
          %v4074 = vtanh.pop %v4058
          %v4075 = vtanh.pop %v4059
          %v4076 = vmul.f32 %v3818, %v4060
          %v4077 = vmul.f32 %v3833, %v4061
          %v4078 = vmul.f32 %v3848, %v4062
          %v4079 = vmul.f32 %v3863, %v4063
          %v4080 = vmul.f32 %v3878, %v4064
          %v4081 = vmul.f32 %v3893, %v4065
          %v4082 = vmul.f32 %v3908, %v4066
          %v4083 = vmul.f32 %v3923, %v4067
          %v4084 = vmul.f32 %v3938, %v4068
          %v4085 = vmul.f32 %v3953, %v4069
          %v4086 = vmul.f32 %v3968, %v4070
          %v4087 = vmul.f32 %v3983, %v4071
          %v4088 = vmul.f32 %v3998, %v4072
          %v4089 = vmul.f32 %v4013, %v4073
          %v4090 = vmul.f32 %v4028, %v4074
          %v4091 = vmul.f32 %v4043, %v4075
          %v4092 = vpack.c.bf16 %v4077, %v4076
          %v4093 = vpack.c.bf16 %v4079, %v4078
          %v4094 = vpack.c.bf16 %v4081, %v4080
          %v4095 = vpack.c.bf16 %v4083, %v4082
          %v4096 = vpack.c.bf16 %v4085, %v4084
          %v4097 = vpack.c.bf16 %v4087, %v4086
          %v4098 = vpack.c.bf16 %v4089, %v4088
          %v4099 = vpack.c.bf16 %v4091, %v4090
          %v4100 = vld [vmem:[#allocation14] sm:$0xf]
          %v4101 = vld [vmem:[#allocation14 + $0x4] sm:$0xf]
          %v4102 = vld [vmem:[#allocation14 + $0x8] sm:$0xf]
          %v4103 = vld [vmem:[#allocation14 + $0xc] sm:$0xf]
          %v4104 = vld [vmem:[#allocation14 + $0x10] sm:$0xf]
          %v4105 = vld [vmem:[#allocation14 + $0x14] sm:$0xf]
          %v4106 = vld [vmem:[#allocation14 + $0x18] sm:$0xf]
          %v4107 = vld [vmem:[#allocation14 + $0x1c] sm:$0xf]
          %v4108 = vld [vmem:[#allocation14 + $0x20] sm:$0xf]
          %v4109 = vld [vmem:[#allocation14 + $0x24] sm:$0xf]
          %v4110 = vld [vmem:[#allocation14 + $0x28] sm:$0xf]
          %v4111 = vld [vmem:[#allocation14 + $0x2c] sm:$0xf]
          %v4112 = vld [vmem:[#allocation14 + $0x30] sm:$0xf]
          %v4113 = vld [vmem:[#allocation14 + $0x34] sm:$0xf]
          %v4114 = vld [vmem:[#allocation14 + $0x38] sm:$0xf]
          %v4115 = vld [vmem:[#allocation14 + $0x3c] sm:$0xf]
          %v4116 = vld [vmem:[%s8] sm:$0x1]
          %v4118 = vperm.slane %v4116, 0
          %v4136 = vunpack.c.l.b16 %v4100
          %v4137 = vunpack.c.l.b16 %v4101
          %v4138 = vunpack.c.l.b16 %v4102
          %v4139 = vunpack.c.l.b16 %v4103
          %v4140 = vunpack.c.l.b16 %v4104
          %v4141 = vunpack.c.l.b16 %v4105
          %v4142 = vunpack.c.l.b16 %v4106
          %v4143 = vunpack.c.l.b16 %v4107
          %v4144 = vunpack.c.l.b16 %v4108
          %v4145 = vunpack.c.l.b16 %v4109
          %v4146 = vunpack.c.l.b16 %v4110
          %v4147 = vunpack.c.l.b16 %v4111
          %v4148 = vunpack.c.l.b16 %v4112
          %v4149 = vunpack.c.l.b16 %v4113
          %v4150 = vunpack.c.l.b16 %v4114
          %v4151 = vunpack.c.l.b16 %v4115
          %v4152 = vpack.c.b16 %v4137, %v4136
          %v4153 = vpack.c.b16 %v4139, %v4138
          %v4154 = vpack.c.b16 %v4141, %v4140
          %v4155 = vpack.c.b16 %v4143, %v4142
          %v4156 = vpack.c.b16 %v4145, %v4144
          %v4157 = vpack.c.b16 %v4147, %v4146
          %v4158 = vpack.c.b16 %v4149, %v4148
          %v4159 = vpack.c.b16 %v4151, %v4150
          %4168 = vmatpush.bf16.msra.mxu0 %v4159
          %4169 = vmatpush.bf16.msra.mxu0 %v4158
          %4170 = vmatpush.bf16.msra.mxu0 %v4157
          %4171 = vmatpush.bf16.msra.mxu0 %v4156
          %4172 = vmatpush.bf16.msra.mxu0 %v4155
          %4173 = vmatpush.bf16.msra.mxu0 %v4154
          %4174 = vmatpush.bf16.msra.mxu0 %v4153
          %4175 = vmatpush.bf16.msra.mxu0 %v4152
          %4176 = vmatmul.bf16.gmra.mxu0 %v4092
          %v4177 = vpop.f32.mrf.mxu0
          %v4178 = vadd.f32 %v4118, %v4177
          %v4179 = vpop.f32.mrf.mxu0
          %v4180 = vadd.f32 %v4118, %v4179
          %4181 = vmatmul.bf16.gmra.mxu0 %v4093
          %v4182 = vpop.f32.mrf.mxu0
          %v4183 = vadd.f32 %v4118, %v4182
          %v4184 = vpop.f32.mrf.mxu0
          %v4185 = vadd.f32 %v4118, %v4184
          %4186 = vmatmul.bf16.gmra.mxu0 %v4094
          %v4187 = vpop.f32.mrf.mxu0
          %v4188 = vadd.f32 %v4118, %v4187
          %v4189 = vpop.f32.mrf.mxu0
          %v4190 = vadd.f32 %v4118, %v4189
          %4191 = vmatmul.bf16.gmra.mxu0 %v4095
          %v4192 = vpop.f32.mrf.mxu0
          %v4193 = vadd.f32 %v4118, %v4192
          %v4194 = vpop.f32.mrf.mxu0
          %v4195 = vadd.f32 %v4118, %v4194
          %4196 = vmatmul.bf16.gmra.mxu0 %v4096
          %v4197 = vpop.f32.mrf.mxu0
          %v4198 = vadd.f32 %v4118, %v4197
          %v4199 = vpop.f32.mrf.mxu0
          %v4200 = vadd.f32 %v4118, %v4199
          %4201 = vmatmul.bf16.gmra.mxu0 %v4097
          %v4202 = vpop.f32.mrf.mxu0
          %v4203 = vadd.f32 %v4118, %v4202
          %v4204 = vpop.f32.mrf.mxu0
          %v4205 = vadd.f32 %v4118, %v4204
          %4206 = vmatmul.bf16.gmra.mxu0 %v4098
          %v4207 = vpop.f32.mrf.mxu0
          %v4208 = vadd.f32 %v4118, %v4207
          %v4209 = vpop.f32.mrf.mxu0
          %v4210 = vadd.f32 %v4118, %v4209
          %4211 = vmatmul.bf16.gmra.mxu0 %v4099
          %v4212 = vpop.f32.mrf.mxu0
          %v4213 = vadd.f32 %v4118, %v4212
          %v4214 = vpop.f32.mrf.mxu0
          %v4215 = vadd.f32 %v4118, %v4214
          %4216 = vdwg.mxu0
          %4217 = vst [vmem:[#allocation15] sm:$0xff] %v4178
          %4218 = vst [vmem:[#allocation15 + $0x8] sm:$0xff] %v4180
          %4219 = vst [vmem:[#allocation15 + $0x10] sm:$0xff] %v4183
          %4220 = vst [vmem:[#allocation15 + $0x18] sm:$0xff] %v4185
          %4221 = vst [vmem:[#allocation15 + $0x20] sm:$0xff] %v4188
          %4222 = vst [vmem:[#allocation15 + $0x28] sm:$0xff] %v4190
          %4223 = vst [vmem:[#allocation15 + $0x30] sm:$0xff] %v4193
          %4224 = vst [vmem:[#allocation15 + $0x38] sm:$0xff] %v4195
          %4225 = vst [vmem:[#allocation15 + $0x40] sm:$0xff] %v4198
          %4226 = vst [vmem:[#allocation15 + $0x48] sm:$0xff] %v4200
          %4227 = vst [vmem:[#allocation15 + $0x50] sm:$0xff] %v4203
          %4228 = vst [vmem:[#allocation15 + $0x58] sm:$0xff] %v4205
          %4229 = vst [vmem:[#allocation15 + $0x60] sm:$0xff] %v4208
          %4230 = vst [vmem:[#allocation15 + $0x68] sm:$0xff] %v4210
          %4231 = vst [vmem:[#allocation15 + $0x70] sm:$0xff] %v4213
          %4232 = vst [vmem:[#allocation15 + $0x78] sm:$0xff] %v4215
        $region92: #{tpu_custom_call.1} parent=55 // pred_fallthru
          _
        // Predicated region
        $region93: #{tpu_custom_call.1} parent=55 // pred_check
          %p4233 = pneg %p241
        $region94: #{tpu_custom_call.1} parent=55 // pred_check_branch
          %4235 = sbr.rel (%p4233) target = $region96
        $region95: #{tpu_custom_call.1} parent=55 // pred_region
          %4237 = vsyncadd [#allocation5], 0
          %s4238 = sshll.u32 [#allocation15], 4
          %s4239 = int_to_ptr.vmem [resolvable:$true] %s4238
          %s4240 = sshll.u32 %s9, 4
          %s4241 = int_to_ptr.hbm [resolvable:$true] %s4240
          %4246 = dma.vmem_to_hbm [thread:$0]  %s4239, 2048, %s4241, [#allocation5], 128, 128, 8
        $region96: #{tpu_custom_call.1} parent=55 // pred_fallthru
          _
        // Predicated region
        $region97: #{tpu_custom_call.1} parent=55 // pred_check
          %p4247 = pneg %p241
        $region98: #{tpu_custom_call.1} parent=55 // pred_check_branch
          %4249 = sbr.rel (%p4247) target = $region100
        $region99: #{tpu_custom_call.1} parent=55 // pred_region
          %4251 = dma.done [#allocation5], 2048
        $region100: #{tpu_custom_call.1} parent=55 // pred_fallthru
          _
      $region56: #{tpu_custom_call.1} parent=5 // pred_fallthru
        _
      %p4252 = scmp.le.s32.totalorder 2, %s24
      // Predicated region
      $region101: #{tpu_custom_call.1} parent=5 // pred_check
        %p4253 = pneg %p4252
      $region102: #{tpu_custom_call.1} parent=5 // pred_check_branch
        %4255 = sbr.rel (%p4253) target = $region104
      $region103: #{tpu_custom_call.1} parent=5 // pred_region
        %s4256 = ssub.s32 %s24, 2
      $region104: #{tpu_custom_call.1} parent=5 // pred_fallthru
        _
    $region6: #{tpu_custom_call.1} parent=1 // loop_footer
      %s28 = sadd.s32 1, %s24
    $region7: #{tpu_custom_call.1} parent=1 // loop_footer_branch
      %23 = sbr.rel target = $region3
    $region8: #{tpu_custom_call.1} parent=1 // loop_exit
      _
    %4257 = vsyncpa [#allocation4], 1
    %s4258 = scalar_lea.sflag [#allocation4], 1
    %4259 = vsyncpa %s4258, 1
    %4260 = vsyncpa [#allocation7], 1
    %s4261 = scalar_lea.sflag [#allocation7], 1
    %4262 = vsyncpa %s4261, 1
    %4263 = vsyncpa [#allocation10], 1
    %4264 = vsyncpa [#allocation13], 1
    %4265 = vsyncpa [#allocation5], 1
    %s4266 = scalar_lea.sflag [#allocation5], 1
    %4267 = vsyncpa %s4266, 1

</llo_original>
